<compile_context>
chip_gen: v7x
topology: tpu7x:2x2x1
jax: 0.10.0
libtpu: 0.0.40
codegen_flags: <defaults>
</compile_context>

<pallas_src>
import functools
import numpy as np

import jax
import jax.numpy as jnp
from jax.experimental import pallas as pl
from jax.experimental.pallas import tpu as pltpu

# ----------------------------- hyper-params -----------------------------
B       = 1    # batch
SQ      = 8    # query sequence length
SKV     = 8    # key/value sequence length
D_MODEL = 32   # model width (== np.prod(input_tensor.shape[1:]) for consistency)
N_HEAD  = 4
D_K     = 8
D_V     = 8
D_INNER = 64   # FFN hidden width (standard choice; not in the signature)
F_IN    = D_MODEL
LN_EPS  = 1e-5

_LAYER_KEYS = ("wq", "bq", "wk", "bk", "wv", "bv", "wo", "bo",
               "ln1_g", "ln1_b", "w1", "b1", "w2", "b2", "ln2_g", "ln2_b")
_N_LAYER_REFS = len(_LAYER_KEYS)  # 16


# ----------------------------- in-kernel helpers -----------------------------
def _layer_norm(y, g, b):
    mu = jnp.mean(y, axis=-1, keepdims=True)
    var = jnp.mean(jnp.square(y - mu), axis=-1, keepdims=True)
    return (y - mu) * jax.lax.rsqrt(var + LN_EPS) * g + b


def _mha_block(x_q, key_x, val_x, mask,
               wq_ref, bq_ref, wk_ref, bk_ref, wv_ref, bv_ref, wo_ref,
               bo, ln_g, ln_b):
    """Multi-head cross-attention + residual + LayerNorm, all heads in-kernel."""
    scale = jnp.float32(1.0 / np.sqrt(D_K))
    o = None
    for h in range(N_HEAD):  # static unroll; per-head weights via leading-dim ref index
        qh = jnp.dot(x_q, wq_ref[h], preferred_element_type=jnp.float32) + bq_ref[h]
        kh = jnp.dot(key_x, wk_ref[h], preferred_element_type=jnp.float32) + bk_ref[h]
        vh = jnp.dot(val_x, wv_ref[h], preferred_element_type=jnp.float32) + bv_ref[h]
        s = jax.lax.dot_general(
            qh, kh, (((1,), (1,)), ((), ())), preferred_element_type=jnp.float32
        ) * scale
        s = jnp.where(mask == 0.0, -1e9, s)          # masked_fill(mask == 0, -inf)
        s = s - jnp.max(s, axis=-1, keepdims=True)
        p = jnp.exp(s)
        p = p * pl.reciprocal(jnp.sum(p, axis=-1, keepdims=True), approx=True)
        ah = jnp.dot(p, vh, preferred_element_type=jnp.float32)
        # concat(heads) @ Wo  ==  sum_h head_h @ Wo[h]  (avoids in-kernel concat)
        oh = jnp.dot(ah, wo_ref[h], preferred_element_type=jnp.float32)
        o = oh if o is None else o + oh
    o = o + bo
    return _layer_norm(o + x_q, ln_g, ln_b)


def _ffn_block(x, w1, b1, w2, b2, ln_g, ln_b):
    h = jnp.dot(x, w1, preferred_element_type=jnp.float32) + b1
    h = jnp.maximum(h, 0.0)
    y = jnp.dot(h, w2, preferred_element_type=jnp.float32) + b2
    return _layer_norm(y + x, ln_g, ln_b)


# ----------------------------- fused kernel -----------------------------
def _fused_forward_kernel(*refs):
    (x_ref, key_ref, val_ref, mask_ref, pe_ref,
     enc_w_ref, enc_b_ref, dec_w_ref, dec_b_ref) = refs[:9]
    enc_layer = refs[9:9 + _N_LAYER_REFS]
    dec_layer = refs[9 + _N_LAYER_REFS:9 + 2 * _N_LAYER_REFS]
    o_ref = refs[-1]

    x = x_ref[...]
    key_x = key_ref[...]
    val_x = val_ref[...]
    mask = mask_ref[...]
    pe = pe_ref[...]

    def run_layer(h_in, lrefs):
        (wq, bq, wk, bk, wv, bv, wo, bo_r, ln1g_r, ln1b_r,
         w1_r, b1_r, w2_r, b2_r, ln2g_r, ln2b_r) = lrefs
        h_attn = _mha_block(h_in, key_x, val_x, mask,
                            wq, bq, wk, bk, wv, bv, wo,
                            bo_r[...], ln1g_r[...], ln1b_r[...])
        return _ffn_block(h_attn, w1_r[...], b1_r[...], w2_r[...], b2_r[...],
                          ln2g_r[...], ln2b_r[...])

    # encoder = Linear (+dropout==identity), then positional encoding, then EncoderLayer
    enc = jnp.dot(x, enc_w_ref[...], preferred_element_type=jnp.float32)
    enc = enc + enc_b_ref[...] + pe
    enc = run_layer(enc, enc_layer)

    # decoder = Linear (+dropout==identity), then positional encoding, then DecoderLayer
    dec = jnp.dot(enc, dec_w_ref[...], preferred_element_type=jnp.float32)
    dec = dec + dec_b_ref[...] + pe            # F_IN == D_MODEL, same PE table
    dec = run_layer(dec, dec_layer)

    o_ref[...] = dec


def model_forward(query, key_, value_, attn_mask, params):
    # query: (B, SQ, F_IN), key/value: (B, SKV, D_MODEL), attn_mask: (SQ, SKV)
    Bq, Sq, F = query.shape
    x = query.reshape(Bq * Sq, F)
    k2 = key_.reshape(-1, key_.shape[-1])
    v2 = value_.reshape(-1, value_.shape[-1])
    pe = params["pe"][: Bq * Sq]

    inputs = [x, k2, v2, attn_mask, pe,
              params["enc_w"], params["enc_b"], params["dec_w"], params["dec_b"]]
    for lp in (params["enc_layer"], params["dec_layer"]):
        inputs.extend(lp[k] for k in _LAYER_KEYS)

    out = pl.pallas_call(
        _fused_forward_kernel,
        out_shape=jax.ShapeDtypeStruct((Bq * Sq, F_IN), jnp.float32),
        # gridless, everything resident in VMEM (tens of KB << VMEM on v5e/v6e/v7x)
        in_specs=[pl.BlockSpec(memory_space=pltpu.MemorySpace.VMEM)] * len(inputs),
        out_specs=pl.BlockSpec(memory_space=pltpu.MemorySpace.VMEM),
    )(*inputs)
    return out.reshape(Bq, Sq, F_IN)


# ----------------------------- params -----------------------------
def sinusoidal_pe(max_len, d_model):
    pos = np.arange(max_len, dtype=np.float32)[:, None]
    i = np.arange(d_model, dtype=np.float32)[None, :]
    angle = pos / np.power(10000.0, (2.0 * np.floor(i / 2.0)) / d_model)
    pe = np.zeros((max_len, d_model), dtype=np.float32)
    pe[:, 0::2] = np.sin(angle[:, 0::2])
    pe[:, 1::2] = np.cos(angle[:, 1::2])
    return jnp.asarray(pe)


def _init_layer_params(key):
    ks = jax.random.split(key, 6)
    s = 0.05

    def split_heads(w):  # (D_MODEL, H*dk) -> (H, D_MODEL, dk)
        return jnp.transpose(w.reshape(D_MODEL, N_HEAD, -1), (1, 0, 2))

    wq = jax.random.normal(ks[0], (D_MODEL, N_HEAD * D_K), jnp.float32) * s
    wk = jax.random.normal(ks[1], (D_MODEL, N_HEAD * D_K), jnp.float32) * s
    wv = jax.random.normal(ks[2], (D_MODEL, N_HEAD * D_V), jnp.float32) * s
    wo = jax.random.normal(ks[3], (N_HEAD * D_V, D_MODEL), jnp.float32) * s
    return {
        "wq": split_heads(wq), "bq": jnp.zeros((N_HEAD, 1, D_K), jnp.float32),
        "wk": split_heads(wk), "bk": jnp.zeros((N_HEAD, 1, D_K), jnp.float32),
        "wv": split_heads(wv), "bv": jnp.zeros((N_HEAD, 1, D_V), jnp.float32),
        "wo": wo.reshape(N_HEAD, D_V, D_MODEL),
        "bo": jnp.zeros((1, D_MODEL), jnp.float32),
        "ln1_g": jnp.ones((1, D_MODEL), jnp.float32),
        "ln1_b": jnp.zeros((1, D_MODEL), jnp.float32),
        "w1": jax.random.normal(ks[4], (D_MODEL, D_INNER), jnp.float32) * s,
        "b1": jnp.zeros((1, D_INNER), jnp.float32),
        "w2": jax.random.normal(ks[5], (D_INNER, D_MODEL), jnp.float32) * s,
        "b2": jnp.zeros((1, D_MODEL), jnp.float32),
        "ln2_g": jnp.ones((1, D_MODEL), jnp.float32),
        "ln2_b": jnp.zeros((1, D_MODEL), jnp.float32),
    }


def init_params(key):
    k1, k2, k3, k4 = jax.random.split(key, 4)
    s = 0.05
    return {
        "enc_w": jax.random.normal(k1, (F_IN, D_MODEL), jnp.float32) * s,
        "enc_b": jnp.zeros((1, D_MODEL), jnp.float32),
        "dec_w": jax.random.normal(k2, (D_MODEL, F_IN), jnp.float32) * s,
        "dec_b": jnp.zeros((1, F_IN), jnp.float32),
        "pe": sinusoidal_pe(128, D_MODEL),
        "enc_layer": _init_layer_params(k3),
        "dec_layer": _init_layer_params(k4),
    }


# ----------------------------- pure-JAX reference -----------------------------
_hdot = functools.partial(jnp.dot, precision=jax.lax.Precision.HIGHEST)


def _ref_ln(y, g, b):
    mu = jnp.mean(y, axis=-1, keepdims=True)
    var = jnp.mean(jnp.square(y - mu), axis=-1, keepdims=True)
    return (y - mu) / jnp.sqrt(var + LN_EPS) * g + b


def _ref_mha(xq, xk, xv, mask, p):
    o = 0.0
    for h in range(N_HEAD):
        qh = _hdot(xq, p["wq"][h]) + p["bq"][h]
        kh = _hdot(xk, p["wk"][h]) + p["bk"][h]
        vh = _hdot(xv, p["wv"][h]) + p["bv"][h]
        s = _hdot(qh, kh.T) / np.sqrt(D_K)
        s = jnp.where(mask == 0.0, -1e9, s)
        a = jax.nn.softmax(s, axis=-1)
        o = o + _hdot(_hdot(a, vh), p["wo"][h])
    o = o + p["bo"]
    return _ref_ln(o + xq, p["ln1_g"], p["ln1_b"])


def _ref_ffn(x, p):
    h = jnp.maximum(_hdot(x, p["w1"]) + p["b1"], 0.0)
    y = _hdot(h, p["w2"]) + p["b2"]
    return _ref_ln(y + x, p["ln2_g"], p["ln2_b"])


def _reference_forward(query, key_, value_, attn_mask, params):
    x = query.reshape(-1, query.shape[-1])
    k2 = key_.reshape(-1, key_.shape[-1])
    v2 = value_.reshape(-1, value_.shape[-1])
    pe = params["pe"][: x.shape[0]]
    enc = _hdot(x, params["enc_w"]) + params["enc_b"] + pe
    enc = _ref_ffn(_ref_mha(enc, k2, v2, attn_mask, params["enc_layer"]),
                   params["enc_layer"])
    dec = _hdot(enc, params["dec_w"]) + params["dec_b"] + pe
    dec = _ref_ffn(_ref_mha(dec, k2, v2, attn_mask, params["dec_layer"]),
                   params["dec_layer"])
    return dec.reshape(query.shape[0], query.shape[1], F_IN)


# ----------------------------- main -----------------------------
if __name__ == "__main__":
    # TODO(synk): original source never defines PositionalEncoding/EncoderLayer/
    # DecoderLayer; standard Transformer definitions were used, dropout == identity.
    root = jax.random.PRNGKey(0)
    kp, kq, kk, kv = jax.random.split(root, 4)

    params = init_params(kp)
    query = jax.random.normal(kq, (B, SQ, F_IN), jnp.float32)
    key_ = jax.random.normal(kk, (B, SKV, D_MODEL), jnp.float32)
    value_ = jax.random.normal(kv, (B, SKV, D_MODEL), jnp.float32)
    attn_mask = jnp.ones((SQ, SKV), jnp.float32)

    fwd = jax.jit(model_forward)
    out = jax.block_until_ready(fwd(query, key_, value_, attn_mask, params))

    assert out.shape == (B, SQ, F_IN) and out.dtype == jnp.float32
    assert bool(jnp.all(jnp.isfinite(out)))

    ref = _reference_forward(query, key_, value_, attn_mask, params)
    assert bool(jnp.allclose(out, ref, atol=3e-2, rtol=3e-2))
    print("KERNEL_OK")
</pallas_src>

<mosaic_0001>
module attributes {stable_mosaic.version = 11 : i64} {
  func.func @_fused_forward_kernel(%arg0: memref<8x32xf32, #tpu.memory_space<vmem>>, %arg1: memref<8x32xf32, #tpu.memory_space<vmem>>, %arg2: memref<8x32xf32, #tpu.memory_space<vmem>>, %arg3: memref<8x8xf32, #tpu.memory_space<vmem>>, %arg4: memref<8x32xf32, #tpu.memory_space<vmem>>, %arg5: memref<32x32xf32, #tpu.memory_space<vmem>>, %arg6: memref<1x32xf32, #tpu.memory_space<vmem>>, %arg7: memref<32x32xf32, #tpu.memory_space<vmem>>, %arg8: memref<1x32xf32, #tpu.memory_space<vmem>>, %arg9: memref<4x32x8xf32, #tpu.memory_space<vmem>>, %arg10: memref<4x1x8xf32, #tpu.memory_space<vmem>>, %arg11: memref<4x32x8xf32, #tpu.memory_space<vmem>>, %arg12: memref<4x1x8xf32, #tpu.memory_space<vmem>>, %arg13: memref<4x32x8xf32, #tpu.memory_space<vmem>>, %arg14: memref<4x1x8xf32, #tpu.memory_space<vmem>>, %arg15: memref<4x8x32xf32, #tpu.memory_space<vmem>>, %arg16: memref<1x32xf32, #tpu.memory_space<vmem>>, %arg17: memref<1x32xf32, #tpu.memory_space<vmem>>, %arg18: memref<1x32xf32, #tpu.memory_space<vmem>>, %arg19: memref<32x64xf32, #tpu.memory_space<vmem>>, %arg20: memref<1x64xf32, #tpu.memory_space<vmem>>, %arg21: memref<64x32xf32, #tpu.memory_space<vmem>>, %arg22: memref<1x32xf32, #tpu.memory_space<vmem>>, %arg23: memref<1x32xf32, #tpu.memory_space<vmem>>, %arg24: memref<1x32xf32, #tpu.memory_space<vmem>>, %arg25: memref<4x32x8xf32, #tpu.memory_space<vmem>>, %arg26: memref<4x1x8xf32, #tpu.memory_space<vmem>>, %arg27: memref<4x32x8xf32, #tpu.memory_space<vmem>>, %arg28: memref<4x1x8xf32, #tpu.memory_space<vmem>>, %arg29: memref<4x32x8xf32, #tpu.memory_space<vmem>>, %arg30: memref<4x1x8xf32, #tpu.memory_space<vmem>>, %arg31: memref<4x8x32xf32, #tpu.memory_space<vmem>>, %arg32: memref<1x32xf32, #tpu.memory_space<vmem>>, %arg33: memref<1x32xf32, #tpu.memory_space<vmem>>, %arg34: memref<1x32xf32, #tpu.memory_space<vmem>>, %arg35: memref<32x64xf32, #tpu.memory_space<vmem>>, %arg36: memref<1x64xf32, #tpu.memory_space<vmem>>, %arg37: memref<64x32xf32, #tpu.memory_space<vmem>>, %arg38: memref<1x32xf32, #tpu.memory_space<vmem>>, %arg39: memref<1x32xf32, #tpu.memory_space<vmem>>, %arg40: memref<1x32xf32, #tpu.memory_space<vmem>>, %arg41: memref<8x32xf32, #tpu.memory_space<vmem>>) attributes {dimension_semantics = [], scalar_prefetch = 0 : i64, scratch_operands = 0 : i64, tpu.core_type = #tpu.core_type<tc>} {
    %c0 = arith.constant 0 : index
    %c0_0 = arith.constant 0 : index
    %0 = vector.load %arg0[%c0, %c0_0] : memref<8x32xf32, #tpu.memory_space<vmem>>, vector<8x32xf32>
    %c0_1 = arith.constant 0 : index
    %c0_2 = arith.constant 0 : index
    %1 = vector.load %arg1[%c0_1, %c0_2] : memref<8x32xf32, #tpu.memory_space<vmem>>, vector<8x32xf32>
    %c0_3 = arith.constant 0 : index
    %c0_4 = arith.constant 0 : index
    %2 = vector.load %arg2[%c0_3, %c0_4] : memref<8x32xf32, #tpu.memory_space<vmem>>, vector<8x32xf32>
    %c0_5 = arith.constant 0 : index
    %c0_6 = arith.constant 0 : index
    %3 = vector.load %arg3[%c0_5, %c0_6] : memref<8x8xf32, #tpu.memory_space<vmem>>, vector<8x8xf32>
    %c0_7 = arith.constant 0 : index
    %c0_8 = arith.constant 0 : index
    %4 = vector.load %arg4[%c0_7, %c0_8] : memref<8x32xf32, #tpu.memory_space<vmem>>, vector<8x32xf32>
    %c0_9 = arith.constant 0 : index
    %c0_10 = arith.constant 0 : index
    %5 = vector.load %arg5[%c0_9, %c0_10] : memref<32x32xf32, #tpu.memory_space<vmem>>, vector<32x32xf32>
    %cst = arith.constant dense<0.000000e+00> : vector<8x32xf32>
    %6 = tpu.matmul %0, %5, %cst {dimension_numbers = #tpu.dot_dimension_numbers<[1], [0], [0], [1], [0, 0, 1, 1], [], []>} : vector<8x32xf32>, vector<32x32xf32>, vector<8x32xf32> -> vector<8x32xf32>
    %c0_11 = arith.constant 0 : index
    %c0_12 = arith.constant 0 : index
    %7 = vector.load %arg6[%c0_11, %c0_12] : memref<1x32xf32, #tpu.memory_space<vmem>>, vector<1x32xf32>
    %8 = vector.broadcast %7 : vector<1x32xf32> to vector<8x32xf32>
    %9 = arith.addf %6, %8 : vector<8x32xf32>
    %10 = arith.addf %9, %4 : vector<8x32xf32>
    %c0_13 = arith.constant 0 : index
    %c0_14 = arith.constant 0 : index
    %11 = vector.load %arg16[%c0_13, %c0_14] : memref<1x32xf32, #tpu.memory_space<vmem>>, vector<1x32xf32>
    %c0_15 = arith.constant 0 : index
    %c0_16 = arith.constant 0 : index
    %12 = vector.load %arg17[%c0_15, %c0_16] : memref<1x32xf32, #tpu.memory_space<vmem>>, vector<1x32xf32>
    %c0_17 = arith.constant 0 : index
    %c0_18 = arith.constant 0 : index
    %13 = vector.load %arg18[%c0_17, %c0_18] : memref<1x32xf32, #tpu.memory_space<vmem>>, vector<1x32xf32>
    %c0_19 = arith.constant 0 : index
    %c0_20 = arith.constant 0 : index
    %c0_21 = arith.constant 0 : index
    %14 = vector.load %arg9[%c0_19, %c0_20, %c0_21] : memref<4x32x8xf32, #tpu.memory_space<vmem>>, vector<1x32x8xf32>
    %15 = vector.shape_cast %14 : vector<1x32x8xf32> to vector<32x8xf32>
    %cst_22 = arith.constant dense<0.000000e+00> : vector<8x8xf32>
    %16 = tpu.matmul %10, %15, %cst_22 {dimension_numbers = #tpu.dot_dimension_numbers<[1], [0], [0], [1], [0, 0, 1, 1], [], []>} : vector<8x32xf32>, vector<32x8xf32>, vector<8x8xf32> -> vector<8x8xf32>
    %c0_23 = arith.constant 0 : index
    %c0_24 = arith.constant 0 : index
    %c0_25 = arith.constant 0 : index
    %17 = vector.load %arg10[%c0_23, %c0_24, %c0_25] : memref<4x1x8xf32, #tpu.memory_space<vmem>>, vector<1x1x8xf32>
    %18 = vector.shape_cast %17 : vector<1x1x8xf32> to vector<1x8xf32>
    %19 = vector.broadcast %18 : vector<1x8xf32> to vector<8x8xf32>
    %20 = arith.addf %16, %19 : vector<8x8xf32>
    %c0_26 = arith.constant 0 : index
    %c0_27 = arith.constant 0 : index
    %c0_28 = arith.constant 0 : index
    %21 = vector.load %arg11[%c0_26, %c0_27, %c0_28] : memref<4x32x8xf32, #tpu.memory_space<vmem>>, vector<1x32x8xf32>
    %22 = vector.shape_cast %21 : vector<1x32x8xf32> to vector<32x8xf32>
    %cst_29 = arith.constant dense<0.000000e+00> : vector<8x8xf32>
    %23 = tpu.matmul %1, %22, %cst_29 {dimension_numbers = #tpu.dot_dimension_numbers<[1], [0], [0], [1], [0, 0, 1, 1], [], []>} : vector<8x32xf32>, vector<32x8xf32>, vector<8x8xf32> -> vector<8x8xf32>
    %c0_30 = arith.constant 0 : index
    %c0_31 = arith.constant 0 : index
    %c0_32 = arith.constant 0 : index
    %24 = vector.load %arg12[%c0_30, %c0_31, %c0_32] : memref<4x1x8xf32, #tpu.memory_space<vmem>>, vector<1x1x8xf32>
    %25 = vector.shape_cast %24 : vector<1x1x8xf32> to vector<1x8xf32>
    %26 = vector.broadcast %25 : vector<1x8xf32> to vector<8x8xf32>
    %27 = arith.addf %23, %26 : vector<8x8xf32>
    %c0_33 = arith.constant 0 : index
    %c0_34 = arith.constant 0 : index
    %c0_35 = arith.constant 0 : index
    %28 = vector.load %arg13[%c0_33, %c0_34, %c0_35] : memref<4x32x8xf32, #tpu.memory_space<vmem>>, vector<1x32x8xf32>
    %29 = vector.shape_cast %28 : vector<1x32x8xf32> to vector<32x8xf32>
    %cst_36 = arith.constant dense<0.000000e+00> : vector<8x8xf32>
    %30 = tpu.matmul %2, %29, %cst_36 {dimension_numbers = #tpu.dot_dimension_numbers<[1], [0], [0], [1], [0, 0, 1, 1], [], []>} : vector<8x32xf32>, vector<32x8xf32>, vector<8x8xf32> -> vector<8x8xf32>
    %c0_37 = arith.constant 0 : index
    %c0_38 = arith.constant 0 : index
    %c0_39 = arith.constant 0 : index
    %31 = vector.load %arg14[%c0_37, %c0_38, %c0_39] : memref<4x1x8xf32, #tpu.memory_space<vmem>>, vector<1x1x8xf32>
    %32 = vector.shape_cast %31 : vector<1x1x8xf32> to vector<1x8xf32>
    %33 = vector.broadcast %32 : vector<1x8xf32> to vector<8x8xf32>
    %34 = arith.addf %30, %33 : vector<8x8xf32>
    %cst_40 = arith.constant dense<0.000000e+00> : vector<8x8xf32>
    %35 = tpu.matmul %20, %27, %cst_40 {dimension_numbers = #tpu.dot_dimension_numbers<[1], [1], [0], [0], [0, 0, 1, 0], [], []>} : vector<8x8xf32>, vector<8x8xf32>, vector<8x8xf32> -> vector<8x8xf32>
    %cst_41 = arith.constant 0.353553385 : f32
    %36 = vector.broadcast %cst_41 : f32 to vector<8x8xf32>
    %37 = arith.mulf %35, %36 : vector<8x8xf32>
    %cst_42 = arith.constant 0.000000e+00 : f32
    %38 = vector.broadcast %cst_42 : f32 to vector<8x8xf32>
    %39 = arith.cmpf oeq, %3, %38 : vector<8x8xf32>
    %cst_43 = arith.constant -1.000000e+09 : f32
    %40 = vector.broadcast %cst_43 : f32 to vector<8x8xf32>
    %41 = arith.select %39, %40, %37 : vector<8x8xi1>, vector<8x8xf32>
    %cst_44 = arith.constant dense<0xFF800000> : vector<8xf32>
    %42 = vector.multi_reduction <maximumf>, %41, %cst_44 [1] : vector<8x8xf32> to vector<8xf32>
    %43 = vector.shape_cast %42 : vector<8xf32> to vector<8x1xf32>
    %44 = vector.broadcast %43 : vector<8x1xf32> to vector<8x8xf32>
    %45 = arith.subf %41, %44 : vector<8x8xf32>
    %46 = math.exp %45 : vector<8x8xf32>
    %cst_45 = arith.constant dense<0.000000e+00> : vector<8xf32>
    %47 = vector.multi_reduction <add>, %46, %cst_45 [1] : vector<8x8xf32> to vector<8xf32>
    %48 = vector.shape_cast %47 : vector<8xf32> to vector<8x1xf32>
    %49 = tpu.reciprocal %48 {approx = true} : vector<8x1xf32> -> vector<8x1xf32>
    %50 = vector.broadcast %49 : vector<8x1xf32> to vector<8x8xf32>
    %51 = arith.mulf %46, %50 : vector<8x8xf32>
    %cst_46 = arith.constant dense<0.000000e+00> : vector<8x8xf32>
    %52 = tpu.matmul %51, %34, %cst_46 {dimension_numbers = #tpu.dot_dimension_numbers<[1], [0], [0], [1], [0, 0, 1, 1], [], []>} : vector<8x8xf32>, vector<8x8xf32>, vector<8x8xf32> -> vector<8x8xf32>
    %c0_47 = arith.constant 0 : index
    %c0_48 = arith.constant 0 : index
    %c0_49 = arith.constant 0 : index
    %53 = vector.load %arg15[%c0_47, %c0_48, %c0_49] : memref<4x8x32xf32, #tpu.memory_space<vmem>>, vector<1x8x32xf32>
    %54 = vector.shape_cast %53 : vector<1x8x32xf32> to vector<8x32xf32>
    %cst_50 = arith.constant dense<0.000000e+00> : vector<8x32xf32>
    %55 = tpu.matmul %52, %54, %cst_50 {dimension_numbers = #tpu.dot_dimension_numbers<[1], [0], [0], [1], [0, 0, 1, 1], [], []>} : vector<8x8xf32>, vector<8x32xf32>, vector<8x32xf32> -> vector<8x32xf32>
    %c1 = arith.constant 1 : index
    %c0_51 = arith.constant 0 : index
    %c0_52 = arith.constant 0 : index
    %56 = vector.load %arg9[%c1, %c0_51, %c0_52] : memref<4x32x8xf32, #tpu.memory_space<vmem>>, vector<1x32x8xf32>
    %57 = vector.shape_cast %56 : vector<1x32x8xf32> to vector<32x8xf32>
    %cst_53 = arith.constant dense<0.000000e+00> : vector<8x8xf32>
    %58 = tpu.matmul %10, %57, %cst_53 {dimension_numbers = #tpu.dot_dimension_numbers<[1], [0], [0], [1], [0, 0, 1, 1], [], []>} : vector<8x32xf32>, vector<32x8xf32>, vector<8x8xf32> -> vector<8x8xf32>
    %c1_54 = arith.constant 1 : index
    %c0_55 = arith.constant 0 : index
    %c0_56 = arith.constant 0 : index
    %59 = vector.load %arg10[%c1_54, %c0_55, %c0_56] : memref<4x1x8xf32, #tpu.memory_space<vmem>>, vector<1x1x8xf32>
    %60 = vector.shape_cast %59 : vector<1x1x8xf32> to vector<1x8xf32>
    %61 = vector.broadcast %60 : vector<1x8xf32> to vector<8x8xf32>
    %62 = arith.addf %58, %61 : vector<8x8xf32>
    %c1_57 = arith.constant 1 : index
    %c0_58 = arith.constant 0 : index
    %c0_59 = arith.constant 0 : index
    %63 = vector.load %arg11[%c1_57, %c0_58, %c0_59] : memref<4x32x8xf32, #tpu.memory_space<vmem>>, vector<1x32x8xf32>
    %64 = vector.shape_cast %63 : vector<1x32x8xf32> to vector<32x8xf32>
    %cst_60 = arith.constant dense<0.000000e+00> : vector<8x8xf32>
    %65 = tpu.matmul %1, %64, %cst_60 {dimension_numbers = #tpu.dot_dimension_numbers<[1], [0], [0], [1], [0, 0, 1, 1], [], []>} : vector<8x32xf32>, vector<32x8xf32>, vector<8x8xf32> -> vector<8x8xf32>
    %c1_61 = arith.constant 1 : index
    %c0_62 = arith.constant 0 : index
    %c0_63 = arith.constant 0 : index
    %66 = vector.load %arg12[%c1_61, %c0_62, %c0_63] : memref<4x1x8xf32, #tpu.memory_space<vmem>>, vector<1x1x8xf32>
    %67 = vector.shape_cast %66 : vector<1x1x8xf32> to vector<1x8xf32>
    %68 = vector.broadcast %67 : vector<1x8xf32> to vector<8x8xf32>
    %69 = arith.addf %65, %68 : vector<8x8xf32>
    %c1_64 = arith.constant 1 : index
    %c0_65 = arith.constant 0 : index
    %c0_66 = arith.constant 0 : index
    %70 = vector.load %arg13[%c1_64, %c0_65, %c0_66] : memref<4x32x8xf32, #tpu.memory_space<vmem>>, vector<1x32x8xf32>
    %71 = vector.shape_cast %70 : vector<1x32x8xf32> to vector<32x8xf32>
    %cst_67 = arith.constant dense<0.000000e+00> : vector<8x8xf32>
    %72 = tpu.matmul %2, %71, %cst_67 {dimension_numbers = #tpu.dot_dimension_numbers<[1], [0], [0], [1], [0, 0, 1, 1], [], []>} : vector<8x32xf32>, vector<32x8xf32>, vector<8x8xf32> -> vector<8x8xf32>
    %c1_68 = arith.constant 1 : index
    %c0_69 = arith.constant 0 : index
    %c0_70 = arith.constant 0 : index
    %73 = vector.load %arg14[%c1_68, %c0_69, %c0_70] : memref<4x1x8xf32, #tpu.memory_space<vmem>>, vector<1x1x8xf32>
    %74 = vector.shape_cast %73 : vector<1x1x8xf32> to vector<1x8xf32>
    %75 = vector.broadcast %74 : vector<1x8xf32> to vector<8x8xf32>
    %76 = arith.addf %72, %75 : vector<8x8xf32>
    %cst_71 = arith.constant dense<0.000000e+00> : vector<8x8xf32>
    %77 = tpu.matmul %62, %69, %cst_71 {dimension_numbers = #tpu.dot_dimension_numbers<[1], [1], [0], [0], [0, 0, 1, 0], [], []>} : vector<8x8xf32>, vector<8x8xf32>, vector<8x8xf32> -> vector<8x8xf32>
    %cst_72 = arith.constant 0.353553385 : f32
    %78 = vector.broadcast %cst_72 : f32 to vector<8x8xf32>
    %79 = arith.mulf %77, %78 : vector<8x8xf32>
    %cst_73 = arith.constant 0.000000e+00 : f32
    %80 = vector.broadcast %cst_73 : f32 to vector<8x8xf32>
    %81 = arith.cmpf oeq, %3, %80 : vector<8x8xf32>
    %cst_74 = arith.constant -1.000000e+09 : f32
    %82 = vector.broadcast %cst_74 : f32 to vector<8x8xf32>
    %83 = arith.select %81, %82, %79 : vector<8x8xi1>, vector<8x8xf32>
    %cst_75 = arith.constant dense<0xFF800000> : vector<8xf32>
    %84 = vector.multi_reduction <maximumf>, %83, %cst_75 [1] : vector<8x8xf32> to vector<8xf32>
    %85 = vector.shape_cast %84 : vector<8xf32> to vector<8x1xf32>
    %86 = vector.broadcast %85 : vector<8x1xf32> to vector<8x8xf32>
    %87 = arith.subf %83, %86 : vector<8x8xf32>
    %88 = math.exp %87 : vector<8x8xf32>
    %cst_76 = arith.constant dense<0.000000e+00> : vector<8xf32>
    %89 = vector.multi_reduction <add>, %88, %cst_76 [1] : vector<8x8xf32> to vector<8xf32>
    %90 = vector.shape_cast %89 : vector<8xf32> to vector<8x1xf32>
    %91 = tpu.reciprocal %90 {approx = true} : vector<8x1xf32> -> vector<8x1xf32>
    %92 = vector.broadcast %91 : vector<8x1xf32> to vector<8x8xf32>
    %93 = arith.mulf %88, %92 : vector<8x8xf32>
    %cst_77 = arith.constant dense<0.000000e+00> : vector<8x8xf32>
    %94 = tpu.matmul %93, %76, %cst_77 {dimension_numbers = #tpu.dot_dimension_numbers<[1], [0], [0], [1], [0, 0, 1, 1], [], []>} : vector<8x8xf32>, vector<8x8xf32>, vector<8x8xf32> -> vector<8x8xf32>
    %c1_78 = arith.constant 1 : index
    %c0_79 = arith.constant 0 : index
    %c0_80 = arith.constant 0 : index
    %95 = vector.load %arg15[%c1_78, %c0_79, %c0_80] : memref<4x8x32xf32, #tpu.memory_space<vmem>>, vector<1x8x32xf32>
    %96 = vector.shape_cast %95 : vector<1x8x32xf32> to vector<8x32xf32>
    %cst_81 = arith.constant dense<0.000000e+00> : vector<8x32xf32>
    %97 = tpu.matmul %94, %96, %cst_81 {dimension_numbers = #tpu.dot_dimension_numbers<[1], [0], [0], [1], [0, 0, 1, 1], [], []>} : vector<8x8xf32>, vector<8x32xf32>, vector<8x32xf32> -> vector<8x32xf32>
    %98 = arith.addf %55, %97 : vector<8x32xf32>
    %c2 = arith.constant 2 : index
    %c0_82 = arith.constant 0 : index
    %c0_83 = arith.constant 0 : index
    %99 = vector.load %arg9[%c2, %c0_82, %c0_83] : memref<4x32x8xf32, #tpu.memory_space<vmem>>, vector<1x32x8xf32>
    %100 = vector.shape_cast %99 : vector<1x32x8xf32> to vector<32x8xf32>
    %cst_84 = arith.constant dense<0.000000e+00> : vector<8x8xf32>
    %101 = tpu.matmul %10, %100, %cst_84 {dimension_numbers = #tpu.dot_dimension_numbers<[1], [0], [0], [1], [0, 0, 1, 1], [], []>} : vector<8x32xf32>, vector<32x8xf32>, vector<8x8xf32> -> vector<8x8xf32>
    %c2_85 = arith.constant 2 : index
    %c0_86 = arith.constant 0 : index
    %c0_87 = arith.constant 0 : index
    %102 = vector.load %arg10[%c2_85, %c0_86, %c0_87] : memref<4x1x8xf32, #tpu.memory_space<vmem>>, vector<1x1x8xf32>
    %103 = vector.shape_cast %102 : vector<1x1x8xf32> to vector<1x8xf32>
    %104 = vector.broadcast %103 : vector<1x8xf32> to vector<8x8xf32>
    %105 = arith.addf %101, %104 : vector<8x8xf32>
    %c2_88 = arith.constant 2 : index
    %c0_89 = arith.constant 0 : index
    %c0_90 = arith.constant 0 : index
    %106 = vector.load %arg11[%c2_88, %c0_89, %c0_90] : memref<4x32x8xf32, #tpu.memory_space<vmem>>, vector<1x32x8xf32>
    %107 = vector.shape_cast %106 : vector<1x32x8xf32> to vector<32x8xf32>
    %cst_91 = arith.constant dense<0.000000e+00> : vector<8x8xf32>
    %108 = tpu.matmul %1, %107, %cst_91 {dimension_numbers = #tpu.dot_dimension_numbers<[1], [0], [0], [1], [0, 0, 1, 1], [], []>} : vector<8x32xf32>, vector<32x8xf32>, vector<8x8xf32> -> vector<8x8xf32>
    %c2_92 = arith.constant 2 : index
    %c0_93 = arith.constant 0 : index
    %c0_94 = arith.constant 0 : index
    %109 = vector.load %arg12[%c2_92, %c0_93, %c0_94] : memref<4x1x8xf32, #tpu.memory_space<vmem>>, vector<1x1x8xf32>
    %110 = vector.shape_cast %109 : vector<1x1x8xf32> to vector<1x8xf32>
    %111 = vector.broadcast %110 : vector<1x8xf32> to vector<8x8xf32>
    %112 = arith.addf %108, %111 : vector<8x8xf32>
    %c2_95 = arith.constant 2 : index
    %c0_96 = arith.constant 0 : index
    %c0_97 = arith.constant 0 : index
    %113 = vector.load %arg13[%c2_95, %c0_96, %c0_97] : memref<4x32x8xf32, #tpu.memory_space<vmem>>, vector<1x32x8xf32>
    %114 = vector.shape_cast %113 : vector<1x32x8xf32> to vector<32x8xf32>
    %cst_98 = arith.constant dense<0.000000e+00> : vector<8x8xf32>
    %115 = tpu.matmul %2, %114, %cst_98 {dimension_numbers = #tpu.dot_dimension_numbers<[1], [0], [0], [1], [0, 0, 1, 1], [], []>} : vector<8x32xf32>, vector<32x8xf32>, vector<8x8xf32> -> vector<8x8xf32>
    %c2_99 = arith.constant 2 : index
    %c0_100 = arith.constant 0 : index
    %c0_101 = arith.constant 0 : index
    %116 = vector.load %arg14[%c2_99, %c0_100, %c0_101] : memref<4x1x8xf32, #tpu.memory_space<vmem>>, vector<1x1x8xf32>
    %117 = vector.shape_cast %116 : vector<1x1x8xf32> to vector<1x8xf32>
    %118 = vector.broadcast %117 : vector<1x8xf32> to vector<8x8xf32>
    %119 = arith.addf %115, %118 : vector<8x8xf32>
    %cst_102 = arith.constant dense<0.000000e+00> : vector<8x8xf32>
    %120 = tpu.matmul %105, %112, %cst_102 {dimension_numbers = #tpu.dot_dimension_numbers<[1], [1], [0], [0], [0, 0, 1, 0], [], []>} : vector<8x8xf32>, vector<8x8xf32>, vector<8x8xf32> -> vector<8x8xf32>
    %cst_103 = arith.constant 0.353553385 : f32
    %121 = vector.broadcast %cst_103 : f32 to vector<8x8xf32>
    %122 = arith.mulf %120, %121 : vector<8x8xf32>
    %cst_104 = arith.constant 0.000000e+00 : f32
    %123 = vector.broadcast %cst_104 : f32 to vector<8x8xf32>
    %124 = arith.cmpf oeq, %3, %123 : vector<8x8xf32>
    %cst_105 = arith.constant -1.000000e+09 : f32
    %125 = vector.broadcast %cst_105 : f32 to vector<8x8xf32>
    %126 = arith.select %124, %125, %122 : vector<8x8xi1>, vector<8x8xf32>
    %cst_106 = arith.constant dense<0xFF800000> : vector<8xf32>
    %127 = vector.multi_reduction <maximumf>, %126, %cst_106 [1] : vector<8x8xf32> to vector<8xf32>
    %128 = vector.shape_cast %127 : vector<8xf32> to vector<8x1xf32>
    %129 = vector.broadcast %128 : vector<8x1xf32> to vector<8x8xf32>
    %130 = arith.subf %126, %129 : vector<8x8xf32>
    %131 = math.exp %130 : vector<8x8xf32>
    %cst_107 = arith.constant dense<0.000000e+00> : vector<8xf32>
    %132 = vector.multi_reduction <add>, %131, %cst_107 [1] : vector<8x8xf32> to vector<8xf32>
    %133 = vector.shape_cast %132 : vector<8xf32> to vector<8x1xf32>
    %134 = tpu.reciprocal %133 {approx = true} : vector<8x1xf32> -> vector<8x1xf32>
    %135 = vector.broadcast %134 : vector<8x1xf32> to vector<8x8xf32>
    %136 = arith.mulf %131, %135 : vector<8x8xf32>
    %cst_108 = arith.constant dense<0.000000e+00> : vector<8x8xf32>
    %137 = tpu.matmul %136, %119, %cst_108 {dimension_numbers = #tpu.dot_dimension_numbers<[1], [0], [0], [1], [0, 0, 1, 1], [], []>} : vector<8x8xf32>, vector<8x8xf32>, vector<8x8xf32> -> vector<8x8xf32>
    %c2_109 = arith.constant 2 : index
    %c0_110 = arith.constant 0 : index
    %c0_111 = arith.constant 0 : index
    %138 = vector.load %arg15[%c2_109, %c0_110, %c0_111] : memref<4x8x32xf32, #tpu.memory_space<vmem>>, vector<1x8x32xf32>
    %139 = vector.shape_cast %138 : vector<1x8x32xf32> to vector<8x32xf32>
    %cst_112 = arith.constant dense<0.000000e+00> : vector<8x32xf32>
    %140 = tpu.matmul %137, %139, %cst_112 {dimension_numbers = #tpu.dot_dimension_numbers<[1], [0], [0], [1], [0, 0, 1, 1], [], []>} : vector<8x8xf32>, vector<8x32xf32>, vector<8x32xf32> -> vector<8x32xf32>
    %141 = arith.addf %98, %140 : vector<8x32xf32>
    %c3 = arith.constant 3 : index
    %c0_113 = arith.constant 0 : index
    %c0_114 = arith.constant 0 : index
    %142 = vector.load %arg9[%c3, %c0_113, %c0_114] : memref<4x32x8xf32, #tpu.memory_space<vmem>>, vector<1x32x8xf32>
    %143 = vector.shape_cast %142 : vector<1x32x8xf32> to vector<32x8xf32>
    %cst_115 = arith.constant dense<0.000000e+00> : vector<8x8xf32>
    %144 = tpu.matmul %10, %143, %cst_115 {dimension_numbers = #tpu.dot_dimension_numbers<[1], [0], [0], [1], [0, 0, 1, 1], [], []>} : vector<8x32xf32>, vector<32x8xf32>, vector<8x8xf32> -> vector<8x8xf32>
    %c3_116 = arith.constant 3 : index
    %c0_117 = arith.constant 0 : index
    %c0_118 = arith.constant 0 : index
    %145 = vector.load %arg10[%c3_116, %c0_117, %c0_118] : memref<4x1x8xf32, #tpu.memory_space<vmem>>, vector<1x1x8xf32>
    %146 = vector.shape_cast %145 : vector<1x1x8xf32> to vector<1x8xf32>
    %147 = vector.broadcast %146 : vector<1x8xf32> to vector<8x8xf32>
    %148 = arith.addf %144, %147 : vector<8x8xf32>
    %c3_119 = arith.constant 3 : index
    %c0_120 = arith.constant 0 : index
    %c0_121 = arith.constant 0 : index
    %149 = vector.load %arg11[%c3_119, %c0_120, %c0_121] : memref<4x32x8xf32, #tpu.memory_space<vmem>>, vector<1x32x8xf32>
    %150 = vector.shape_cast %149 : vector<1x32x8xf32> to vector<32x8xf32>
    %cst_122 = arith.constant dense<0.000000e+00> : vector<8x8xf32>
    %151 = tpu.matmul %1, %150, %cst_122 {dimension_numbers = #tpu.dot_dimension_numbers<[1], [0], [0], [1], [0, 0, 1, 1], [], []>} : vector<8x32xf32>, vector<32x8xf32>, vector<8x8xf32> -> vector<8x8xf32>
    %c3_123 = arith.constant 3 : index
    %c0_124 = arith.constant 0 : index
    %c0_125 = arith.constant 0 : index
    %152 = vector.load %arg12[%c3_123, %c0_124, %c0_125] : memref<4x1x8xf32, #tpu.memory_space<vmem>>, vector<1x1x8xf32>
    %153 = vector.shape_cast %152 : vector<1x1x8xf32> to vector<1x8xf32>
    %154 = vector.broadcast %153 : vector<1x8xf32> to vector<8x8xf32>
    %155 = arith.addf %151, %154 : vector<8x8xf32>
    %c3_126 = arith.constant 3 : index
    %c0_127 = arith.constant 0 : index
    %c0_128 = arith.constant 0 : index
    %156 = vector.load %arg13[%c3_126, %c0_127, %c0_128] : memref<4x32x8xf32, #tpu.memory_space<vmem>>, vector<1x32x8xf32>
    %157 = vector.shape_cast %156 : vector<1x32x8xf32> to vector<32x8xf32>
    %cst_129 = arith.constant dense<0.000000e+00> : vector<8x8xf32>
    %158 = tpu.matmul %2, %157, %cst_129 {dimension_numbers = #tpu.dot_dimension_numbers<[1], [0], [0], [1], [0, 0, 1, 1], [], []>} : vector<8x32xf32>, vector<32x8xf32>, vector<8x8xf32> -> vector<8x8xf32>
    %c3_130 = arith.constant 3 : index
    %c0_131 = arith.constant 0 : index
    %c0_132 = arith.constant 0 : index
    %159 = vector.load %arg14[%c3_130, %c0_131, %c0_132] : memref<4x1x8xf32, #tpu.memory_space<vmem>>, vector<1x1x8xf32>
    %160 = vector.shape_cast %159 : vector<1x1x8xf32> to vector<1x8xf32>
    %161 = vector.broadcast %160 : vector<1x8xf32> to vector<8x8xf32>
    %162 = arith.addf %158, %161 : vector<8x8xf32>
    %cst_133 = arith.constant dense<0.000000e+00> : vector<8x8xf32>
    %163 = tpu.matmul %148, %155, %cst_133 {dimension_numbers = #tpu.dot_dimension_numbers<[1], [1], [0], [0], [0, 0, 1, 0], [], []>} : vector<8x8xf32>, vector<8x8xf32>, vector<8x8xf32> -> vector<8x8xf32>
    %cst_134 = arith.constant 0.353553385 : f32
    %164 = vector.broadcast %cst_134 : f32 to vector<8x8xf32>
    %165 = arith.mulf %163, %164 : vector<8x8xf32>
    %cst_135 = arith.constant 0.000000e+00 : f32
    %166 = vector.broadcast %cst_135 : f32 to vector<8x8xf32>
    %167 = arith.cmpf oeq, %3, %166 : vector<8x8xf32>
    %cst_136 = arith.constant -1.000000e+09 : f32
    %168 = vector.broadcast %cst_136 : f32 to vector<8x8xf32>
    %169 = arith.select %167, %168, %165 : vector<8x8xi1>, vector<8x8xf32>
    %cst_137 = arith.constant dense<0xFF800000> : vector<8xf32>
    %170 = vector.multi_reduction <maximumf>, %169, %cst_137 [1] : vector<8x8xf32> to vector<8xf32>
    %171 = vector.shape_cast %170 : vector<8xf32> to vector<8x1xf32>
    %172 = vector.broadcast %171 : vector<8x1xf32> to vector<8x8xf32>
    %173 = arith.subf %169, %172 : vector<8x8xf32>
    %174 = math.exp %173 : vector<8x8xf32>
    %cst_138 = arith.constant dense<0.000000e+00> : vector<8xf32>
    %175 = vector.multi_reduction <add>, %174, %cst_138 [1] : vector<8x8xf32> to vector<8xf32>
    %176 = vector.shape_cast %175 : vector<8xf32> to vector<8x1xf32>
    %177 = tpu.reciprocal %176 {approx = true} : vector<8x1xf32> -> vector<8x1xf32>
    %178 = vector.broadcast %177 : vector<8x1xf32> to vector<8x8xf32>
    %179 = arith.mulf %174, %178 : vector<8x8xf32>
    %cst_139 = arith.constant dense<0.000000e+00> : vector<8x8xf32>
    %180 = tpu.matmul %179, %162, %cst_139 {dimension_numbers = #tpu.dot_dimension_numbers<[1], [0], [0], [1], [0, 0, 1, 1], [], []>} : vector<8x8xf32>, vector<8x8xf32>, vector<8x8xf32> -> vector<8x8xf32>
    %c3_140 = arith.constant 3 : index
    %c0_141 = arith.constant 0 : index
    %c0_142 = arith.constant 0 : index
    %181 = vector.load %arg15[%c3_140, %c0_141, %c0_142] : memref<4x8x32xf32, #tpu.memory_space<vmem>>, vector<1x8x32xf32>
    %182 = vector.shape_cast %181 : vector<1x8x32xf32> to vector<8x32xf32>
    %cst_143 = arith.constant dense<0.000000e+00> : vector<8x32xf32>
    %183 = tpu.matmul %180, %182, %cst_143 {dimension_numbers = #tpu.dot_dimension_numbers<[1], [0], [0], [1], [0, 0, 1, 1], [], []>} : vector<8x8xf32>, vector<8x32xf32>, vector<8x32xf32> -> vector<8x32xf32>
    %184 = arith.addf %141, %183 : vector<8x32xf32>
    %185 = vector.broadcast %11 : vector<1x32xf32> to vector<8x32xf32>
    %186 = arith.addf %184, %185 : vector<8x32xf32>
    %187 = arith.addf %186, %10 : vector<8x32xf32>
    %cst_144 = arith.constant dense<0.000000e+00> : vector<8xf32>
    %188 = vector.multi_reduction <add>, %187, %cst_144 [1] : vector<8x32xf32> to vector<8xf32>
    %189 = vector.shape_cast %188 : vector<8xf32> to vector<8x1xf32>
    %cst_145 = arith.constant 3.200000e+01 : f32
    %190 = vector.broadcast %cst_145 : f32 to vector<8x1xf32>
    %191 = arith.divf %189, %190 : vector<8x1xf32>
    %192 = vector.broadcast %191 : vector<8x1xf32> to vector<8x32xf32>
    %193 = arith.subf %187, %192 : vector<8x32xf32>
    %194 = arith.mulf %193, %193 : vector<8x32xf32>
    %cst_146 = arith.constant dense<0.000000e+00> : vector<8xf32>
    %195 = vector.multi_reduction <add>, %194, %cst_146 [1] : vector<8x32xf32> to vector<8xf32>
    %196 = vector.shape_cast %195 : vector<8xf32> to vector<8x1xf32>
    %cst_147 = arith.constant 3.200000e+01 : f32
    %197 = vector.broadcast %cst_147 : f32 to vector<8x1xf32>
    %198 = arith.divf %196, %197 : vector<8x1xf32>
    %199 = vector.broadcast %191 : vector<8x1xf32> to vector<8x32xf32>
    %200 = arith.subf %187, %199 : vector<8x32xf32>
    %cst_148 = arith.constant 9.99999974E-6 : f32
    %201 = vector.broadcast %cst_148 : f32 to vector<8x1xf32>
    %202 = arith.addf %198, %201 : vector<8x1xf32>
    %203 = math.rsqrt %202 : vector<8x1xf32>
    %204 = vector.broadcast %203 : vector<8x1xf32> to vector<8x32xf32>
    %205 = arith.mulf %200, %204 : vector<8x32xf32>
    %206 = vector.broadcast %12 : vector<1x32xf32> to vector<8x32xf32>
    %207 = arith.mulf %205, %206 : vector<8x32xf32>
    %208 = vector.broadcast %13 : vector<1x32xf32> to vector<8x32xf32>
    %209 = arith.addf %207, %208 : vector<8x32xf32>
    %c0_149 = arith.constant 0 : index
    %c0_150 = arith.constant 0 : index
    %210 = vector.load %arg19[%c0_149, %c0_150] : memref<32x64xf32, #tpu.memory_space<vmem>>, vector<32x64xf32>
    %c0_151 = arith.constant 0 : index
    %c0_152 = arith.constant 0 : index
    %211 = vector.load %arg20[%c0_151, %c0_152] : memref<1x64xf32, #tpu.memory_space<vmem>>, vector<1x64xf32>
    %c0_153 = arith.constant 0 : index
    %c0_154 = arith.constant 0 : index
    %212 = vector.load %arg21[%c0_153, %c0_154] : memref<64x32xf32, #tpu.memory_space<vmem>>, vector<64x32xf32>
    %c0_155 = arith.constant 0 : index
    %c0_156 = arith.constant 0 : index
    %213 = vector.load %arg22[%c0_155, %c0_156] : memref<1x32xf32, #tpu.memory_space<vmem>>, vector<1x32xf32>
    %c0_157 = arith.constant 0 : index
    %c0_158 = arith.constant 0 : index
    %214 = vector.load %arg23[%c0_157, %c0_158] : memref<1x32xf32, #tpu.memory_space<vmem>>, vector<1x32xf32>
    %c0_159 = arith.constant 0 : index
    %c0_160 = arith.constant 0 : index
    %215 = vector.load %arg24[%c0_159, %c0_160] : memref<1x32xf32, #tpu.memory_space<vmem>>, vector<1x32xf32>
    %cst_161 = arith.constant dense<0.000000e+00> : vector<8x64xf32>
    %216 = tpu.matmul %209, %210, %cst_161 {dimension_numbers = #tpu.dot_dimension_numbers<[1], [0], [0], [1], [0, 0, 1, 1], [], []>} : vector<8x32xf32>, vector<32x64xf32>, vector<8x64xf32> -> vector<8x64xf32>
    %217 = vector.broadcast %211 : vector<1x64xf32> to vector<8x64xf32>
    %218 = arith.addf %216, %217 : vector<8x64xf32>
    %cst_162 = arith.constant 0.000000e+00 : f32
    %219 = vector.broadcast %cst_162 : f32 to vector<8x64xf32>
    %220 = arith.maximumf %218, %219 : vector<8x64xf32>
    %cst_163 = arith.constant dense<0.000000e+00> : vector<8x32xf32>
    %221 = tpu.matmul %220, %212, %cst_163 {dimension_numbers = #tpu.dot_dimension_numbers<[1], [0], [0], [1], [0, 0, 1, 1], [], []>} : vector<8x64xf32>, vector<64x32xf32>, vector<8x32xf32> -> vector<8x32xf32>
    %222 = vector.broadcast %213 : vector<1x32xf32> to vector<8x32xf32>
    %223 = arith.addf %221, %222 : vector<8x32xf32>
    %224 = arith.addf %223, %209 : vector<8x32xf32>
    %cst_164 = arith.constant dense<0.000000e+00> : vector<8xf32>
    %225 = vector.multi_reduction <add>, %224, %cst_164 [1] : vector<8x32xf32> to vector<8xf32>
    %226 = vector.shape_cast %225 : vector<8xf32> to vector<8x1xf32>
    %cst_165 = arith.constant 3.200000e+01 : f32
    %227 = vector.broadcast %cst_165 : f32 to vector<8x1xf32>
    %228 = arith.divf %226, %227 : vector<8x1xf32>
    %229 = vector.broadcast %228 : vector<8x1xf32> to vector<8x32xf32>
    %230 = arith.subf %224, %229 : vector<8x32xf32>
    %231 = arith.mulf %230, %230 : vector<8x32xf32>
    %cst_166 = arith.constant dense<0.000000e+00> : vector<8xf32>
    %232 = vector.multi_reduction <add>, %231, %cst_166 [1] : vector<8x32xf32> to vector<8xf32>
    %233 = vector.shape_cast %232 : vector<8xf32> to vector<8x1xf32>
    %cst_167 = arith.constant 3.200000e+01 : f32
    %234 = vector.broadcast %cst_167 : f32 to vector<8x1xf32>
    %235 = arith.divf %233, %234 : vector<8x1xf32>
    %236 = vector.broadcast %228 : vector<8x1xf32> to vector<8x32xf32>
    %237 = arith.subf %224, %236 : vector<8x32xf32>
    %cst_168 = arith.constant 9.99999974E-6 : f32
    %238 = vector.broadcast %cst_168 : f32 to vector<8x1xf32>
    %239 = arith.addf %235, %238 : vector<8x1xf32>
    %240 = math.rsqrt %239 : vector<8x1xf32>
    %241 = vector.broadcast %240 : vector<8x1xf32> to vector<8x32xf32>
    %242 = arith.mulf %237, %241 : vector<8x32xf32>
    %243 = vector.broadcast %214 : vector<1x32xf32> to vector<8x32xf32>
    %244 = arith.mulf %242, %243 : vector<8x32xf32>
    %245 = vector.broadcast %215 : vector<1x32xf32> to vector<8x32xf32>
    %246 = arith.addf %244, %245 : vector<8x32xf32>
    %c0_169 = arith.constant 0 : index
    %c0_170 = arith.constant 0 : index
    %247 = vector.load %arg7[%c0_169, %c0_170] : memref<32x32xf32, #tpu.memory_space<vmem>>, vector<32x32xf32>
    %cst_171 = arith.constant dense<0.000000e+00> : vector<8x32xf32>
    %248 = tpu.matmul %246, %247, %cst_171 {dimension_numbers = #tpu.dot_dimension_numbers<[1], [0], [0], [1], [0, 0, 1, 1], [], []>} : vector<8x32xf32>, vector<32x32xf32>, vector<8x32xf32> -> vector<8x32xf32>
    %c0_172 = arith.constant 0 : index
    %c0_173 = arith.constant 0 : index
    %249 = vector.load %arg8[%c0_172, %c0_173] : memref<1x32xf32, #tpu.memory_space<vmem>>, vector<1x32xf32>
    %250 = vector.broadcast %249 : vector<1x32xf32> to vector<8x32xf32>
    %251 = arith.addf %248, %250 : vector<8x32xf32>
    %252 = arith.addf %251, %4 : vector<8x32xf32>
    %c0_174 = arith.constant 0 : index
    %c0_175 = arith.constant 0 : index
    %253 = vector.load %arg32[%c0_174, %c0_175] : memref<1x32xf32, #tpu.memory_space<vmem>>, vector<1x32xf32>
    %c0_176 = arith.constant 0 : index
    %c0_177 = arith.constant 0 : index
    %254 = vector.load %arg33[%c0_176, %c0_177] : memref<1x32xf32, #tpu.memory_space<vmem>>, vector<1x32xf32>
    %c0_178 = arith.constant 0 : index
    %c0_179 = arith.constant 0 : index
    %255 = vector.load %arg34[%c0_178, %c0_179] : memref<1x32xf32, #tpu.memory_space<vmem>>, vector<1x32xf32>
    %c0_180 = arith.constant 0 : index
    %c0_181 = arith.constant 0 : index
    %c0_182 = arith.constant 0 : index
    %256 = vector.load %arg25[%c0_180, %c0_181, %c0_182] : memref<4x32x8xf32, #tpu.memory_space<vmem>>, vector<1x32x8xf32>
    %257 = vector.shape_cast %256 : vector<1x32x8xf32> to vector<32x8xf32>
    %cst_183 = arith.constant dense<0.000000e+00> : vector<8x8xf32>
    %258 = tpu.matmul %252, %257, %cst_183 {dimension_numbers = #tpu.dot_dimension_numbers<[1], [0], [0], [1], [0, 0, 1, 1], [], []>} : vector<8x32xf32>, vector<32x8xf32>, vector<8x8xf32> -> vector<8x8xf32>
    %c0_184 = arith.constant 0 : index
    %c0_185 = arith.constant 0 : index
    %c0_186 = arith.constant 0 : index
    %259 = vector.load %arg26[%c0_184, %c0_185, %c0_186] : memref<4x1x8xf32, #tpu.memory_space<vmem>>, vector<1x1x8xf32>
    %260 = vector.shape_cast %259 : vector<1x1x8xf32> to vector<1x8xf32>
    %261 = vector.broadcast %260 : vector<1x8xf32> to vector<8x8xf32>
    %262 = arith.addf %258, %261 : vector<8x8xf32>
    %c0_187 = arith.constant 0 : index
    %c0_188 = arith.constant 0 : index
    %c0_189 = arith.constant 0 : index
    %263 = vector.load %arg27[%c0_187, %c0_188, %c0_189] : memref<4x32x8xf32, #tpu.memory_space<vmem>>, vector<1x32x8xf32>
    %264 = vector.shape_cast %263 : vector<1x32x8xf32> to vector<32x8xf32>
    %cst_190 = arith.constant dense<0.000000e+00> : vector<8x8xf32>
    %265 = tpu.matmul %1, %264, %cst_190 {dimension_numbers = #tpu.dot_dimension_numbers<[1], [0], [0], [1], [0, 0, 1, 1], [], []>} : vector<8x32xf32>, vector<32x8xf32>, vector<8x8xf32> -> vector<8x8xf32>
    %c0_191 = arith.constant 0 : index
    %c0_192 = arith.constant 0 : index
    %c0_193 = arith.constant 0 : index
    %266 = vector.load %arg28[%c0_191, %c0_192, %c0_193] : memref<4x1x8xf32, #tpu.memory_space<vmem>>, vector<1x1x8xf32>
    %267 = vector.shape_cast %266 : vector<1x1x8xf32> to vector<1x8xf32>
    %268 = vector.broadcast %267 : vector<1x8xf32> to vector<8x8xf32>
    %269 = arith.addf %265, %268 : vector<8x8xf32>
    %c0_194 = arith.constant 0 : index
    %c0_195 = arith.constant 0 : index
    %c0_196 = arith.constant 0 : index
    %270 = vector.load %arg29[%c0_194, %c0_195, %c0_196] : memref<4x32x8xf32, #tpu.memory_space<vmem>>, vector<1x32x8xf32>
    %271 = vector.shape_cast %270 : vector<1x32x8xf32> to vector<32x8xf32>
    %cst_197 = arith.constant dense<0.000000e+00> : vector<8x8xf32>
    %272 = tpu.matmul %2, %271, %cst_197 {dimension_numbers = #tpu.dot_dimension_numbers<[1], [0], [0], [1], [0, 0, 1, 1], [], []>} : vector<8x32xf32>, vector<32x8xf32>, vector<8x8xf32> -> vector<8x8xf32>
    %c0_198 = arith.constant 0 : index
    %c0_199 = arith.constant 0 : index
    %c0_200 = arith.constant 0 : index
    %273 = vector.load %arg30[%c0_198, %c0_199, %c0_200] : memref<4x1x8xf32, #tpu.memory_space<vmem>>, vector<1x1x8xf32>
    %274 = vector.shape_cast %273 : vector<1x1x8xf32> to vector<1x8xf32>
    %275 = vector.broadcast %274 : vector<1x8xf32> to vector<8x8xf32>
    %276 = arith.addf %272, %275 : vector<8x8xf32>
    %cst_201 = arith.constant dense<0.000000e+00> : vector<8x8xf32>
    %277 = tpu.matmul %262, %269, %cst_201 {dimension_numbers = #tpu.dot_dimension_numbers<[1], [1], [0], [0], [0, 0, 1, 0], [], []>} : vector<8x8xf32>, vector<8x8xf32>, vector<8x8xf32> -> vector<8x8xf32>
    %cst_202 = arith.constant 0.353553385 : f32
    %278 = vector.broadcast %cst_202 : f32 to vector<8x8xf32>
    %279 = arith.mulf %277, %278 : vector<8x8xf32>
    %cst_203 = arith.constant 0.000000e+00 : f32
    %280 = vector.broadcast %cst_203 : f32 to vector<8x8xf32>
    %281 = arith.cmpf oeq, %3, %280 : vector<8x8xf32>
    %cst_204 = arith.constant -1.000000e+09 : f32
    %282 = vector.broadcast %cst_204 : f32 to vector<8x8xf32>
    %283 = arith.select %281, %282, %279 : vector<8x8xi1>, vector<8x8xf32>
    %cst_205 = arith.constant dense<0xFF800000> : vector<8xf32>
    %284 = vector.multi_reduction <maximumf>, %283, %cst_205 [1] : vector<8x8xf32> to vector<8xf32>
    %285 = vector.shape_cast %284 : vector<8xf32> to vector<8x1xf32>
    %286 = vector.broadcast %285 : vector<8x1xf32> to vector<8x8xf32>
    %287 = arith.subf %283, %286 : vector<8x8xf32>
    %288 = math.exp %287 : vector<8x8xf32>
    %cst_206 = arith.constant dense<0.000000e+00> : vector<8xf32>
    %289 = vector.multi_reduction <add>, %288, %cst_206 [1] : vector<8x8xf32> to vector<8xf32>
    %290 = vector.shape_cast %289 : vector<8xf32> to vector<8x1xf32>
    %291 = tpu.reciprocal %290 {approx = true} : vector<8x1xf32> -> vector<8x1xf32>
    %292 = vector.broadcast %291 : vector<8x1xf32> to vector<8x8xf32>
    %293 = arith.mulf %288, %292 : vector<8x8xf32>
    %cst_207 = arith.constant dense<0.000000e+00> : vector<8x8xf32>
    %294 = tpu.matmul %293, %276, %cst_207 {dimension_numbers = #tpu.dot_dimension_numbers<[1], [0], [0], [1], [0, 0, 1, 1], [], []>} : vector<8x8xf32>, vector<8x8xf32>, vector<8x8xf32> -> vector<8x8xf32>
    %c0_208 = arith.constant 0 : index
    %c0_209 = arith.constant 0 : index
    %c0_210 = arith.constant 0 : index
    %295 = vector.load %arg31[%c0_208, %c0_209, %c0_210] : memref<4x8x32xf32, #tpu.memory_space<vmem>>, vector<1x8x32xf32>
    %296 = vector.shape_cast %295 : vector<1x8x32xf32> to vector<8x32xf32>
    %cst_211 = arith.constant dense<0.000000e+00> : vector<8x32xf32>
    %297 = tpu.matmul %294, %296, %cst_211 {dimension_numbers = #tpu.dot_dimension_numbers<[1], [0], [0], [1], [0, 0, 1, 1], [], []>} : vector<8x8xf32>, vector<8x32xf32>, vector<8x32xf32> -> vector<8x32xf32>
    %c1_212 = arith.constant 1 : index
    %c0_213 = arith.constant 0 : index
    %c0_214 = arith.constant 0 : index
    %298 = vector.load %arg25[%c1_212, %c0_213, %c0_214] : memref<4x32x8xf32, #tpu.memory_space<vmem>>, vector<1x32x8xf32>
    %299 = vector.shape_cast %298 : vector<1x32x8xf32> to vector<32x8xf32>
    %cst_215 = arith.constant dense<0.000000e+00> : vector<8x8xf32>
    %300 = tpu.matmul %252, %299, %cst_215 {dimension_numbers = #tpu.dot_dimension_numbers<[1], [0], [0], [1], [0, 0, 1, 1], [], []>} : vector<8x32xf32>, vector<32x8xf32>, vector<8x8xf32> -> vector<8x8xf32>
    %c1_216 = arith.constant 1 : index
    %c0_217 = arith.constant 0 : index
    %c0_218 = arith.constant 0 : index
    %301 = vector.load %arg26[%c1_216, %c0_217, %c0_218] : memref<4x1x8xf32, #tpu.memory_space<vmem>>, vector<1x1x8xf32>
    %302 = vector.shape_cast %301 : vector<1x1x8xf32> to vector<1x8xf32>
    %303 = vector.broadcast %302 : vector<1x8xf32> to vector<8x8xf32>
    %304 = arith.addf %300, %303 : vector<8x8xf32>
    %c1_219 = arith.constant 1 : index
    %c0_220 = arith.constant 0 : index
    %c0_221 = arith.constant 0 : index
    %305 = vector.load %arg27[%c1_219, %c0_220, %c0_221] : memref<4x32x8xf32, #tpu.memory_space<vmem>>, vector<1x32x8xf32>
    %306 = vector.shape_cast %305 : vector<1x32x8xf32> to vector<32x8xf32>
    %cst_222 = arith.constant dense<0.000000e+00> : vector<8x8xf32>
    %307 = tpu.matmul %1, %306, %cst_222 {dimension_numbers = #tpu.dot_dimension_numbers<[1], [0], [0], [1], [0, 0, 1, 1], [], []>} : vector<8x32xf32>, vector<32x8xf32>, vector<8x8xf32> -> vector<8x8xf32>
    %c1_223 = arith.constant 1 : index
    %c0_224 = arith.constant 0 : index
    %c0_225 = arith.constant 0 : index
    %308 = vector.load %arg28[%c1_223, %c0_224, %c0_225] : memref<4x1x8xf32, #tpu.memory_space<vmem>>, vector<1x1x8xf32>
    %309 = vector.shape_cast %308 : vector<1x1x8xf32> to vector<1x8xf32>
    %310 = vector.broadcast %309 : vector<1x8xf32> to vector<8x8xf32>
    %311 = arith.addf %307, %310 : vector<8x8xf32>
    %c1_226 = arith.constant 1 : index
    %c0_227 = arith.constant 0 : index
    %c0_228 = arith.constant 0 : index
    %312 = vector.load %arg29[%c1_226, %c0_227, %c0_228] : memref<4x32x8xf32, #tpu.memory_space<vmem>>, vector<1x32x8xf32>
    %313 = vector.shape_cast %312 : vector<1x32x8xf32> to vector<32x8xf32>
    %cst_229 = arith.constant dense<0.000000e+00> : vector<8x8xf32>
    %314 = tpu.matmul %2, %313, %cst_229 {dimension_numbers = #tpu.dot_dimension_numbers<[1], [0], [0], [1], [0, 0, 1, 1], [], []>} : vector<8x32xf32>, vector<32x8xf32>, vector<8x8xf32> -> vector<8x8xf32>
    %c1_230 = arith.constant 1 : index
    %c0_231 = arith.constant 0 : index
    %c0_232 = arith.constant 0 : index
    %315 = vector.load %arg30[%c1_230, %c0_231, %c0_232] : memref<4x1x8xf32, #tpu.memory_space<vmem>>, vector<1x1x8xf32>
    %316 = vector.shape_cast %315 : vector<1x1x8xf32> to vector<1x8xf32>
    %317 = vector.broadcast %316 : vector<1x8xf32> to vector<8x8xf32>
    %318 = arith.addf %314, %317 : vector<8x8xf32>
    %cst_233 = arith.constant dense<0.000000e+00> : vector<8x8xf32>
    %319 = tpu.matmul %304, %311, %cst_233 {dimension_numbers = #tpu.dot_dimension_numbers<[1], [1], [0], [0], [0, 0, 1, 0], [], []>} : vector<8x8xf32>, vector<8x8xf32>, vector<8x8xf32> -> vector<8x8xf32>
    %cst_234 = arith.constant 0.353553385 : f32
    %320 = vector.broadcast %cst_234 : f32 to vector<8x8xf32>
    %321 = arith.mulf %319, %320 : vector<8x8xf32>
    %cst_235 = arith.constant 0.000000e+00 : f32
    %322 = vector.broadcast %cst_235 : f32 to vector<8x8xf32>
    %323 = arith.cmpf oeq, %3, %322 : vector<8x8xf32>
    %cst_236 = arith.constant -1.000000e+09 : f32
    %324 = vector.broadcast %cst_236 : f32 to vector<8x8xf32>
    %325 = arith.select %323, %324, %321 : vector<8x8xi1>, vector<8x8xf32>
    %cst_237 = arith.constant dense<0xFF800000> : vector<8xf32>
    %326 = vector.multi_reduction <maximumf>, %325, %cst_237 [1] : vector<8x8xf32> to vector<8xf32>
    %327 = vector.shape_cast %326 : vector<8xf32> to vector<8x1xf32>
    %328 = vector.broadcast %327 : vector<8x1xf32> to vector<8x8xf32>
    %329 = arith.subf %325, %328 : vector<8x8xf32>
    %330 = math.exp %329 : vector<8x8xf32>
    %cst_238 = arith.constant dense<0.000000e+00> : vector<8xf32>
    %331 = vector.multi_reduction <add>, %330, %cst_238 [1] : vector<8x8xf32> to vector<8xf32>
    %332 = vector.shape_cast %331 : vector<8xf32> to vector<8x1xf32>
    %333 = tpu.reciprocal %332 {approx = true} : vector<8x1xf32> -> vector<8x1xf32>
    %334 = vector.broadcast %333 : vector<8x1xf32> to vector<8x8xf32>
    %335 = arith.mulf %330, %334 : vector<8x8xf32>
    %cst_239 = arith.constant dense<0.000000e+00> : vector<8x8xf32>
    %336 = tpu.matmul %335, %318, %cst_239 {dimension_numbers = #tpu.dot_dimension_numbers<[1], [0], [0], [1], [0, 0, 1, 1], [], []>} : vector<8x8xf32>, vector<8x8xf32>, vector<8x8xf32> -> vector<8x8xf32>
    %c1_240 = arith.constant 1 : index
    %c0_241 = arith.constant 0 : index
    %c0_242 = arith.constant 0 : index
    %337 = vector.load %arg31[%c1_240, %c0_241, %c0_242] : memref<4x8x32xf32, #tpu.memory_space<vmem>>, vector<1x8x32xf32>
    %338 = vector.shape_cast %337 : vector<1x8x32xf32> to vector<8x32xf32>
    %cst_243 = arith.constant dense<0.000000e+00> : vector<8x32xf32>
    %339 = tpu.matmul %336, %338, %cst_243 {dimension_numbers = #tpu.dot_dimension_numbers<[1], [0], [0], [1], [0, 0, 1, 1], [], []>} : vector<8x8xf32>, vector<8x32xf32>, vector<8x32xf32> -> vector<8x32xf32>
    %340 = arith.addf %297, %339 : vector<8x32xf32>
    %c2_244 = arith.constant 2 : index
    %c0_245 = arith.constant 0 : index
    %c0_246 = arith.constant 0 : index
    %341 = vector.load %arg25[%c2_244, %c0_245, %c0_246] : memref<4x32x8xf32, #tpu.memory_space<vmem>>, vector<1x32x8xf32>
    %342 = vector.shape_cast %341 : vector<1x32x8xf32> to vector<32x8xf32>
    %cst_247 = arith.constant dense<0.000000e+00> : vector<8x8xf32>
    %343 = tpu.matmul %252, %342, %cst_247 {dimension_numbers = #tpu.dot_dimension_numbers<[1], [0], [0], [1], [0, 0, 1, 1], [], []>} : vector<8x32xf32>, vector<32x8xf32>, vector<8x8xf32> -> vector<8x8xf32>
    %c2_248 = arith.constant 2 : index
    %c0_249 = arith.constant 0 : index
    %c0_250 = arith.constant 0 : index
    %344 = vector.load %arg26[%c2_248, %c0_249, %c0_250] : memref<4x1x8xf32, #tpu.memory_space<vmem>>, vector<1x1x8xf32>
    %345 = vector.shape_cast %344 : vector<1x1x8xf32> to vector<1x8xf32>
    %346 = vector.broadcast %345 : vector<1x8xf32> to vector<8x8xf32>
    %347 = arith.addf %343, %346 : vector<8x8xf32>
    %c2_251 = arith.constant 2 : index
    %c0_252 = arith.constant 0 : index
    %c0_253 = arith.constant 0 : index
    %348 = vector.load %arg27[%c2_251, %c0_252, %c0_253] : memref<4x32x8xf32, #tpu.memory_space<vmem>>, vector<1x32x8xf32>
    %349 = vector.shape_cast %348 : vector<1x32x8xf32> to vector<32x8xf32>
    %cst_254 = arith.constant dense<0.000000e+00> : vector<8x8xf32>
    %350 = tpu.matmul %1, %349, %cst_254 {dimension_numbers = #tpu.dot_dimension_numbers<[1], [0], [0], [1], [0, 0, 1, 1], [], []>} : vector<8x32xf32>, vector<32x8xf32>, vector<8x8xf32> -> vector<8x8xf32>
    %c2_255 = arith.constant 2 : index
    %c0_256 = arith.constant 0 : index
    %c0_257 = arith.constant 0 : index
    %351 = vector.load %arg28[%c2_255, %c0_256, %c0_257] : memref<4x1x8xf32, #tpu.memory_space<vmem>>, vector<1x1x8xf32>
    %352 = vector.shape_cast %351 : vector<1x1x8xf32> to vector<1x8xf32>
    %353 = vector.broadcast %352 : vector<1x8xf32> to vector<8x8xf32>
    %354 = arith.addf %350, %353 : vector<8x8xf32>
    %c2_258 = arith.constant 2 : index
    %c0_259 = arith.constant 0 : index
    %c0_260 = arith.constant 0 : index
    %355 = vector.load %arg29[%c2_258, %c0_259, %c0_260] : memref<4x32x8xf32, #tpu.memory_space<vmem>>, vector<1x32x8xf32>
    %356 = vector.shape_cast %355 : vector<1x32x8xf32> to vector<32x8xf32>
    %cst_261 = arith.constant dense<0.000000e+00> : vector<8x8xf32>
    %357 = tpu.matmul %2, %356, %cst_261 {dimension_numbers = #tpu.dot_dimension_numbers<[1], [0], [0], [1], [0, 0, 1, 1], [], []>} : vector<8x32xf32>, vector<32x8xf32>, vector<8x8xf32> -> vector<8x8xf32>
    %c2_262 = arith.constant 2 : index
    %c0_263 = arith.constant 0 : index
    %c0_264 = arith.constant 0 : index
    %358 = vector.load %arg30[%c2_262, %c0_263, %c0_264] : memref<4x1x8xf32, #tpu.memory_space<vmem>>, vector<1x1x8xf32>
    %359 = vector.shape_cast %358 : vector<1x1x8xf32> to vector<1x8xf32>
    %360 = vector.broadcast %359 : vector<1x8xf32> to vector<8x8xf32>
    %361 = arith.addf %357, %360 : vector<8x8xf32>
    %cst_265 = arith.constant dense<0.000000e+00> : vector<8x8xf32>
    %362 = tpu.matmul %347, %354, %cst_265 {dimension_numbers = #tpu.dot_dimension_numbers<[1], [1], [0], [0], [0, 0, 1, 0], [], []>} : vector<8x8xf32>, vector<8x8xf32>, vector<8x8xf32> -> vector<8x8xf32>
    %cst_266 = arith.constant 0.353553385 : f32
    %363 = vector.broadcast %cst_266 : f32 to vector<8x8xf32>
    %364 = arith.mulf %362, %363 : vector<8x8xf32>
    %cst_267 = arith.constant 0.000000e+00 : f32
    %365 = vector.broadcast %cst_267 : f32 to vector<8x8xf32>
    %366 = arith.cmpf oeq, %3, %365 : vector<8x8xf32>
    %cst_268 = arith.constant -1.000000e+09 : f32
    %367 = vector.broadcast %cst_268 : f32 to vector<8x8xf32>
    %368 = arith.select %366, %367, %364 : vector<8x8xi1>, vector<8x8xf32>
    %cst_269 = arith.constant dense<0xFF800000> : vector<8xf32>
    %369 = vector.multi_reduction <maximumf>, %368, %cst_269 [1] : vector<8x8xf32> to vector<8xf32>
    %370 = vector.shape_cast %369 : vector<8xf32> to vector<8x1xf32>
    %371 = vector.broadcast %370 : vector<8x1xf32> to vector<8x8xf32>
    %372 = arith.subf %368, %371 : vector<8x8xf32>
    %373 = math.exp %372 : vector<8x8xf32>
    %cst_270 = arith.constant dense<0.000000e+00> : vector<8xf32>
    %374 = vector.multi_reduction <add>, %373, %cst_270 [1] : vector<8x8xf32> to vector<8xf32>
    %375 = vector.shape_cast %374 : vector<8xf32> to vector<8x1xf32>
    %376 = tpu.reciprocal %375 {approx = true} : vector<8x1xf32> -> vector<8x1xf32>
    %377 = vector.broadcast %376 : vector<8x1xf32> to vector<8x8xf32>
    %378 = arith.mulf %373, %377 : vector<8x8xf32>
    %cst_271 = arith.constant dense<0.000000e+00> : vector<8x8xf32>
    %379 = tpu.matmul %378, %361, %cst_271 {dimension_numbers = #tpu.dot_dimension_numbers<[1], [0], [0], [1], [0, 0, 1, 1], [], []>} : vector<8x8xf32>, vector<8x8xf32>, vector<8x8xf32> -> vector<8x8xf32>
    %c2_272 = arith.constant 2 : index
    %c0_273 = arith.constant 0 : index
    %c0_274 = arith.constant 0 : index
    %380 = vector.load %arg31[%c2_272, %c0_273, %c0_274] : memref<4x8x32xf32, #tpu.memory_space<vmem>>, vector<1x8x32xf32>
    %381 = vector.shape_cast %380 : vector<1x8x32xf32> to vector<8x32xf32>
    %cst_275 = arith.constant dense<0.000000e+00> : vector<8x32xf32>
    %382 = tpu.matmul %379, %381, %cst_275 {dimension_numbers = #tpu.dot_dimension_numbers<[1], [0], [0], [1], [0, 0, 1, 1], [], []>} : vector<8x8xf32>, vector<8x32xf32>, vector<8x32xf32> -> vector<8x32xf32>
    %383 = arith.addf %340, %382 : vector<8x32xf32>
    %c3_276 = arith.constant 3 : index
    %c0_277 = arith.constant 0 : index
    %c0_278 = arith.constant 0 : index
    %384 = vector.load %arg25[%c3_276, %c0_277, %c0_278] : memref<4x32x8xf32, #tpu.memory_space<vmem>>, vector<1x32x8xf32>
    %385 = vector.shape_cast %384 : vector<1x32x8xf32> to vector<32x8xf32>
    %cst_279 = arith.constant dense<0.000000e+00> : vector<8x8xf32>
    %386 = tpu.matmul %252, %385, %cst_279 {dimension_numbers = #tpu.dot_dimension_numbers<[1], [0], [0], [1], [0, 0, 1, 1], [], []>} : vector<8x32xf32>, vector<32x8xf32>, vector<8x8xf32> -> vector<8x8xf32>
    %c3_280 = arith.constant 3 : index
    %c0_281 = arith.constant 0 : index
    %c0_282 = arith.constant 0 : index
    %387 = vector.load %arg26[%c3_280, %c0_281, %c0_282] : memref<4x1x8xf32, #tpu.memory_space<vmem>>, vector<1x1x8xf32>
    %388 = vector.shape_cast %387 : vector<1x1x8xf32> to vector<1x8xf32>
    %389 = vector.broadcast %388 : vector<1x8xf32> to vector<8x8xf32>
    %390 = arith.addf %386, %389 : vector<8x8xf32>
    %c3_283 = arith.constant 3 : index
    %c0_284 = arith.constant 0 : index
    %c0_285 = arith.constant 0 : index
    %391 = vector.load %arg27[%c3_283, %c0_284, %c0_285] : memref<4x32x8xf32, #tpu.memory_space<vmem>>, vector<1x32x8xf32>
    %392 = vector.shape_cast %391 : vector<1x32x8xf32> to vector<32x8xf32>
    %cst_286 = arith.constant dense<0.000000e+00> : vector<8x8xf32>
    %393 = tpu.matmul %1, %392, %cst_286 {dimension_numbers = #tpu.dot_dimension_numbers<[1], [0], [0], [1], [0, 0, 1, 1], [], []>} : vector<8x32xf32>, vector<32x8xf32>, vector<8x8xf32> -> vector<8x8xf32>
    %c3_287 = arith.constant 3 : index
    %c0_288 = arith.constant 0 : index
    %c0_289 = arith.constant 0 : index
    %394 = vector.load %arg28[%c3_287, %c0_288, %c0_289] : memref<4x1x8xf32, #tpu.memory_space<vmem>>, vector<1x1x8xf32>
    %395 = vector.shape_cast %394 : vector<1x1x8xf32> to vector<1x8xf32>
    %396 = vector.broadcast %395 : vector<1x8xf32> to vector<8x8xf32>
    %397 = arith.addf %393, %396 : vector<8x8xf32>
    %c3_290 = arith.constant 3 : index
    %c0_291 = arith.constant 0 : index
    %c0_292 = arith.constant 0 : index
    %398 = vector.load %arg29[%c3_290, %c0_291, %c0_292] : memref<4x32x8xf32, #tpu.memory_space<vmem>>, vector<1x32x8xf32>
    %399 = vector.shape_cast %398 : vector<1x32x8xf32> to vector<32x8xf32>
    %cst_293 = arith.constant dense<0.000000e+00> : vector<8x8xf32>
    %400 = tpu.matmul %2, %399, %cst_293 {dimension_numbers = #tpu.dot_dimension_numbers<[1], [0], [0], [1], [0, 0, 1, 1], [], []>} : vector<8x32xf32>, vector<32x8xf32>, vector<8x8xf32> -> vector<8x8xf32>
    %c3_294 = arith.constant 3 : index
    %c0_295 = arith.constant 0 : index
    %c0_296 = arith.constant 0 : index
    %401 = vector.load %arg30[%c3_294, %c0_295, %c0_296] : memref<4x1x8xf32, #tpu.memory_space<vmem>>, vector<1x1x8xf32>
    %402 = vector.shape_cast %401 : vector<1x1x8xf32> to vector<1x8xf32>
    %403 = vector.broadcast %402 : vector<1x8xf32> to vector<8x8xf32>
    %404 = arith.addf %400, %403 : vector<8x8xf32>
    %cst_297 = arith.constant dense<0.000000e+00> : vector<8x8xf32>
    %405 = tpu.matmul %390, %397, %cst_297 {dimension_numbers = #tpu.dot_dimension_numbers<[1], [1], [0], [0], [0, 0, 1, 0], [], []>} : vector<8x8xf32>, vector<8x8xf32>, vector<8x8xf32> -> vector<8x8xf32>
    %cst_298 = arith.constant 0.353553385 : f32
    %406 = vector.broadcast %cst_298 : f32 to vector<8x8xf32>
    %407 = arith.mulf %405, %406 : vector<8x8xf32>
    %cst_299 = arith.constant 0.000000e+00 : f32
    %408 = vector.broadcast %cst_299 : f32 to vector<8x8xf32>
    %409 = arith.cmpf oeq, %3, %408 : vector<8x8xf32>
    %cst_300 = arith.constant -1.000000e+09 : f32
    %410 = vector.broadcast %cst_300 : f32 to vector<8x8xf32>
    %411 = arith.select %409, %410, %407 : vector<8x8xi1>, vector<8x8xf32>
    %cst_301 = arith.constant dense<0xFF800000> : vector<8xf32>
    %412 = vector.multi_reduction <maximumf>, %411, %cst_301 [1] : vector<8x8xf32> to vector<8xf32>
    %413 = vector.shape_cast %412 : vector<8xf32> to vector<8x1xf32>
    %414 = vector.broadcast %413 : vector<8x1xf32> to vector<8x8xf32>
    %415 = arith.subf %411, %414 : vector<8x8xf32>
    %416 = math.exp %415 : vector<8x8xf32>
    %cst_302 = arith.constant dense<0.000000e+00> : vector<8xf32>
    %417 = vector.multi_reduction <add>, %416, %cst_302 [1] : vector<8x8xf32> to vector<8xf32>
    %418 = vector.shape_cast %417 : vector<8xf32> to vector<8x1xf32>
    %419 = tpu.reciprocal %418 {approx = true} : vector<8x1xf32> -> vector<8x1xf32>
    %420 = vector.broadcast %419 : vector<8x1xf32> to vector<8x8xf32>
    %421 = arith.mulf %416, %420 : vector<8x8xf32>
    %cst_303 = arith.constant dense<0.000000e+00> : vector<8x8xf32>
    %422 = tpu.matmul %421, %404, %cst_303 {dimension_numbers = #tpu.dot_dimension_numbers<[1], [0], [0], [1], [0, 0, 1, 1], [], []>} : vector<8x8xf32>, vector<8x8xf32>, vector<8x8xf32> -> vector<8x8xf32>
    %c3_304 = arith.constant 3 : index
    %c0_305 = arith.constant 0 : index
    %c0_306 = arith.constant 0 : index
    %423 = vector.load %arg31[%c3_304, %c0_305, %c0_306] : memref<4x8x32xf32, #tpu.memory_space<vmem>>, vector<1x8x32xf32>
    %424 = vector.shape_cast %423 : vector<1x8x32xf32> to vector<8x32xf32>
    %cst_307 = arith.constant dense<0.000000e+00> : vector<8x32xf32>
    %425 = tpu.matmul %422, %424, %cst_307 {dimension_numbers = #tpu.dot_dimension_numbers<[1], [0], [0], [1], [0, 0, 1, 1], [], []>} : vector<8x8xf32>, vector<8x32xf32>, vector<8x32xf32> -> vector<8x32xf32>
    %426 = arith.addf %383, %425 : vector<8x32xf32>
    %427 = vector.broadcast %253 : vector<1x32xf32> to vector<8x32xf32>
    %428 = arith.addf %426, %427 : vector<8x32xf32>
    %429 = arith.addf %428, %252 : vector<8x32xf32>
    %cst_308 = arith.constant dense<0.000000e+00> : vector<8xf32>
    %430 = vector.multi_reduction <add>, %429, %cst_308 [1] : vector<8x32xf32> to vector<8xf32>
    %431 = vector.shape_cast %430 : vector<8xf32> to vector<8x1xf32>
    %cst_309 = arith.constant 3.200000e+01 : f32
    %432 = vector.broadcast %cst_309 : f32 to vector<8x1xf32>
    %433 = arith.divf %431, %432 : vector<8x1xf32>
    %434 = vector.broadcast %433 : vector<8x1xf32> to vector<8x32xf32>
    %435 = arith.subf %429, %434 : vector<8x32xf32>
    %436 = arith.mulf %435, %435 : vector<8x32xf32>
    %cst_310 = arith.constant dense<0.000000e+00> : vector<8xf32>
    %437 = vector.multi_reduction <add>, %436, %cst_310 [1] : vector<8x32xf32> to vector<8xf32>
    %438 = vector.shape_cast %437 : vector<8xf32> to vector<8x1xf32>
    %cst_311 = arith.constant 3.200000e+01 : f32
    %439 = vector.broadcast %cst_311 : f32 to vector<8x1xf32>
    %440 = arith.divf %438, %439 : vector<8x1xf32>
    %441 = vector.broadcast %433 : vector<8x1xf32> to vector<8x32xf32>
    %442 = arith.subf %429, %441 : vector<8x32xf32>
    %cst_312 = arith.constant 9.99999974E-6 : f32
    %443 = vector.broadcast %cst_312 : f32 to vector<8x1xf32>
    %444 = arith.addf %440, %443 : vector<8x1xf32>
    %445 = math.rsqrt %444 : vector<8x1xf32>
    %446 = vector.broadcast %445 : vector<8x1xf32> to vector<8x32xf32>
    %447 = arith.mulf %442, %446 : vector<8x32xf32>
    %448 = vector.broadcast %254 : vector<1x32xf32> to vector<8x32xf32>
    %449 = arith.mulf %447, %448 : vector<8x32xf32>
    %450 = vector.broadcast %255 : vector<1x32xf32> to vector<8x32xf32>
    %451 = arith.addf %449, %450 : vector<8x32xf32>
    %c0_313 = arith.constant 0 : index
    %c0_314 = arith.constant 0 : index
    %452 = vector.load %arg35[%c0_313, %c0_314] : memref<32x64xf32, #tpu.memory_space<vmem>>, vector<32x64xf32>
    %c0_315 = arith.constant 0 : index
    %c0_316 = arith.constant 0 : index
    %453 = vector.load %arg36[%c0_315, %c0_316] : memref<1x64xf32, #tpu.memory_space<vmem>>, vector<1x64xf32>
    %c0_317 = arith.constant 0 : index
    %c0_318 = arith.constant 0 : index
    %454 = vector.load %arg37[%c0_317, %c0_318] : memref<64x32xf32, #tpu.memory_space<vmem>>, vector<64x32xf32>
    %c0_319 = arith.constant 0 : index
    %c0_320 = arith.constant 0 : index
    %455 = vector.load %arg38[%c0_319, %c0_320] : memref<1x32xf32, #tpu.memory_space<vmem>>, vector<1x32xf32>
    %c0_321 = arith.constant 0 : index
    %c0_322 = arith.constant 0 : index
    %456 = vector.load %arg39[%c0_321, %c0_322] : memref<1x32xf32, #tpu.memory_space<vmem>>, vector<1x32xf32>
    %c0_323 = arith.constant 0 : index
    %c0_324 = arith.constant 0 : index
    %457 = vector.load %arg40[%c0_323, %c0_324] : memref<1x32xf32, #tpu.memory_space<vmem>>, vector<1x32xf32>
    %cst_325 = arith.constant dense<0.000000e+00> : vector<8x64xf32>
    %458 = tpu.matmul %451, %452, %cst_325 {dimension_numbers = #tpu.dot_dimension_numbers<[1], [0], [0], [1], [0, 0, 1, 1], [], []>} : vector<8x32xf32>, vector<32x64xf32>, vector<8x64xf32> -> vector<8x64xf32>
    %459 = vector.broadcast %453 : vector<1x64xf32> to vector<8x64xf32>
    %460 = arith.addf %458, %459 : vector<8x64xf32>
    %cst_326 = arith.constant 0.000000e+00 : f32
    %461 = vector.broadcast %cst_326 : f32 to vector<8x64xf32>
    %462 = arith.maximumf %460, %461 : vector<8x64xf32>
    %cst_327 = arith.constant dense<0.000000e+00> : vector<8x32xf32>
    %463 = tpu.matmul %462, %454, %cst_327 {dimension_numbers = #tpu.dot_dimension_numbers<[1], [0], [0], [1], [0, 0, 1, 1], [], []>} : vector<8x64xf32>, vector<64x32xf32>, vector<8x32xf32> -> vector<8x32xf32>
    %464 = vector.broadcast %455 : vector<1x32xf32> to vector<8x32xf32>
    %465 = arith.addf %463, %464 : vector<8x32xf32>
    %466 = arith.addf %465, %451 : vector<8x32xf32>
    %cst_328 = arith.constant dense<0.000000e+00> : vector<8xf32>
    %467 = vector.multi_reduction <add>, %466, %cst_328 [1] : vector<8x32xf32> to vector<8xf32>
    %468 = vector.shape_cast %467 : vector<8xf32> to vector<8x1xf32>
    %cst_329 = arith.constant 3.200000e+01 : f32
    %469 = vector.broadcast %cst_329 : f32 to vector<8x1xf32>
    %470 = arith.divf %468, %469 : vector<8x1xf32>
    %471 = vector.broadcast %470 : vector<8x1xf32> to vector<8x32xf32>
    %472 = arith.subf %466, %471 : vector<8x32xf32>
    %473 = arith.mulf %472, %472 : vector<8x32xf32>
    %cst_330 = arith.constant dense<0.000000e+00> : vector<8xf32>
    %474 = vector.multi_reduction <add>, %473, %cst_330 [1] : vector<8x32xf32> to vector<8xf32>
    %475 = vector.shape_cast %474 : vector<8xf32> to vector<8x1xf32>
    %cst_331 = arith.constant 3.200000e+01 : f32
    %476 = vector.broadcast %cst_331 : f32 to vector<8x1xf32>
    %477 = arith.divf %475, %476 : vector<8x1xf32>
    %478 = vector.broadcast %470 : vector<8x1xf32> to vector<8x32xf32>
    %479 = arith.subf %466, %478 : vector<8x32xf32>
    %cst_332 = arith.constant 9.99999974E-6 : f32
    %480 = vector.broadcast %cst_332 : f32 to vector<8x1xf32>
    %481 = arith.addf %477, %480 : vector<8x1xf32>
    %482 = math.rsqrt %481 : vector<8x1xf32>
    %483 = vector.broadcast %482 : vector<8x1xf32> to vector<8x32xf32>
    %484 = arith.mulf %479, %483 : vector<8x32xf32>
    %485 = vector.broadcast %456 : vector<1x32xf32> to vector<8x32xf32>
    %486 = arith.mulf %484, %485 : vector<8x32xf32>
    %487 = vector.broadcast %457 : vector<1x32xf32> to vector<8x32xf32>
    %488 = arith.addf %486, %487 : vector<8x32xf32>
    %c0_333 = arith.constant 0 : index
    %c0_334 = arith.constant 0 : index
    %489 = vector.load %arg41[%c0_333, %c0_334] : memref<8x32xf32, #tpu.memory_space<vmem>>, vector<8x32xf32>
    tpu.vector_store %arg41[%c0_333, %c0_334], %488 {strides = array<i32>} : memref<8x32xf32, #tpu.memory_space<vmem>>, vector<8x32xf32>,
    return
  }
}

</mosaic_0001>

<llo_original>
// kernel: model_forward.1
$region0: #{model_forward.1}
  #allocation0 [shape = 'u32[]', space=smem, size = 0x4, offset = 0x4, fixed_abs, tag = 'smem constant byte address 0x4 - core index']
  #allocation1 [shape = 'u32[144,128]{1,0:T(1,128)}', space=vmem, size = 0x12000, scoped, tag = 'internal scratch']
  %s0 = inlined_call_operand.smem [shape: u32[42], index: -1, kind: input, shape index: {}]
  %s1 = sld [smem:[%s0]]
  %s2 = scalar_lea.smem %s0, 1
  %s3 = sld [smem:[%s2]]
  %s4 = scalar_lea.smem %s0, 2
  %s5 = sld [smem:[%s4]]
  %s6 = scalar_lea.smem %s0, 3
  %s7 = sld [smem:[%s6]]
  %s8 = scalar_lea.smem %s0, 4
  %s9 = sld [smem:[%s8]]
  %s10 = scalar_lea.smem %s0, 5
  %s11 = sld [smem:[%s10]]
  %s12 = scalar_lea.smem %s0, 6
  %s13 = sld [smem:[%s12]]
  %s14 = scalar_lea.smem %s0, 7
  %s15 = sld [smem:[%s14]]
  %s16 = scalar_lea.smem %s0, 8
  %s17 = sld [smem:[%s16]]
  %s18 = scalar_lea.smem %s0, 9
  %s19 = sld [smem:[%s18]]
  %s20 = scalar_lea.smem %s0, 10
  %s21 = sld [smem:[%s20]]
  %s22 = scalar_lea.smem %s0, 11
  %s23 = sld [smem:[%s22]]
  %s24 = scalar_lea.smem %s0, 12
  %s25 = sld [smem:[%s24]]
  %s26 = scalar_lea.smem %s0, 13
  %s27 = sld [smem:[%s26]]
  %s28 = scalar_lea.smem %s0, 14
  %s29 = sld [smem:[%s28]]
  %s30 = scalar_lea.smem %s0, 15
  %s31 = sld [smem:[%s30]]
  %s32 = scalar_lea.smem %s0, 16
  %s33 = sld [smem:[%s32]]
  %s34 = scalar_lea.smem %s0, 17
  %s35 = sld [smem:[%s34]]
  %s36 = scalar_lea.smem %s0, 18
  %s37 = sld [smem:[%s36]]
  %s38 = scalar_lea.smem %s0, 19
  %s39 = sld [smem:[%s38]]
  %s40 = scalar_lea.smem %s0, 20
  %s41 = sld [smem:[%s40]]
  %s42 = scalar_lea.smem %s0, 21
  %s43 = sld [smem:[%s42]]
  %s44 = scalar_lea.smem %s0, 22
  %s45 = sld [smem:[%s44]]
  %s46 = scalar_lea.smem %s0, 23
  %s47 = sld [smem:[%s46]]
  %s48 = scalar_lea.smem %s0, 24
  %s49 = sld [smem:[%s48]]
  %s50 = scalar_lea.smem %s0, 25
  %s51 = sld [smem:[%s50]]
  %s52 = scalar_lea.smem %s0, 26
  %s53 = sld [smem:[%s52]]
  %s54 = scalar_lea.smem %s0, 27
  %s55 = sld [smem:[%s54]]
  %s56 = scalar_lea.smem %s0, 28
  %s57 = sld [smem:[%s56]]
  %s58 = scalar_lea.smem %s0, 29
  %s59 = sld [smem:[%s58]]
  %s60 = scalar_lea.smem %s0, 30
  %s61 = sld [smem:[%s60]]
  %s62 = scalar_lea.smem %s0, 31
  %s63 = sld [smem:[%s62]]
  %s64 = scalar_lea.smem %s0, 32
  %s65 = sld [smem:[%s64]]
  %s66 = scalar_lea.smem %s0, 33
  %s67 = sld [smem:[%s66]]
  %s68 = scalar_lea.smem %s0, 34
  %s69 = sld [smem:[%s68]]
  %s70 = scalar_lea.smem %s0, 35
  %s71 = sld [smem:[%s70]]
  %s72 = scalar_lea.smem %s0, 36
  %s73 = sld [smem:[%s72]]
  %s74 = scalar_lea.smem %s0, 37
  %s75 = sld [smem:[%s74]]
  %s76 = scalar_lea.smem %s0, 38
  %s77 = sld [smem:[%s76]]
  %s78 = scalar_lea.smem %s0, 39
  %s79 = sld [smem:[%s78]]
  %s80 = scalar_lea.smem %s0, 40
  %s81 = sld [smem:[%s80]]
  %s82 = scalar_lea.smem %s0, 41
  %s83 = sld [smem:[%s82]]
  %s84 = sld [smem:[#allocation0]]
  $region174: #{model_forward.1} parent=0
    _
  %s86 = ssub.s32 1, %s84
  %s87 = scalar_select 0, %s86, %s84
  $region1: #{model_forward.1} parent=0
    #allocation2 [shape = 'u8[4096]{0}', space=vmem, size = 0x1000, scoped, tag = 'output window, operand 0, single buffered']
    #allocation3 [shape = 's32[1]{0}', space=sflag, size = 0x4, scoped, tag = 'scoped memory for model_forward.1']
    %88 = vsyncpa [#allocation3], 0
    // Predicated region
    $region2: #{model_forward.1} parent=1 // pred_check
      _
    $region3: #{model_forward.1} parent=1 // pred_check_branch
      %90 = sbr.rel (0) target = $region5
    $region4: #{model_forward.1} parent=1 // pred_region
      _
    $region5: #{model_forward.1} parent=1 // pred_fallthru
      _
    // Predicated region
    $region6: #{model_forward.1} parent=1 // pred_check
      _
    $region7: #{model_forward.1} parent=1 // pred_check_branch
      %92 = sbr.rel (0) target = $region9
    $region8: #{model_forward.1} parent=1 // pred_region
      _
    $region9: #{model_forward.1} parent=1 // pred_fallthru
      _
    // Predicated region
    $region10: #{model_forward.1} parent=1 // pred_check
      _
    $region11: #{model_forward.1} parent=1 // pred_check_branch
      %94 = sbr.rel (0) target = $region13
    $region12: #{model_forward.1} parent=1 // pred_region
      _
    $region13: #{model_forward.1} parent=1 // pred_fallthru
      _
    // Predicated region
    $region14: #{model_forward.1} parent=1 // pred_check
      _
    $region15: #{model_forward.1} parent=1 // pred_check_branch
      %96 = sbr.rel (0) target = $region17
    $region16: #{model_forward.1} parent=1 // pred_region
      _
    $region17: #{model_forward.1} parent=1 // pred_fallthru
      _
    // Predicated region
    $region18: #{model_forward.1} parent=1 // pred_check
      _
    $region19: #{model_forward.1} parent=1 // pred_check_branch
      %98 = sbr.rel (0) target = $region21
    $region20: #{model_forward.1} parent=1 // pred_region
      _
    $region21: #{model_forward.1} parent=1 // pred_fallthru
      _
    // Predicated region
    $region22: #{model_forward.1} parent=1 // pred_check
      _
    $region23: #{model_forward.1} parent=1 // pred_check_branch
      %100 = sbr.rel (0) target = $region25
    $region24: #{model_forward.1} parent=1 // pred_region
      _
    $region25: #{model_forward.1} parent=1 // pred_fallthru
      _
    // Predicated region
    $region26: #{model_forward.1} parent=1 // pred_check
      _
    $region27: #{model_forward.1} parent=1 // pred_check_branch
      %102 = sbr.rel (0) target = $region29
    $region28: #{model_forward.1} parent=1 // pred_region
      _
    $region29: #{model_forward.1} parent=1 // pred_fallthru
      _
    // Predicated region
    $region30: #{model_forward.1} parent=1 // pred_check
      _
    $region31: #{model_forward.1} parent=1 // pred_check_branch
      %104 = sbr.rel (0) target = $region33
    $region32: #{model_forward.1} parent=1 // pred_region
      _
    $region33: #{model_forward.1} parent=1 // pred_fallthru
      _
    // Predicated region
    $region34: #{model_forward.1} parent=1 // pred_check
      _
    $region35: #{model_forward.1} parent=1 // pred_check_branch
      %106 = sbr.rel (0) target = $region37
    $region36: #{model_forward.1} parent=1 // pred_region
      _
    $region37: #{model_forward.1} parent=1 // pred_fallthru
      _
    // Predicated region
    $region38: #{model_forward.1} parent=1 // pred_check
      _
    $region39: #{model_forward.1} parent=1 // pred_check_branch
      %108 = sbr.rel (0) target = $region41
    $region40: #{model_forward.1} parent=1 // pred_region
      _
    $region41: #{model_forward.1} parent=1 // pred_fallthru
      _
    // Predicated region
    $region42: #{model_forward.1} parent=1 // pred_check
      _
    $region43: #{model_forward.1} parent=1 // pred_check_branch
      %110 = sbr.rel (0) target = $region45
    $region44: #{model_forward.1} parent=1 // pred_region
      _
    $region45: #{model_forward.1} parent=1 // pred_fallthru
      _
    // Predicated region
    $region46: #{model_forward.1} parent=1 // pred_check
      _
    $region47: #{model_forward.1} parent=1 // pred_check_branch
      %112 = sbr.rel (0) target = $region49
    $region48: #{model_forward.1} parent=1 // pred_region
      _
    $region49: #{model_forward.1} parent=1 // pred_fallthru
      _
    // Predicated region
    $region50: #{model_forward.1} parent=1 // pred_check
      _
    $region51: #{model_forward.1} parent=1 // pred_check_branch
      %114 = sbr.rel (0) target = $region53
    $region52: #{model_forward.1} parent=1 // pred_region
      _
    $region53: #{model_forward.1} parent=1 // pred_fallthru
      _
    // Predicated region
    $region54: #{model_forward.1} parent=1 // pred_check
      _
    $region55: #{model_forward.1} parent=1 // pred_check_branch
      %116 = sbr.rel (0) target = $region57
    $region56: #{model_forward.1} parent=1 // pred_region
      _
    $region57: #{model_forward.1} parent=1 // pred_fallthru
      _
    // Predicated region
    $region58: #{model_forward.1} parent=1 // pred_check
      _
    $region59: #{model_forward.1} parent=1 // pred_check_branch
      %118 = sbr.rel (0) target = $region61
    $region60: #{model_forward.1} parent=1 // pred_region
      _
    $region61: #{model_forward.1} parent=1 // pred_fallthru
      _
    // Predicated region
    $region62: #{model_forward.1} parent=1 // pred_check
      _
    $region63: #{model_forward.1} parent=1 // pred_check_branch
      %120 = sbr.rel (0) target = $region65
    $region64: #{model_forward.1} parent=1 // pred_region
      _
    $region65: #{model_forward.1} parent=1 // pred_fallthru
      _
    // Predicated region
    $region66: #{model_forward.1} parent=1 // pred_check
      _
    $region67: #{model_forward.1} parent=1 // pred_check_branch
      %122 = sbr.rel (0) target = $region69
    $region68: #{model_forward.1} parent=1 // pred_region
      _
    $region69: #{model_forward.1} parent=1 // pred_fallthru
      _
    // Predicated region
    $region70: #{model_forward.1} parent=1 // pred_check
      _
    $region71: #{model_forward.1} parent=1 // pred_check_branch
      %124 = sbr.rel (0) target = $region73
    $region72: #{model_forward.1} parent=1 // pred_region
      _
    $region73: #{model_forward.1} parent=1 // pred_fallthru
      _
    // Predicated region
    $region74: #{model_forward.1} parent=1 // pred_check
      _
    $region75: #{model_forward.1} parent=1 // pred_check_branch
      %126 = sbr.rel (0) target = $region77
    $region76: #{model_forward.1} parent=1 // pred_region
      _
    $region77: #{model_forward.1} parent=1 // pred_fallthru
      _
    // Predicated region
    $region78: #{model_forward.1} parent=1 // pred_check
      _
    $region79: #{model_forward.1} parent=1 // pred_check_branch
      %128 = sbr.rel (0) target = $region81
    $region80: #{model_forward.1} parent=1 // pred_region
      _
    $region81: #{model_forward.1} parent=1 // pred_fallthru
      _
    // Predicated region
    $region82: #{model_forward.1} parent=1 // pred_check
      _
    $region83: #{model_forward.1} parent=1 // pred_check_branch
      %130 = sbr.rel (0) target = $region85
    $region84: #{model_forward.1} parent=1 // pred_region
      _
    $region85: #{model_forward.1} parent=1 // pred_fallthru
      _
    // Predicated region
    $region86: #{model_forward.1} parent=1 // pred_check
      _
    $region87: #{model_forward.1} parent=1 // pred_check_branch
      %132 = sbr.rel (0) target = $region89
    $region88: #{model_forward.1} parent=1 // pred_region
      _
    $region89: #{model_forward.1} parent=1 // pred_fallthru
      _
    // Predicated region
    $region90: #{model_forward.1} parent=1 // pred_check
      _
    $region91: #{model_forward.1} parent=1 // pred_check_branch
      %134 = sbr.rel (0) target = $region93
    $region92: #{model_forward.1} parent=1 // pred_region
      _
    $region93: #{model_forward.1} parent=1 // pred_fallthru
      _
    // Predicated region
    $region94: #{model_forward.1} parent=1 // pred_check
      _
    $region95: #{model_forward.1} parent=1 // pred_check_branch
      %136 = sbr.rel (0) target = $region97
    $region96: #{model_forward.1} parent=1 // pred_region
      _
    $region97: #{model_forward.1} parent=1 // pred_fallthru
      _
    // Predicated region
    $region98: #{model_forward.1} parent=1 // pred_check
      _
    $region99: #{model_forward.1} parent=1 // pred_check_branch
      %138 = sbr.rel (0) target = $region101
    $region100: #{model_forward.1} parent=1 // pred_region
      _
    $region101: #{model_forward.1} parent=1 // pred_fallthru
      _
    // Predicated region
    $region102: #{model_forward.1} parent=1 // pred_check
      _
    $region103: #{model_forward.1} parent=1 // pred_check_branch
      %140 = sbr.rel (0) target = $region105
    $region104: #{model_forward.1} parent=1 // pred_region
      _
    $region105: #{model_forward.1} parent=1 // pred_fallthru
      _
    // Predicated region
    $region106: #{model_forward.1} parent=1 // pred_check
      _
    $region107: #{model_forward.1} parent=1 // pred_check_branch
      %142 = sbr.rel (0) target = $region109
    $region108: #{model_forward.1} parent=1 // pred_region
      _
    $region109: #{model_forward.1} parent=1 // pred_fallthru
      _
    // Predicated region
    $region110: #{model_forward.1} parent=1 // pred_check
      _
    $region111: #{model_forward.1} parent=1 // pred_check_branch
      %144 = sbr.rel (0) target = $region113
    $region112: #{model_forward.1} parent=1 // pred_region
      _
    $region113: #{model_forward.1} parent=1 // pred_fallthru
      _
    // Predicated region
    $region114: #{model_forward.1} parent=1 // pred_check
      _
    $region115: #{model_forward.1} parent=1 // pred_check_branch
      %146 = sbr.rel (0) target = $region117
    $region116: #{model_forward.1} parent=1 // pred_region
      _
    $region117: #{model_forward.1} parent=1 // pred_fallthru
      _
    // Predicated region
    $region118: #{model_forward.1} parent=1 // pred_check
      _
    $region119: #{model_forward.1} parent=1 // pred_check_branch
      %148 = sbr.rel (0) target = $region121
    $region120: #{model_forward.1} parent=1 // pred_region
      _
    $region121: #{model_forward.1} parent=1 // pred_fallthru
      _
    // Predicated region
    $region122: #{model_forward.1} parent=1 // pred_check
      _
    $region123: #{model_forward.1} parent=1 // pred_check_branch
      %150 = sbr.rel (0) target = $region125
    $region124: #{model_forward.1} parent=1 // pred_region
      _
    $region125: #{model_forward.1} parent=1 // pred_fallthru
      _
    // Predicated region
    $region126: #{model_forward.1} parent=1 // pred_check
      _
    $region127: #{model_forward.1} parent=1 // pred_check_branch
      %152 = sbr.rel (0) target = $region129
    $region128: #{model_forward.1} parent=1 // pred_region
      _
    $region129: #{model_forward.1} parent=1 // pred_fallthru
      _
    // Predicated region
    $region130: #{model_forward.1} parent=1 // pred_check
      _
    $region131: #{model_forward.1} parent=1 // pred_check_branch
      %154 = sbr.rel (0) target = $region133
    $region132: #{model_forward.1} parent=1 // pred_region
      _
    $region133: #{model_forward.1} parent=1 // pred_fallthru
      _
    // Predicated region
    $region134: #{model_forward.1} parent=1 // pred_check
      _
    $region135: #{model_forward.1} parent=1 // pred_check_branch
      %156 = sbr.rel (0) target = $region137
    $region136: #{model_forward.1} parent=1 // pred_region
      _
    $region137: #{model_forward.1} parent=1 // pred_fallthru
      _
    // Predicated region
    $region138: #{model_forward.1} parent=1 // pred_check
      _
    $region139: #{model_forward.1} parent=1 // pred_check_branch
      %158 = sbr.rel (0) target = $region141
    $region140: #{model_forward.1} parent=1 // pred_region
      _
    $region141: #{model_forward.1} parent=1 // pred_fallthru
      _
    // Predicated region
    $region142: #{model_forward.1} parent=1 // pred_check
      _
    $region143: #{model_forward.1} parent=1 // pred_check_branch
      %160 = sbr.rel (0) target = $region145
    $region144: #{model_forward.1} parent=1 // pred_region
      _
    $region145: #{model_forward.1} parent=1 // pred_fallthru
      _
    // Predicated region
    $region146: #{model_forward.1} parent=1 // pred_check
      _
    $region147: #{model_forward.1} parent=1 // pred_check_branch
      %162 = sbr.rel (0) target = $region149
    $region148: #{model_forward.1} parent=1 // pred_region
      _
    $region149: #{model_forward.1} parent=1 // pred_fallthru
      _
    // Predicated region
    $region150: #{model_forward.1} parent=1 // pred_check
      _
    $region151: #{model_forward.1} parent=1 // pred_check_branch
      %164 = sbr.rel (0) target = $region153
    $region152: #{model_forward.1} parent=1 // pred_region
      _
    $region153: #{model_forward.1} parent=1 // pred_fallthru
      _
    // Predicated region
    $region154: #{model_forward.1} parent=1 // pred_check
      _
    $region155: #{model_forward.1} parent=1 // pred_check_branch
      %166 = sbr.rel (0) target = $region157
    $region156: #{model_forward.1} parent=1 // pred_region
      _
    $region157: #{model_forward.1} parent=1 // pred_fallthru
      _
    // Predicated region
    $region158: #{model_forward.1} parent=1 // pred_check
      _
    $region159: #{model_forward.1} parent=1 // pred_check_branch
      %168 = sbr.rel (0) target = $region161
    $region160: #{model_forward.1} parent=1 // pred_region
      _
    $region161: #{model_forward.1} parent=1 // pred_fallthru
      _
    // Predicated region
    $region162: #{model_forward.1} parent=1 // pred_check
      _
    $region163: #{model_forward.1} parent=1 // pred_check_branch
      %170 = sbr.rel (0) target = $region165
    $region164: #{model_forward.1} parent=1 // pred_region
      _
    $region165: #{model_forward.1} parent=1 // pred_fallthru
      _
    %v171 = vld [vmem:[%s1] sm:$0xff]
    %v172 = vld [vmem:[%s3] sm:$0xff]
    %v173 = vld [vmem:[%s5] sm:$0xff]
    %v174 = vld [vmem:[%s7] sm:$0xff]
    %v175 = vld [vmem:[%s9] sm:$0xff]
    %v176 = vld [vmem:[%s11] sm:$0xff]
    %v177 = vld [vmem:[%s11 + $0x8] sm:$0xff]
    %v178 = vld [vmem:[%s11 + $0x10] sm:$0xff]
    %v179 = vld [vmem:[%s11 + $0x18] sm:$0xff]
    %v180 = vld [vmem:[%s13] sm:$0x1]
    %v182 = vlaneseq
    %v183 = vshrl.u32 %v182, 7
    %v184 = vsub.s32 0, %v183
    %v185 = vrot.slane %v180, %v184
    %vm187 = vcmask 261120
    %v189 = vsel %vm187, %v171, 0
    %191 = vmatprep.subr.mxu0 0.0
    %192 = vmatpush1.msra.mxu0 %v176
    %193 = vmatprep.subr.mxu0 0.0
    %194 = vmatpush1.msra.mxu0 %v177
    %195 = vmatprep.subr.mxu0 0.0
    %196 = vmatpush1.msra.mxu0 %v178
    %197 = vmatprep.subr.mxu0 0.0
    %198 = vmatpush1.msra.mxu0 %v179
    %199 = vmatprep.subr.mxu0 0.0
    %200 = vmatpush1.msra.mxu0 0.0
    %201 = vmatprep.subr.mxu0 0.0
    %202 = vmatpush1.msra.mxu0 0.0
    %203 = vmatprep.subr.mxu0 0.0
    %204 = vmatpush1.msra.mxu0 0.0
    %205 = vmatprep.subr.mxu0 0.0
    %206 = vmatpush1.msra.mxu0 0.0
    %207 = vmatprep.subr.mxu0 0.0
    %208 = vmatpush1.msra.mxu0 0.0
    %209 = vmatprep.subr.mxu0 0.0
    %210 = vmatpush1.msra.mxu0 0.0
    %211 = vmatprep.subr.mxu0 0.0
    %212 = vmatpush1.msra.mxu0 0.0
    %213 = vmatprep.subr.mxu0 0.0
    %214 = vmatpush1.msra.mxu0 0.0
    %215 = vmatprep.subr.mxu0 0.0
    %216 = vmatpush1.msra.mxu0 0.0
    %217 = vmatprep.subr.mxu0 0.0
    %218 = vmatpush1.msra.mxu0 0.0
    %219 = vmatprep.subr.mxu0 0.0
    %220 = vmatpush1.msra.mxu0 0.0
    %221 = vmatprep.subr.mxu0 0.0
    %222 = vmatpush1.msra.mxu0 0.0
    %223 = vmatprep.subr.mxu0 0.0
    %224 = vmatpush1.msra.mxu0 0.0
    %225 = vmatprep.subr.mxu0 0.0
    %226 = vmatpush1.msra.mxu0 0.0
    %227 = vmatprep.subr.mxu0 0.0
    %228 = vmatpush1.msra.mxu0 0.0
    %229 = vmatprep.subr.mxu0 0.0
    %230 = vmatpush1.msra.mxu0 0.0
    %231 = vmatprep.subr.mxu0 0.0
    %232 = vmatpush1.msra.mxu0 0.0
    %233 = vmatprep.subr.mxu0 0.0
    %234 = vmatpush1.msra.mxu0 0.0
    %235 = vmatprep.subr.mxu0 0.0
    %236 = vmatpush1.msra.mxu0 0.0
    %237 = vmatprep.subr.mxu0 0.0
    %238 = vmatpush1.msra.mxu0 0.0
    %239 = vmatprep.subr.mxu0 0.0
    %240 = vmatpush1.msra.mxu0 0.0
    %241 = vmatprep.subr.mxu0 0.0
    %242 = vmatpush1.msra.mxu0 0.0
    %243 = vmatprep.subr.mxu0 0.0
    %244 = vmatpush1.msra.mxu0 0.0
    %245 = vmatprep.subr.mxu0 0.0
    %246 = vmatpush1.msra.mxu0 0.0
    %247 = vmatprep.subr.mxu0 0.0
    %248 = vmatpush1.msra.mxu0 0.0
    %249 = vmatprep.subr.mxu0 0.0
    %250 = vmatpush1.msra.mxu0 0.0
    %251 = vmatprep.subr.mxu0 0.0
    %252 = vmatpush1.msra.mxu0 0.0
    %253 = vmatprep.subr.mxu0 0.0
    %254 = vmatpush1.msra.mxu0 0.0
    %255 = vmatprep.mubr.f32.mxu0 0.0
    %256 = vmatmul.mubr.f32.gmra.mrb[0].mxu0 %v189
    %v257 = vpop.f32.mrb[0].mxu0
    %v258 = vadd.f32 %v185, %v257
    %v259 = vpop.f32.mrb[0].mxu0
    %260 = vdwg.mxu0
    %v261 = vadd.f32 %v258, %v175
    %v262 = vld [vmem:[%s33] sm:$0x1]
    %v263 = vld [vmem:[%s35] sm:$0x1]
    %v264 = vld [vmem:[%s37] sm:$0x1]
    %v265 = vld [vmem:[%s19] sm:$0xff]
    %v266 = vld [vmem:[%s19 + $0x8] sm:$0xff]
    %v267 = vld [vmem:[%s19 + $0x10] sm:$0xff]
    %v268 = vld [vmem:[%s19 + $0x18] sm:$0xff]
    %v269 = vld [vmem:[%s21] sm:$0x1]
    %v271 = vlaneseq
    %v272 = vshrl.u32 %v271, 7
    %v273 = vsub.s32 0, %v272
    %v274 = vrot.slane %v269, %v273
    %v277 = vsel %vm187, %v261, 0
    %279 = vmatprep.subr.mxu0 0.0
    %280 = vmatpush1.msra.mxu0 %v265
    %281 = vmatprep.subr.mxu0 0.0
    %282 = vmatpush1.msra.mxu0 %v266
    %283 = vmatprep.subr.mxu0 0.0
    %284 = vmatpush1.msra.mxu0 %v267
    %285 = vmatprep.subr.mxu0 0.0
    %286 = vmatpush1.msra.mxu0 %v268
    %287 = vmatprep.subr.mxu0 0.0
    %288 = vmatpush1.msra.mxu0 0.0
    %289 = vmatprep.subr.mxu0 0.0
    %290 = vmatpush1.msra.mxu0 0.0
    %291 = vmatprep.subr.mxu0 0.0
    %292 = vmatpush1.msra.mxu0 0.0
    %293 = vmatprep.subr.mxu0 0.0
    %294 = vmatpush1.msra.mxu0 0.0
    %295 = vmatprep.subr.mxu0 0.0
    %296 = vmatpush1.msra.mxu0 0.0
    %297 = vmatprep.subr.mxu0 0.0
    %298 = vmatpush1.msra.mxu0 0.0
    %299 = vmatprep.subr.mxu0 0.0
    %300 = vmatpush1.msra.mxu0 0.0
    %301 = vmatprep.subr.mxu0 0.0
    %302 = vmatpush1.msra.mxu0 0.0
    %303 = vmatprep.subr.mxu0 0.0
    %304 = vmatpush1.msra.mxu0 0.0
    %305 = vmatprep.subr.mxu0 0.0
    %306 = vmatpush1.msra.mxu0 0.0
    %307 = vmatprep.subr.mxu0 0.0
    %308 = vmatpush1.msra.mxu0 0.0
    %309 = vmatprep.subr.mxu0 0.0
    %310 = vmatpush1.msra.mxu0 0.0
    %311 = vmatprep.subr.mxu0 0.0
    %312 = vmatpush1.msra.mxu0 0.0
    %313 = vmatprep.subr.mxu0 0.0
    %314 = vmatpush1.msra.mxu0 0.0
    %315 = vmatprep.subr.mxu0 0.0
    %316 = vmatpush1.msra.mxu0 0.0
    %317 = vmatprep.subr.mxu0 0.0
    %318 = vmatpush1.msra.mxu0 0.0
    %319 = vmatprep.subr.mxu0 0.0
    %320 = vmatpush1.msra.mxu0 0.0
    %321 = vmatprep.subr.mxu0 0.0
    %322 = vmatpush1.msra.mxu0 0.0
    %323 = vmatprep.subr.mxu0 0.0
    %324 = vmatpush1.msra.mxu0 0.0
    %325 = vmatprep.subr.mxu0 0.0
    %326 = vmatpush1.msra.mxu0 0.0
    %327 = vmatprep.subr.mxu0 0.0
    %328 = vmatpush1.msra.mxu0 0.0
    %329 = vmatprep.subr.mxu0 0.0
    %330 = vmatpush1.msra.mxu0 0.0
    %331 = vmatprep.subr.mxu0 0.0
    %332 = vmatpush1.msra.mxu0 0.0
    %333 = vmatprep.subr.mxu0 0.0
    %334 = vmatpush1.msra.mxu0 0.0
    %335 = vmatprep.subr.mxu0 0.0
    %336 = vmatpush1.msra.mxu0 0.0
    %337 = vmatprep.subr.mxu0 0.0
    %338 = vmatpush1.msra.mxu0 0.0
    %339 = vmatprep.subr.mxu0 0.0
    %340 = vmatpush1.msra.mxu0 0.0
    %341 = vmatprep.subr.mxu0 0.0
    %342 = vmatpush1.msra.mxu0 0.0
    %343 = vmatprep.mubr.f32.mxu0 0.0
    %344 = vmatmul.mubr.f32.gmra.mrb[0].mxu0 %v277
    %v345 = vpop.f32.mrb[0].mxu0
    %v346 = vadd.f32 %v274, %v345
    %v347 = vpop.f32.mrb[0].mxu0
    %348 = vdwg.mxu0
    %v349 = vld [vmem:[%s23] sm:$0xff]
    %v350 = vld [vmem:[%s23 + $0x8] sm:$0xff]
    %v351 = vld [vmem:[%s23 + $0x10] sm:$0xff]
    %v352 = vld [vmem:[%s23 + $0x18] sm:$0xff]
    %v353 = vld [vmem:[%s25] sm:$0x1]
    %v355 = vlaneseq
    %v356 = vshrl.u32 %v355, 7
    %v357 = vsub.s32 0, %v356
    %v358 = vrot.slane %v353, %v357
    %v361 = vsel %vm187, %v172, 0
    %363 = vmatprep.subr.mxu0 0.0
    %364 = vmatpush1.msra.mxu0 %v349
    %365 = vmatprep.subr.mxu0 0.0
    %366 = vmatpush1.msra.mxu0 %v350
    %367 = vmatprep.subr.mxu0 0.0
    %368 = vmatpush1.msra.mxu0 %v351
    %369 = vmatprep.subr.mxu0 0.0
    %370 = vmatpush1.msra.mxu0 %v352
    %371 = vmatprep.subr.mxu0 0.0
    %372 = vmatpush1.msra.mxu0 0.0
    %373 = vmatprep.subr.mxu0 0.0
    %374 = vmatpush1.msra.mxu0 0.0
    %375 = vmatprep.subr.mxu0 0.0
    %376 = vmatpush1.msra.mxu0 0.0
    %377 = vmatprep.subr.mxu0 0.0
    %378 = vmatpush1.msra.mxu0 0.0
    %379 = vmatprep.subr.mxu0 0.0
    %380 = vmatpush1.msra.mxu0 0.0
    %381 = vmatprep.subr.mxu0 0.0
    %382 = vmatpush1.msra.mxu0 0.0
    %383 = vmatprep.subr.mxu0 0.0
    %384 = vmatpush1.msra.mxu0 0.0
    %385 = vmatprep.subr.mxu0 0.0
    %386 = vmatpush1.msra.mxu0 0.0
    %387 = vmatprep.subr.mxu0 0.0
    %388 = vmatpush1.msra.mxu0 0.0
    %389 = vmatprep.subr.mxu0 0.0
    %390 = vmatpush1.msra.mxu0 0.0
    %391 = vmatprep.subr.mxu0 0.0
    %392 = vmatpush1.msra.mxu0 0.0
    %393 = vmatprep.subr.mxu0 0.0
    %394 = vmatpush1.msra.mxu0 0.0
    %395 = vmatprep.subr.mxu0 0.0
    %396 = vmatpush1.msra.mxu0 0.0
    %397 = vmatprep.subr.mxu0 0.0
    %398 = vmatpush1.msra.mxu0 0.0
    %399 = vmatprep.subr.mxu0 0.0
    %400 = vmatpush1.msra.mxu0 0.0
    %401 = vmatprep.subr.mxu0 0.0
    %402 = vmatpush1.msra.mxu0 0.0
    %403 = vmatprep.subr.mxu0 0.0
    %404 = vmatpush1.msra.mxu0 0.0
    %405 = vmatprep.subr.mxu0 0.0
    %406 = vmatpush1.msra.mxu0 0.0
    %407 = vmatprep.subr.mxu0 0.0
    %408 = vmatpush1.msra.mxu0 0.0
    %409 = vmatprep.subr.mxu0 0.0
    %410 = vmatpush1.msra.mxu0 0.0
    %411 = vmatprep.subr.mxu0 0.0
    %412 = vmatpush1.msra.mxu0 0.0
    %413 = vmatprep.subr.mxu0 0.0
    %414 = vmatpush1.msra.mxu0 0.0
    %415 = vmatprep.subr.mxu0 0.0
    %416 = vmatpush1.msra.mxu0 0.0
    %417 = vmatprep.subr.mxu0 0.0
    %418 = vmatpush1.msra.mxu0 0.0
    %419 = vmatprep.subr.mxu0 0.0
    %420 = vmatpush1.msra.mxu0 0.0
    %421 = vmatprep.subr.mxu0 0.0
    %422 = vmatpush1.msra.mxu0 0.0
    %423 = vmatprep.subr.mxu0 0.0
    %424 = vmatpush1.msra.mxu0 0.0
    %425 = vmatprep.subr.mxu0 0.0
    %426 = vmatpush1.msra.mxu0 0.0
    %427 = vmatprep.mubr.f32.mxu0 0.0
    %428 = vmatmul.mubr.f32.gmra.mrb[0].mxu0 %v361
    %v429 = vpop.f32.mrb[0].mxu0
    %v430 = vadd.f32 %v358, %v429
    %v431 = vpop.f32.mrb[0].mxu0
    %432 = vdwg.mxu0
    %v433 = vld [vmem:[%s27] sm:$0xff]
    %v434 = vld [vmem:[%s27 + $0x8] sm:$0xff]
    %v435 = vld [vmem:[%s27 + $0x10] sm:$0xff]
    %v436 = vld [vmem:[%s27 + $0x18] sm:$0xff]
    %v437 = vld [vmem:[%s29] sm:$0x1]
    %v439 = vlaneseq
    %v440 = vshrl.u32 %v439, 7
    %v441 = vsub.s32 0, %v440
    %v442 = vrot.slane %v437, %v441
    %v445 = vsel %vm187, %v173, 0
    %447 = vmatprep.subr.mxu0 0.0
    %448 = vmatpush1.msra.mxu0 %v433
    %449 = vmatprep.subr.mxu0 0.0
    %450 = vmatpush1.msra.mxu0 %v434
    %451 = vmatprep.subr.mxu0 0.0
    %452 = vmatpush1.msra.mxu0 %v435
    %453 = vmatprep.subr.mxu0 0.0
    %454 = vmatpush1.msra.mxu0 %v436
    %455 = vmatprep.subr.mxu0 0.0
    %456 = vmatpush1.msra.mxu0 0.0
    %457 = vmatprep.subr.mxu0 0.0
    %458 = vmatpush1.msra.mxu0 0.0
    %459 = vmatprep.subr.mxu0 0.0
    %460 = vmatpush1.msra.mxu0 0.0
    %461 = vmatprep.subr.mxu0 0.0
    %462 = vmatpush1.msra.mxu0 0.0
    %463 = vmatprep.subr.mxu0 0.0
    %464 = vmatpush1.msra.mxu0 0.0
    %465 = vmatprep.subr.mxu0 0.0
    %466 = vmatpush1.msra.mxu0 0.0
    %467 = vmatprep.subr.mxu0 0.0
    %468 = vmatpush1.msra.mxu0 0.0
    %469 = vmatprep.subr.mxu0 0.0
    %470 = vmatpush1.msra.mxu0 0.0
    %471 = vmatprep.subr.mxu0 0.0
    %472 = vmatpush1.msra.mxu0 0.0
    %473 = vmatprep.subr.mxu0 0.0
    %474 = vmatpush1.msra.mxu0 0.0
    %475 = vmatprep.subr.mxu0 0.0
    %476 = vmatpush1.msra.mxu0 0.0
    %477 = vmatprep.subr.mxu0 0.0
    %478 = vmatpush1.msra.mxu0 0.0
    %479 = vmatprep.subr.mxu0 0.0
    %480 = vmatpush1.msra.mxu0 0.0
    %481 = vmatprep.subr.mxu0 0.0
    %482 = vmatpush1.msra.mxu0 0.0
    %483 = vmatprep.subr.mxu0 0.0
    %484 = vmatpush1.msra.mxu0 0.0
    %485 = vmatprep.subr.mxu0 0.0
    %486 = vmatpush1.msra.mxu0 0.0
    %487 = vmatprep.subr.mxu0 0.0
    %488 = vmatpush1.msra.mxu0 0.0
    %489 = vmatprep.subr.mxu0 0.0
    %490 = vmatpush1.msra.mxu0 0.0
    %491 = vmatprep.subr.mxu0 0.0
    %492 = vmatpush1.msra.mxu0 0.0
    %493 = vmatprep.subr.mxu0 0.0
    %494 = vmatpush1.msra.mxu0 0.0
    %495 = vmatprep.subr.mxu0 0.0
    %496 = vmatpush1.msra.mxu0 0.0
    %497 = vmatprep.subr.mxu0 0.0
    %498 = vmatpush1.msra.mxu0 0.0
    %499 = vmatprep.subr.mxu0 0.0
    %500 = vmatpush1.msra.mxu0 0.0
    %501 = vmatprep.subr.mxu0 0.0
    %502 = vmatpush1.msra.mxu0 0.0
    %503 = vmatprep.subr.mxu0 0.0
    %504 = vmatpush1.msra.mxu0 0.0
    %505 = vmatprep.subr.mxu0 0.0
    %506 = vmatpush1.msra.mxu0 0.0
    %507 = vmatprep.subr.mxu0 0.0
    %508 = vmatpush1.msra.mxu0 0.0
    %509 = vmatprep.subr.mxu0 0.0
    %510 = vmatpush1.msra.mxu0 0.0
    %511 = vmatprep.mubr.f32.mxu0 0.0
    %512 = vmatmul.mubr.f32.gmra.mrb[0].mxu0 %v445
    %v513 = vpop.f32.mrb[0].mxu0
    %v514 = vadd.f32 %v442, %v513
    %v515 = vpop.f32.mrb[0].mxu0
    %516 = vdwg.mxu0
    %vm517 = vcmask 64512
    %v519 = vsel %vm517, %v346, 0
    %v522 = vsel %vm517, %v430, 0
    %524 = vmatprep.subr.mxu0 0.0
    %525 = vmatpush1.xpose.msra.mxu0 %v522
    %526 = vmatprep.subr.mxu0 0.0
    %527 = vmatpush1.xpose.msra.mxu0 0.0
    %528 = vmatprep.subr.mxu0 0.0
    %529 = vmatpush1.xpose.msra.mxu0 0.0
    %530 = vmatprep.subr.mxu0 0.0
    %531 = vmatpush1.xpose.msra.mxu0 0.0
    %532 = vmatprep.subr.mxu0 0.0
    %533 = vmatpush1.xpose.msra.mxu0 0.0
    %534 = vmatprep.subr.mxu0 0.0
    %535 = vmatpush1.xpose.msra.mxu0 0.0
    %536 = vmatprep.subr.mxu0 0.0
    %537 = vmatpush1.xpose.msra.mxu0 0.0
    %538 = vmatprep.subr.mxu0 0.0
    %539 = vmatpush1.xpose.msra.mxu0 0.0
    %540 = vmatprep.subr.mxu0 0.0
    %541 = vmatpush1.xpose.msra.mxu0 0.0
    %542 = vmatprep.subr.mxu0 0.0
    %543 = vmatpush1.xpose.msra.mxu0 0.0
    %544 = vmatprep.subr.mxu0 0.0
    %545 = vmatpush1.xpose.msra.mxu0 0.0
    %546 = vmatprep.subr.mxu0 0.0
    %547 = vmatpush1.xpose.msra.mxu0 0.0
    %548 = vmatprep.subr.mxu0 0.0
    %549 = vmatpush1.xpose.msra.mxu0 0.0
    %550 = vmatprep.subr.mxu0 0.0
    %551 = vmatpush1.xpose.msra.mxu0 0.0
    %552 = vmatprep.subr.mxu0 0.0
    %553 = vmatpush1.xpose.msra.mxu0 0.0
    %554 = vmatprep.subr.mxu0 0.0
    %555 = vmatpush1.xpose.msra.mxu0 0.0
    %556 = vmatprep.subr.mxu0 0.0
    %557 = vmatpush1.xpose.msra.mxu0 0.0
    %558 = vmatprep.subr.mxu0 0.0
    %559 = vmatpush1.xpose.msra.mxu0 0.0
    %560 = vmatprep.subr.mxu0 0.0
    %561 = vmatpush1.xpose.msra.mxu0 0.0
    %562 = vmatprep.subr.mxu0 0.0
    %563 = vmatpush1.xpose.msra.mxu0 0.0
    %564 = vmatprep.subr.mxu0 0.0
    %565 = vmatpush1.xpose.msra.mxu0 0.0
    %566 = vmatprep.subr.mxu0 0.0
    %567 = vmatpush1.xpose.msra.mxu0 0.0
    %568 = vmatprep.subr.mxu0 0.0
    %569 = vmatpush1.xpose.msra.mxu0 0.0
    %570 = vmatprep.subr.mxu0 0.0
    %571 = vmatpush1.xpose.msra.mxu0 0.0
    %572 = vmatprep.subr.mxu0 0.0
    %573 = vmatpush1.xpose.msra.mxu0 0.0
    %574 = vmatprep.subr.mxu0 0.0
    %575 = vmatpush1.xpose.msra.mxu0 0.0
    %576 = vmatprep.subr.mxu0 0.0
    %577 = vmatpush1.xpose.msra.mxu0 0.0
    %578 = vmatprep.subr.mxu0 0.0
    %579 = vmatpush1.xpose.msra.mxu0 0.0
    %580 = vmatprep.subr.mxu0 0.0
    %581 = vmatpush1.xpose.msra.mxu0 0.0
    %582 = vmatprep.subr.mxu0 0.0
    %583 = vmatpush1.xpose.msra.mxu0 0.0
    %584 = vmatprep.subr.mxu0 0.0
    %585 = vmatpush1.xpose.msra.mxu0 0.0
    %586 = vmatprep.subr.mxu0 0.0
    %587 = vmatpush1.xpose.msra.mxu0 0.0
    %588 = vmatprep.mubr.f32.mxu0 0.0
    %589 = vmatmul.mubr.f32.gmra.mrb[0].mxu0 %v519
    %v590 = vpop.f32.mrb[0].mxu0
    %v591 = vadd.f32 0.0, %v590
    %v592 = vpop.f32.mrb[0].mxu0
    %593 = vdwg.mxu0
    %v594 = vmul.f32 %v591, 0.35355338
    %vm595 = vcmp.eq.f32.partialorder %v174, 0.0
    %v596 = vsel %vm595, -1e+09, %v594
    %v597 = vsel %vm517, %v596, -inf
    %598 = vmax.xlane.f32.xlu0 %v597
    %v599 = vpop.xlane.xlu0 %598
    %v600 = vsub.f32 %v596, %v599
    %v601 = vmul.f32 %v600, 1.442695
    %v602 = vpow.pop %v601
    %v603 = vsel %vm517, %v602, 0.0
    %604 = vadd.xlane.f32.xlu0 %v603
    %v605 = vpop.xlane.xlu0 %604
    %v606 = vrcp.pop %v605
    %v607 = vmul.f32 %v602, %v606
    %v609 = vsel %vm517, %v607, 0
    %611 = vmatprep.subr.mxu0 0.0
    %612 = vmatpush1.msra.mxu0 %v514
    %613 = vmatprep.subr.mxu0 0.0
    %614 = vmatpush1.msra.mxu0 0.0
    %615 = vmatprep.subr.mxu0 0.0
    %616 = vmatpush1.msra.mxu0 0.0
    %617 = vmatprep.subr.mxu0 0.0
    %618 = vmatpush1.msra.mxu0 0.0
    %619 = vmatprep.subr.mxu0 0.0
    %620 = vmatpush1.msra.mxu0 0.0
    %621 = vmatprep.subr.mxu0 0.0
    %622 = vmatpush1.msra.mxu0 0.0
    %623 = vmatprep.subr.mxu0 0.0
    %624 = vmatpush1.msra.mxu0 0.0
    %625 = vmatprep.subr.mxu0 0.0
    %626 = vmatpush1.msra.mxu0 0.0
    %627 = vmatprep.subr.mxu0 0.0
    %628 = vmatpush1.msra.mxu0 0.0
    %629 = vmatprep.subr.mxu0 0.0
    %630 = vmatpush1.msra.mxu0 0.0
    %631 = vmatprep.subr.mxu0 0.0
    %632 = vmatpush1.msra.mxu0 0.0
    %633 = vmatprep.subr.mxu0 0.0
    %634 = vmatpush1.msra.mxu0 0.0
    %635 = vmatprep.subr.mxu0 0.0
    %636 = vmatpush1.msra.mxu0 0.0
    %637 = vmatprep.subr.mxu0 0.0
    %638 = vmatpush1.msra.mxu0 0.0
    %639 = vmatprep.subr.mxu0 0.0
    %640 = vmatpush1.msra.mxu0 0.0
    %641 = vmatprep.subr.mxu0 0.0
    %642 = vmatpush1.msra.mxu0 0.0
    %643 = vmatprep.subr.mxu0 0.0
    %644 = vmatpush1.msra.mxu0 0.0
    %645 = vmatprep.subr.mxu0 0.0
    %646 = vmatpush1.msra.mxu0 0.0
    %647 = vmatprep.subr.mxu0 0.0
    %648 = vmatpush1.msra.mxu0 0.0
    %649 = vmatprep.subr.mxu0 0.0
    %650 = vmatpush1.msra.mxu0 0.0
    %651 = vmatprep.subr.mxu0 0.0
    %652 = vmatpush1.msra.mxu0 0.0
    %653 = vmatprep.subr.mxu0 0.0
    %654 = vmatpush1.msra.mxu0 0.0
    %655 = vmatprep.subr.mxu0 0.0
    %656 = vmatpush1.msra.mxu0 0.0
    %657 = vmatprep.subr.mxu0 0.0
    %658 = vmatpush1.msra.mxu0 0.0
    %659 = vmatprep.subr.mxu0 0.0
    %660 = vmatpush1.msra.mxu0 0.0
    %661 = vmatprep.subr.mxu0 0.0
    %662 = vmatpush1.msra.mxu0 0.0
    %663 = vmatprep.subr.mxu0 0.0
    %664 = vmatpush1.msra.mxu0 0.0
    %665 = vmatprep.subr.mxu0 0.0
    %666 = vmatpush1.msra.mxu0 0.0
    %667 = vmatprep.subr.mxu0 0.0
    %668 = vmatpush1.msra.mxu0 0.0
    %669 = vmatprep.subr.mxu0 0.0
    %670 = vmatpush1.msra.mxu0 0.0
    %671 = vmatprep.subr.mxu0 0.0
    %672 = vmatpush1.msra.mxu0 0.0
    %673 = vmatprep.subr.mxu0 0.0
    %674 = vmatpush1.msra.mxu0 0.0
    %675 = vmatprep.mubr.f32.mxu0 0.0
    %676 = vmatmul.mubr.f32.gmra.mrb[0].mxu0 %v609
    %v677 = vpop.f32.mrb[0].mxu0
    %v678 = vadd.f32 0.0, %v677
    %v679 = vpop.f32.mrb[0].mxu0
    %680 = vdwg.mxu0
    %v681 = vld [vmem:[%s31] sm:$0xff]
    %s682 = scalar_lea.vmem %s19, 32
    %v683 = vld [vmem:[%s682] sm:$0xff]
    %v684 = vld [vmem:[%s682 + $0x8] sm:$0xff]
    %v685 = vld [vmem:[%s682 + $0x10] sm:$0xff]
    %v686 = vld [vmem:[%s682 + $0x18] sm:$0xff]
    %s687 = scalar_lea.vmem %s21, 1
    %v688 = vld [vmem:[%s687] sm:$0x1]
    %v690 = vlaneseq
    %v691 = vshrl.u32 %v690, 7
    %v692 = vsub.s32 0, %v691
    %v693 = vrot.slane %v688, %v692
    %695 = vmatprep.subr.mxu0 0.0
    %696 = vmatpush1.msra.mxu0 %v683
    %697 = vmatprep.subr.mxu0 0.0
    %698 = vmatpush1.msra.mxu0 %v684
    %699 = vmatprep.subr.mxu0 0.0
    %700 = vmatpush1.msra.mxu0 %v685
    %701 = vmatprep.subr.mxu0 0.0
    %702 = vmatpush1.msra.mxu0 %v686
    %703 = vmatprep.subr.mxu0 0.0
    %704 = vmatpush1.msra.mxu0 0.0
    %705 = vmatprep.subr.mxu0 0.0
    %706 = vmatpush1.msra.mxu0 0.0
    %707 = vmatprep.subr.mxu0 0.0
    %708 = vmatpush1.msra.mxu0 0.0
    %709 = vmatprep.subr.mxu0 0.0
    %710 = vmatpush1.msra.mxu0 0.0
    %711 = vmatprep.subr.mxu0 0.0
    %712 = vmatpush1.msra.mxu0 0.0
    %713 = vmatprep.subr.mxu0 0.0
    %714 = vmatpush1.msra.mxu0 0.0
    %715 = vmatprep.subr.mxu0 0.0
    %716 = vmatpush1.msra.mxu0 0.0
    %717 = vmatprep.subr.mxu0 0.0
    %718 = vmatpush1.msra.mxu0 0.0
    %719 = vmatprep.subr.mxu0 0.0
    %720 = vmatpush1.msra.mxu0 0.0
    %721 = vmatprep.subr.mxu0 0.0
    %722 = vmatpush1.msra.mxu0 0.0
    %723 = vmatprep.subr.mxu0 0.0
    %724 = vmatpush1.msra.mxu0 0.0
    %725 = vmatprep.subr.mxu0 0.0
    %726 = vmatpush1.msra.mxu0 0.0
    %727 = vmatprep.subr.mxu0 0.0
    %728 = vmatpush1.msra.mxu0 0.0
    %729 = vmatprep.subr.mxu0 0.0
    %730 = vmatpush1.msra.mxu0 0.0
    %731 = vmatprep.subr.mxu0 0.0
    %732 = vmatpush1.msra.mxu0 0.0
    %733 = vmatprep.subr.mxu0 0.0
    %734 = vmatpush1.msra.mxu0 0.0
    %735 = vmatprep.subr.mxu0 0.0
    %736 = vmatpush1.msra.mxu0 0.0
    %737 = vmatprep.subr.mxu0 0.0
    %738 = vmatpush1.msra.mxu0 0.0
    %739 = vmatprep.subr.mxu0 0.0
    %740 = vmatpush1.msra.mxu0 0.0
    %741 = vmatprep.subr.mxu0 0.0
    %742 = vmatpush1.msra.mxu0 0.0
    %743 = vmatprep.subr.mxu0 0.0
    %744 = vmatpush1.msra.mxu0 0.0
    %745 = vmatprep.subr.mxu0 0.0
    %746 = vmatpush1.msra.mxu0 0.0
    %747 = vmatprep.subr.mxu0 0.0
    %748 = vmatpush1.msra.mxu0 0.0
    %749 = vmatprep.subr.mxu0 0.0
    %750 = vmatpush1.msra.mxu0 0.0
    %751 = vmatprep.subr.mxu0 0.0
    %752 = vmatpush1.msra.mxu0 0.0
    %753 = vmatprep.subr.mxu0 0.0
    %754 = vmatpush1.msra.mxu0 0.0
    %755 = vmatprep.subr.mxu0 0.0
    %756 = vmatpush1.msra.mxu0 0.0
    %757 = vmatprep.subr.mxu0 0.0
    %758 = vmatpush1.msra.mxu0 0.0
    %759 = vmatprep.mubr.f32.mxu0 0.0
    %760 = vmatmul.mubr.f32.gmra.mrb[0].mxu0 %v277
    %v761 = vpop.f32.mrb[0].mxu0
    %v762 = vadd.f32 %v693, %v761
    %v763 = vpop.f32.mrb[0].mxu0
    %764 = vdwg.mxu0
    %s765 = scalar_lea.vmem %s23, 32
    %v766 = vld [vmem:[%s765] sm:$0xff]
    %v767 = vld [vmem:[%s765 + $0x8] sm:$0xff]
    %v768 = vld [vmem:[%s765 + $0x10] sm:$0xff]
    %v769 = vld [vmem:[%s765 + $0x18] sm:$0xff]
    %s770 = scalar_lea.vmem %s25, 1
    %v771 = vld [vmem:[%s770] sm:$0x1]
    %v773 = vlaneseq
    %v774 = vshrl.u32 %v773, 7
    %v775 = vsub.s32 0, %v774
    %v776 = vrot.slane %v771, %v775
    %778 = vmatprep.subr.mxu0 0.0
    %779 = vmatpush1.msra.mxu0 %v766
    %780 = vmatprep.subr.mxu0 0.0
    %781 = vmatpush1.msra.mxu0 %v767
    %782 = vmatprep.subr.mxu0 0.0
    %783 = vmatpush1.msra.mxu0 %v768
    %784 = vmatprep.subr.mxu0 0.0
    %785 = vmatpush1.msra.mxu0 %v769
    %786 = vmatprep.subr.mxu0 0.0
    %787 = vmatpush1.msra.mxu0 0.0
    %788 = vmatprep.subr.mxu0 0.0
    %789 = vmatpush1.msra.mxu0 0.0
    %790 = vmatprep.subr.mxu0 0.0
    %791 = vmatpush1.msra.mxu0 0.0
    %792 = vmatprep.subr.mxu0 0.0
    %793 = vmatpush1.msra.mxu0 0.0
    %794 = vmatprep.subr.mxu0 0.0
    %795 = vmatpush1.msra.mxu0 0.0
    %796 = vmatprep.subr.mxu0 0.0
    %797 = vmatpush1.msra.mxu0 0.0
    %798 = vmatprep.subr.mxu0 0.0
    %799 = vmatpush1.msra.mxu0 0.0
    %800 = vmatprep.subr.mxu0 0.0
    %801 = vmatpush1.msra.mxu0 0.0
    %802 = vmatprep.subr.mxu0 0.0
    %803 = vmatpush1.msra.mxu0 0.0
    %804 = vmatprep.subr.mxu0 0.0
    %805 = vmatpush1.msra.mxu0 0.0
    %806 = vmatprep.subr.mxu0 0.0
    %807 = vmatpush1.msra.mxu0 0.0
    %808 = vmatprep.subr.mxu0 0.0
    %809 = vmatpush1.msra.mxu0 0.0
    %810 = vmatprep.subr.mxu0 0.0
    %811 = vmatpush1.msra.mxu0 0.0
    %812 = vmatprep.subr.mxu0 0.0
    %813 = vmatpush1.msra.mxu0 0.0
    %814 = vmatprep.subr.mxu0 0.0
    %815 = vmatpush1.msra.mxu0 0.0
    %816 = vmatprep.subr.mxu0 0.0
    %817 = vmatpush1.msra.mxu0 0.0
    %818 = vmatprep.subr.mxu0 0.0
    %819 = vmatpush1.msra.mxu0 0.0
    %820 = vmatprep.subr.mxu0 0.0
    %821 = vmatpush1.msra.mxu0 0.0
    %822 = vmatprep.subr.mxu0 0.0
    %823 = vmatpush1.msra.mxu0 0.0
    %824 = vmatprep.subr.mxu0 0.0
    %825 = vmatpush1.msra.mxu0 0.0
    %826 = vmatprep.subr.mxu0 0.0
    %827 = vmatpush1.msra.mxu0 0.0
    %828 = vmatprep.subr.mxu0 0.0
    %829 = vmatpush1.msra.mxu0 0.0
    %830 = vmatprep.subr.mxu0 0.0
    %831 = vmatpush1.msra.mxu0 0.0
    %832 = vmatprep.subr.mxu0 0.0
    %833 = vmatpush1.msra.mxu0 0.0
    %834 = vmatprep.subr.mxu0 0.0
    %835 = vmatpush1.msra.mxu0 0.0
    %836 = vmatprep.subr.mxu0 0.0
    %837 = vmatpush1.msra.mxu0 0.0
    %838 = vmatprep.subr.mxu0 0.0
    %839 = vmatpush1.msra.mxu0 0.0
    %840 = vmatprep.subr.mxu0 0.0
    %841 = vmatpush1.msra.mxu0 0.0
    %842 = vmatprep.mubr.f32.mxu0 0.0
    %843 = vmatmul.mubr.f32.gmra.mrb[0].mxu0 %v361
    %v844 = vpop.f32.mrb[0].mxu0
    %v845 = vadd.f32 %v776, %v844
    %v846 = vpop.f32.mrb[0].mxu0
    %847 = vdwg.mxu0
    %s848 = scalar_lea.vmem %s27, 32
    %v849 = vld [vmem:[%s848] sm:$0xff]
    %v850 = vld [vmem:[%s848 + $0x8] sm:$0xff]
    %v851 = vld [vmem:[%s848 + $0x10] sm:$0xff]
    %v852 = vld [vmem:[%s848 + $0x18] sm:$0xff]
    %s853 = scalar_lea.vmem %s29, 1
    %v854 = vld [vmem:[%s853] sm:$0x1]
    %v856 = vlaneseq
    %v857 = vshrl.u32 %v856, 7
    %v858 = vsub.s32 0, %v857
    %v859 = vrot.slane %v854, %v858
    %861 = vmatprep.subr.mxu0 0.0
    %862 = vmatpush1.msra.mxu0 %v849
    %863 = vmatprep.subr.mxu0 0.0
    %864 = vmatpush1.msra.mxu0 %v850
    %865 = vmatprep.subr.mxu0 0.0
    %866 = vmatpush1.msra.mxu0 %v851
    %867 = vmatprep.subr.mxu0 0.0
    %868 = vmatpush1.msra.mxu0 %v852
    %869 = vmatprep.subr.mxu0 0.0
    %870 = vmatpush1.msra.mxu0 0.0
    %871 = vmatprep.subr.mxu0 0.0
    %872 = vmatpush1.msra.mxu0 0.0
    %873 = vmatprep.subr.mxu0 0.0
    %874 = vmatpush1.msra.mxu0 0.0
    %875 = vmatprep.subr.mxu0 0.0
    %876 = vmatpush1.msra.mxu0 0.0
    %877 = vmatprep.subr.mxu0 0.0
    %878 = vmatpush1.msra.mxu0 0.0
    %879 = vmatprep.subr.mxu0 0.0
    %880 = vmatpush1.msra.mxu0 0.0
    %881 = vmatprep.subr.mxu0 0.0
    %882 = vmatpush1.msra.mxu0 0.0
    %883 = vmatprep.subr.mxu0 0.0
    %884 = vmatpush1.msra.mxu0 0.0
    %885 = vmatprep.subr.mxu0 0.0
    %886 = vmatpush1.msra.mxu0 0.0
    %887 = vmatprep.subr.mxu0 0.0
    %888 = vmatpush1.msra.mxu0 0.0
    %889 = vmatprep.subr.mxu0 0.0
    %890 = vmatpush1.msra.mxu0 0.0
    %891 = vmatprep.subr.mxu0 0.0
    %892 = vmatpush1.msra.mxu0 0.0
    %893 = vmatprep.subr.mxu0 0.0
    %894 = vmatpush1.msra.mxu0 0.0
    %895 = vmatprep.subr.mxu0 0.0
    %896 = vmatpush1.msra.mxu0 0.0
    %897 = vmatprep.subr.mxu0 0.0
    %898 = vmatpush1.msra.mxu0 0.0
    %899 = vmatprep.subr.mxu0 0.0
    %900 = vmatpush1.msra.mxu0 0.0
    %901 = vmatprep.subr.mxu0 0.0
    %902 = vmatpush1.msra.mxu0 0.0
    %903 = vmatprep.subr.mxu0 0.0
    %904 = vmatpush1.msra.mxu0 0.0
    %905 = vmatprep.subr.mxu0 0.0
    %906 = vmatpush1.msra.mxu0 0.0
    %907 = vmatprep.subr.mxu0 0.0
    %908 = vmatpush1.msra.mxu0 0.0
    %909 = vmatprep.subr.mxu0 0.0
    %910 = vmatpush1.msra.mxu0 0.0
    %911 = vmatprep.subr.mxu0 0.0
    %912 = vmatpush1.msra.mxu0 0.0
    %913 = vmatprep.subr.mxu0 0.0
    %914 = vmatpush1.msra.mxu0 0.0
    %915 = vmatprep.subr.mxu0 0.0
    %916 = vmatpush1.msra.mxu0 0.0
    %917 = vmatprep.subr.mxu0 0.0
    %918 = vmatpush1.msra.mxu0 0.0
    %919 = vmatprep.subr.mxu0 0.0
    %920 = vmatpush1.msra.mxu0 0.0
    %921 = vmatprep.subr.mxu0 0.0
    %922 = vmatpush1.msra.mxu0 0.0
    %923 = vmatprep.subr.mxu0 0.0
    %924 = vmatpush1.msra.mxu0 0.0
    %925 = vmatprep.mubr.f32.mxu0 0.0
    %926 = vmatmul.mubr.f32.gmra.mrb[0].mxu0 %v445
    %v927 = vpop.f32.mrb[0].mxu0
    %v928 = vadd.f32 %v859, %v927
    %v929 = vpop.f32.mrb[0].mxu0
    %930 = vdwg.mxu0
    %v932 = vsel %vm517, %v762, 0
    %v935 = vsel %vm517, %v845, 0
    %937 = vmatprep.subr.mxu0 0.0
    %938 = vmatpush1.xpose.msra.mxu0 %v935
    %939 = vmatprep.subr.mxu0 0.0
    %940 = vmatpush1.xpose.msra.mxu0 0.0
    %941 = vmatprep.subr.mxu0 0.0
    %942 = vmatpush1.xpose.msra.mxu0 0.0
    %943 = vmatprep.subr.mxu0 0.0
    %944 = vmatpush1.xpose.msra.mxu0 0.0
    %945 = vmatprep.subr.mxu0 0.0
    %946 = vmatpush1.xpose.msra.mxu0 0.0
    %947 = vmatprep.subr.mxu0 0.0
    %948 = vmatpush1.xpose.msra.mxu0 0.0
    %949 = vmatprep.subr.mxu0 0.0
    %950 = vmatpush1.xpose.msra.mxu0 0.0
    %951 = vmatprep.subr.mxu0 0.0
    %952 = vmatpush1.xpose.msra.mxu0 0.0
    %953 = vmatprep.subr.mxu0 0.0
    %954 = vmatpush1.xpose.msra.mxu0 0.0
    %955 = vmatprep.subr.mxu0 0.0
    %956 = vmatpush1.xpose.msra.mxu0 0.0
    %957 = vmatprep.subr.mxu0 0.0
    %958 = vmatpush1.xpose.msra.mxu0 0.0
    %959 = vmatprep.subr.mxu0 0.0
    %960 = vmatpush1.xpose.msra.mxu0 0.0
    %961 = vmatprep.subr.mxu0 0.0
    %962 = vmatpush1.xpose.msra.mxu0 0.0
    %963 = vmatprep.subr.mxu0 0.0
    %964 = vmatpush1.xpose.msra.mxu0 0.0
    %965 = vmatprep.subr.mxu0 0.0
    %966 = vmatpush1.xpose.msra.mxu0 0.0
    %967 = vmatprep.subr.mxu0 0.0
    %968 = vmatpush1.xpose.msra.mxu0 0.0
    %969 = vmatprep.subr.mxu0 0.0
    %970 = vmatpush1.xpose.msra.mxu0 0.0
    %971 = vmatprep.subr.mxu0 0.0
    %972 = vmatpush1.xpose.msra.mxu0 0.0
    %973 = vmatprep.subr.mxu0 0.0
    %974 = vmatpush1.xpose.msra.mxu0 0.0
    %975 = vmatprep.subr.mxu0 0.0
    %976 = vmatpush1.xpose.msra.mxu0 0.0
    %977 = vmatprep.subr.mxu0 0.0
    %978 = vmatpush1.xpose.msra.mxu0 0.0
    %979 = vmatprep.subr.mxu0 0.0
    %980 = vmatpush1.xpose.msra.mxu0 0.0
    %981 = vmatprep.subr.mxu0 0.0
    %982 = vmatpush1.xpose.msra.mxu0 0.0
    %983 = vmatprep.subr.mxu0 0.0
    %984 = vmatpush1.xpose.msra.mxu0 0.0
    %985 = vmatprep.subr.mxu0 0.0
    %986 = vmatpush1.xpose.msra.mxu0 0.0
    %987 = vmatprep.subr.mxu0 0.0
    %988 = vmatpush1.xpose.msra.mxu0 0.0
    %989 = vmatprep.subr.mxu0 0.0
    %990 = vmatpush1.xpose.msra.mxu0 0.0
    %991 = vmatprep.subr.mxu0 0.0
    %992 = vmatpush1.xpose.msra.mxu0 0.0
    %993 = vmatprep.subr.mxu0 0.0
    %994 = vmatpush1.xpose.msra.mxu0 0.0
    %995 = vmatprep.subr.mxu0 0.0
    %996 = vmatpush1.xpose.msra.mxu0 0.0
    %997 = vmatprep.subr.mxu0 0.0
    %998 = vmatpush1.xpose.msra.mxu0 0.0
    %999 = vmatprep.subr.mxu0 0.0
    %1000 = vmatpush1.xpose.msra.mxu0 0.0
    %1001 = vmatprep.mubr.f32.mxu0 0.0
    %1002 = vmatmul.mubr.f32.gmra.mrb[0].mxu0 %v932
    %v1003 = vpop.f32.mrb[0].mxu0
    %v1004 = vadd.f32 0.0, %v1003
    %v1005 = vpop.f32.mrb[0].mxu0
    %1006 = vdwg.mxu0
    %v1007 = vmul.f32 %v1004, 0.35355338
    %v1008 = vsel %vm595, -1e+09, %v1007
    %v1009 = vsel %vm517, %v1008, -inf
    %1010 = vmax.xlane.f32.xlu0 %v1009
    %v1011 = vpop.xlane.xlu0 %1010
    %v1012 = vsub.f32 %v1008, %v1011
    %v1013 = vmul.f32 %v1012, 1.442695
    %v1014 = vpow.pop %v1013
    %v1015 = vsel %vm517, %v1014, 0.0
    %1016 = vadd.xlane.f32.xlu0 %v1015
    %v1017 = vpop.xlane.xlu0 %1016
    %v1018 = vrcp.pop %v1017
    %v1019 = vmul.f32 %v1014, %v1018
    %v1021 = vsel %vm517, %v1019, 0
    %1023 = vmatprep.subr.mxu0 0.0
    %1024 = vmatpush1.msra.mxu0 %v928
    %1025 = vmatprep.subr.mxu0 0.0
    %1026 = vmatpush1.msra.mxu0 0.0
    %1027 = vmatprep.subr.mxu0 0.0
    %1028 = vmatpush1.msra.mxu0 0.0
    %1029 = vmatprep.subr.mxu0 0.0
    %1030 = vmatpush1.msra.mxu0 0.0
    %1031 = vmatprep.subr.mxu0 0.0
    %1032 = vmatpush1.msra.mxu0 0.0
    %1033 = vmatprep.subr.mxu0 0.0
    %1034 = vmatpush1.msra.mxu0 0.0
    %1035 = vmatprep.subr.mxu0 0.0
    %1036 = vmatpush1.msra.mxu0 0.0
    %1037 = vmatprep.subr.mxu0 0.0
    %1038 = vmatpush1.msra.mxu0 0.0
    %1039 = vmatprep.subr.mxu0 0.0
    %1040 = vmatpush1.msra.mxu0 0.0
    %1041 = vmatprep.subr.mxu0 0.0
    %1042 = vmatpush1.msra.mxu0 0.0
    %1043 = vmatprep.subr.mxu0 0.0
    %1044 = vmatpush1.msra.mxu0 0.0
    %1045 = vmatprep.subr.mxu0 0.0
    %1046 = vmatpush1.msra.mxu0 0.0
    %1047 = vmatprep.subr.mxu0 0.0
    %1048 = vmatpush1.msra.mxu0 0.0
    %1049 = vmatprep.subr.mxu0 0.0
    %1050 = vmatpush1.msra.mxu0 0.0
    %1051 = vmatprep.subr.mxu0 0.0
    %1052 = vmatpush1.msra.mxu0 0.0
    %1053 = vmatprep.subr.mxu0 0.0
    %1054 = vmatpush1.msra.mxu0 0.0
    %1055 = vmatprep.subr.mxu0 0.0
    %1056 = vmatpush1.msra.mxu0 0.0
    %1057 = vmatprep.subr.mxu0 0.0
    %1058 = vmatpush1.msra.mxu0 0.0
    %1059 = vmatprep.subr.mxu0 0.0
    %1060 = vmatpush1.msra.mxu0 0.0
    %1061 = vmatprep.subr.mxu0 0.0
    %1062 = vmatpush1.msra.mxu0 0.0
    %1063 = vmatprep.subr.mxu0 0.0
    %1064 = vmatpush1.msra.mxu0 0.0
    %1065 = vmatprep.subr.mxu0 0.0
    %1066 = vmatpush1.msra.mxu0 0.0
    %1067 = vmatprep.subr.mxu0 0.0
    %1068 = vmatpush1.msra.mxu0 0.0
    %1069 = vmatprep.subr.mxu0 0.0
    %1070 = vmatpush1.msra.mxu0 0.0
    %1071 = vmatprep.subr.mxu0 0.0
    %1072 = vmatpush1.msra.mxu0 0.0
    %1073 = vmatprep.subr.mxu0 0.0
    %1074 = vmatpush1.msra.mxu0 0.0
    %1075 = vmatprep.subr.mxu0 0.0
    %1076 = vmatpush1.msra.mxu0 0.0
    %1077 = vmatprep.subr.mxu0 0.0
    %1078 = vmatpush1.msra.mxu0 0.0
    %1079 = vmatprep.subr.mxu0 0.0
    %1080 = vmatpush1.msra.mxu0 0.0
    %1081 = vmatprep.subr.mxu0 0.0
    %1082 = vmatpush1.msra.mxu0 0.0
    %1083 = vmatprep.subr.mxu0 0.0
    %1084 = vmatpush1.msra.mxu0 0.0
    %1085 = vmatprep.subr.mxu0 0.0
    %1086 = vmatpush1.msra.mxu0 0.0
    %1087 = vmatprep.mubr.f32.mxu0 0.0
    %1088 = vmatmul.mubr.f32.gmra.mrb[0].mxu0 %v1021
    %v1089 = vpop.f32.mrb[0].mxu0
    %v1090 = vadd.f32 0.0, %v1089
    %v1091 = vpop.f32.mrb[0].mxu0
    %1092 = vdwg.mxu0
    %s1093 = scalar_lea.vmem %s31, 8
    %v1094 = vld [vmem:[%s1093] sm:$0xff]
    %v1096 = vsel %vm517, %v1090, 0
    %1098 = vmatprep.subr.mxu0 0.0
    %1099 = vmatpush1.msra.mxu0 %v1094
    %1100 = vmatprep.subr.mxu0 0.0
    %1101 = vmatpush1.msra.mxu0 0.0
    %1102 = vmatprep.subr.mxu0 0.0
    %1103 = vmatpush1.msra.mxu0 0.0
    %1104 = vmatprep.subr.mxu0 0.0
    %1105 = vmatpush1.msra.mxu0 0.0
    %1106 = vmatprep.subr.mxu0 0.0
    %1107 = vmatpush1.msra.mxu0 0.0
    %1108 = vmatprep.subr.mxu0 0.0
    %1109 = vmatpush1.msra.mxu0 0.0
    %1110 = vmatprep.subr.mxu0 0.0
    %1111 = vmatpush1.msra.mxu0 0.0
    %1112 = vmatprep.subr.mxu0 0.0
    %1113 = vmatpush1.msra.mxu0 0.0
    %1114 = vmatprep.subr.mxu0 0.0
    %1115 = vmatpush1.msra.mxu0 0.0
    %1116 = vmatprep.subr.mxu0 0.0
    %1117 = vmatpush1.msra.mxu0 0.0
    %1118 = vmatprep.subr.mxu0 0.0
    %1119 = vmatpush1.msra.mxu0 0.0
    %1120 = vmatprep.subr.mxu0 0.0
    %1121 = vmatpush1.msra.mxu0 0.0
    %1122 = vmatprep.subr.mxu0 0.0
    %1123 = vmatpush1.msra.mxu0 0.0
    %1124 = vmatprep.subr.mxu0 0.0
    %1125 = vmatpush1.msra.mxu0 0.0
    %1126 = vmatprep.subr.mxu0 0.0
    %1127 = vmatpush1.msra.mxu0 0.0
    %1128 = vmatprep.subr.mxu0 0.0
    %1129 = vmatpush1.msra.mxu0 0.0
    %1130 = vmatprep.subr.mxu0 0.0
    %1131 = vmatpush1.msra.mxu0 0.0
    %1132 = vmatprep.subr.mxu0 0.0
    %1133 = vmatpush1.msra.mxu0 0.0
    %1134 = vmatprep.subr.mxu0 0.0
    %1135 = vmatpush1.msra.mxu0 0.0
    %1136 = vmatprep.subr.mxu0 0.0
    %1137 = vmatpush1.msra.mxu0 0.0
    %1138 = vmatprep.subr.mxu0 0.0
    %1139 = vmatpush1.msra.mxu0 0.0
    %1140 = vmatprep.subr.mxu0 0.0
    %1141 = vmatpush1.msra.mxu0 0.0
    %1142 = vmatprep.subr.mxu0 0.0
    %1143 = vmatpush1.msra.mxu0 0.0
    %1144 = vmatprep.subr.mxu0 0.0
    %1145 = vmatpush1.msra.mxu0 0.0
    %1146 = vmatprep.subr.mxu0 0.0
    %1147 = vmatpush1.msra.mxu0 0.0
    %1148 = vmatprep.subr.mxu0 0.0
    %1149 = vmatpush1.msra.mxu0 0.0
    %1150 = vmatprep.subr.mxu0 0.0
    %1151 = vmatpush1.msra.mxu0 0.0
    %1152 = vmatprep.subr.mxu0 0.0
    %1153 = vmatpush1.msra.mxu0 0.0
    %1154 = vmatprep.subr.mxu0 0.0
    %1155 = vmatpush1.msra.mxu0 0.0
    %1156 = vmatprep.subr.mxu0 0.0
    %1157 = vmatpush1.msra.mxu0 0.0
    %1158 = vmatprep.subr.mxu0 0.0
    %1159 = vmatpush1.msra.mxu0 0.0
    %1160 = vmatprep.subr.mxu0 0.0
    %1161 = vmatpush1.msra.mxu0 0.0
    %1162 = vmatprep.mubr.f32.mxu0 0.0
    %1163 = vmatmul.mubr.f32.gmra.mrb[0].mxu0 %v1096
    %v1164 = vpop.f32.mrb[0].mxu0
    %v1165 = vadd.f32 0.0, %v1164
    %v1166 = vpop.f32.mrb[0].mxu0
    %1167 = vdwg.mxu0
    %v1169 = vsel %vm517, %v678, 0
    %1171 = vmatprep.subr.mxu0 0.0
    %1172 = vmatpush1.msra.mxu0 %v681
    %1173 = vmatprep.subr.mxu0 0.0
    %1174 = vmatpush1.msra.mxu0 0.0
    %1175 = vmatprep.subr.mxu0 0.0
    %1176 = vmatpush1.msra.mxu0 0.0
    %1177 = vmatprep.subr.mxu0 0.0
    %1178 = vmatpush1.msra.mxu0 0.0
    %1179 = vmatprep.subr.mxu0 0.0
    %1180 = vmatpush1.msra.mxu0 0.0
    %1181 = vmatprep.subr.mxu0 0.0
    %1182 = vmatpush1.msra.mxu0 0.0
    %1183 = vmatprep.subr.mxu0 0.0
    %1184 = vmatpush1.msra.mxu0 0.0
    %1185 = vmatprep.subr.mxu0 0.0
    %1186 = vmatpush1.msra.mxu0 0.0
    %1187 = vmatprep.subr.mxu0 0.0
    %1188 = vmatpush1.msra.mxu0 0.0
    %1189 = vmatprep.subr.mxu0 0.0
    %1190 = vmatpush1.msra.mxu0 0.0
    %1191 = vmatprep.subr.mxu0 0.0
    %1192 = vmatpush1.msra.mxu0 0.0
    %1193 = vmatprep.subr.mxu0 0.0
    %1194 = vmatpush1.msra.mxu0 0.0
    %1195 = vmatprep.subr.mxu0 0.0
    %1196 = vmatpush1.msra.mxu0 0.0
    %1197 = vmatprep.subr.mxu0 0.0
    %1198 = vmatpush1.msra.mxu0 0.0
    %1199 = vmatprep.subr.mxu0 0.0
    %1200 = vmatpush1.msra.mxu0 0.0
    %1201 = vmatprep.subr.mxu0 0.0
    %1202 = vmatpush1.msra.mxu0 0.0
    %1203 = vmatprep.subr.mxu0 0.0
    %1204 = vmatpush1.msra.mxu0 0.0
    %1205 = vmatprep.subr.mxu0 0.0
    %1206 = vmatpush1.msra.mxu0 0.0
    %1207 = vmatprep.subr.mxu0 0.0
    %1208 = vmatpush1.msra.mxu0 0.0
    %1209 = vmatprep.subr.mxu0 0.0
    %1210 = vmatpush1.msra.mxu0 0.0
    %1211 = vmatprep.subr.mxu0 0.0
    %1212 = vmatpush1.msra.mxu0 0.0
    %1213 = vmatprep.subr.mxu0 0.0
    %1214 = vmatpush1.msra.mxu0 0.0
    %1215 = vmatprep.subr.mxu0 0.0
    %1216 = vmatpush1.msra.mxu0 0.0
    %1217 = vmatprep.subr.mxu0 0.0
    %1218 = vmatpush1.msra.mxu0 0.0
    %1219 = vmatprep.subr.mxu0 0.0
    %1220 = vmatpush1.msra.mxu0 0.0
    %1221 = vmatprep.subr.mxu0 0.0
    %1222 = vmatpush1.msra.mxu0 0.0
    %1223 = vmatprep.subr.mxu0 0.0
    %1224 = vmatpush1.msra.mxu0 0.0
    %1225 = vmatprep.subr.mxu0 0.0
    %1226 = vmatpush1.msra.mxu0 0.0
    %1227 = vmatprep.subr.mxu0 0.0
    %1228 = vmatpush1.msra.mxu0 0.0
    %1229 = vmatprep.subr.mxu0 0.0
    %1230 = vmatpush1.msra.mxu0 0.0
    %1231 = vmatprep.subr.mxu0 0.0
    %1232 = vmatpush1.msra.mxu0 0.0
    %1233 = vmatprep.subr.mxu0 0.0
    %1234 = vmatpush1.msra.mxu0 0.0
    %1235 = vmatprep.mubr.f32.mxu0 0.0
    %1236 = vmatmul.mubr.f32.gmra.mrb[0].mxu0 %v1169
    %v1237 = vpop.f32.mrb[0].mxu0
    %v1238 = vadd.f32 %v1165, %v1237
    %v1239 = vpop.f32.mrb[0].mxu0
    %1240 = vdwg.mxu0
    %s1241 = scalar_lea.vmem %s19, 64
    %v1242 = vld [vmem:[%s1241] sm:$0xff]
    %v1243 = vld [vmem:[%s1241 + $0x8] sm:$0xff]
    %v1244 = vld [vmem:[%s1241 + $0x10] sm:$0xff]
    %v1245 = vld [vmem:[%s1241 + $0x18] sm:$0xff]
    %s1246 = scalar_lea.vmem %s21, 2
    %v1247 = vld [vmem:[%s1246] sm:$0x1]
    %v1249 = vlaneseq
    %v1250 = vshrl.u32 %v1249, 7
    %v1251 = vsub.s32 0, %v1250
    %v1252 = vrot.slane %v1247, %v1251
    %1254 = vmatprep.subr.mxu0 0.0
    %1255 = vmatpush1.msra.mxu0 %v1242
    %1256 = vmatprep.subr.mxu0 0.0
    %1257 = vmatpush1.msra.mxu0 %v1243
    %1258 = vmatprep.subr.mxu0 0.0
    %1259 = vmatpush1.msra.mxu0 %v1244
    %1260 = vmatprep.subr.mxu0 0.0
    %1261 = vmatpush1.msra.mxu0 %v1245
    %1262 = vmatprep.subr.mxu0 0.0
    %1263 = vmatpush1.msra.mxu0 0.0
    %1264 = vmatprep.subr.mxu0 0.0
    %1265 = vmatpush1.msra.mxu0 0.0
    %1266 = vmatprep.subr.mxu0 0.0
    %1267 = vmatpush1.msra.mxu0 0.0
    %1268 = vmatprep.subr.mxu0 0.0
    %1269 = vmatpush1.msra.mxu0 0.0
    %1270 = vmatprep.subr.mxu0 0.0
    %1271 = vmatpush1.msra.mxu0 0.0
    %1272 = vmatprep.subr.mxu0 0.0
    %1273 = vmatpush1.msra.mxu0 0.0
    %1274 = vmatprep.subr.mxu0 0.0
    %1275 = vmatpush1.msra.mxu0 0.0
    %1276 = vmatprep.subr.mxu0 0.0
    %1277 = vmatpush1.msra.mxu0 0.0
    %1278 = vmatprep.subr.mxu0 0.0
    %1279 = vmatpush1.msra.mxu0 0.0
    %1280 = vmatprep.subr.mxu0 0.0
    %1281 = vmatpush1.msra.mxu0 0.0
    %1282 = vmatprep.subr.mxu0 0.0
    %1283 = vmatpush1.msra.mxu0 0.0
    %1284 = vmatprep.subr.mxu0 0.0
    %1285 = vmatpush1.msra.mxu0 0.0
    %1286 = vmatprep.subr.mxu0 0.0
    %1287 = vmatpush1.msra.mxu0 0.0
    %1288 = vmatprep.subr.mxu0 0.0
    %1289 = vmatpush1.msra.mxu0 0.0
    %1290 = vmatprep.subr.mxu0 0.0
    %1291 = vmatpush1.msra.mxu0 0.0
    %1292 = vmatprep.subr.mxu0 0.0
    %1293 = vmatpush1.msra.mxu0 0.0
    %1294 = vmatprep.subr.mxu0 0.0
    %1295 = vmatpush1.msra.mxu0 0.0
    %1296 = vmatprep.subr.mxu0 0.0
    %1297 = vmatpush1.msra.mxu0 0.0
    %1298 = vmatprep.subr.mxu0 0.0
    %1299 = vmatpush1.msra.mxu0 0.0
    %1300 = vmatprep.subr.mxu0 0.0
    %1301 = vmatpush1.msra.mxu0 0.0
    %1302 = vmatprep.subr.mxu0 0.0
    %1303 = vmatpush1.msra.mxu0 0.0
    %1304 = vmatprep.subr.mxu0 0.0
    %1305 = vmatpush1.msra.mxu0 0.0
    %1306 = vmatprep.subr.mxu0 0.0
    %1307 = vmatpush1.msra.mxu0 0.0
    %1308 = vmatprep.subr.mxu0 0.0
    %1309 = vmatpush1.msra.mxu0 0.0
    %1310 = vmatprep.subr.mxu0 0.0
    %1311 = vmatpush1.msra.mxu0 0.0
    %1312 = vmatprep.subr.mxu0 0.0
    %1313 = vmatpush1.msra.mxu0 0.0
    %1314 = vmatprep.subr.mxu0 0.0
    %1315 = vmatpush1.msra.mxu0 0.0
    %1316 = vmatprep.subr.mxu0 0.0
    %1317 = vmatpush1.msra.mxu0 0.0
    %1318 = vmatprep.mubr.f32.mxu0 0.0
    %1319 = vmatmul.mubr.f32.gmra.mrb[0].mxu0 %v277
    %v1320 = vpop.f32.mrb[0].mxu0
    %v1321 = vadd.f32 %v1252, %v1320
    %v1322 = vpop.f32.mrb[0].mxu0
    %1323 = vdwg.mxu0
    %s1324 = scalar_lea.vmem %s23, 64
    %v1325 = vld [vmem:[%s1324] sm:$0xff]
    %v1326 = vld [vmem:[%s1324 + $0x8] sm:$0xff]
    %v1327 = vld [vmem:[%s1324 + $0x10] sm:$0xff]
    %v1328 = vld [vmem:[%s1324 + $0x18] sm:$0xff]
    %s1329 = scalar_lea.vmem %s25, 2
    %v1330 = vld [vmem:[%s1329] sm:$0x1]
    %v1332 = vlaneseq
    %v1333 = vshrl.u32 %v1332, 7
    %v1334 = vsub.s32 0, %v1333
    %v1335 = vrot.slane %v1330, %v1334
    %1337 = vmatprep.subr.mxu0 0.0
    %1338 = vmatpush1.msra.mxu0 %v1325
    %1339 = vmatprep.subr.mxu0 0.0
    %1340 = vmatpush1.msra.mxu0 %v1326
    %1341 = vmatprep.subr.mxu0 0.0
    %1342 = vmatpush1.msra.mxu0 %v1327
    %1343 = vmatprep.subr.mxu0 0.0
    %1344 = vmatpush1.msra.mxu0 %v1328
    %1345 = vmatprep.subr.mxu0 0.0
    %1346 = vmatpush1.msra.mxu0 0.0
    %1347 = vmatprep.subr.mxu0 0.0
    %1348 = vmatpush1.msra.mxu0 0.0
    %1349 = vmatprep.subr.mxu0 0.0
    %1350 = vmatpush1.msra.mxu0 0.0
    %1351 = vmatprep.subr.mxu0 0.0
    %1352 = vmatpush1.msra.mxu0 0.0
    %1353 = vmatprep.subr.mxu0 0.0
    %1354 = vmatpush1.msra.mxu0 0.0
    %1355 = vmatprep.subr.mxu0 0.0
    %1356 = vmatpush1.msra.mxu0 0.0
    %1357 = vmatprep.subr.mxu0 0.0
    %1358 = vmatpush1.msra.mxu0 0.0
    %1359 = vmatprep.subr.mxu0 0.0
    %1360 = vmatpush1.msra.mxu0 0.0
    %1361 = vmatprep.subr.mxu0 0.0
    %1362 = vmatpush1.msra.mxu0 0.0
    %1363 = vmatprep.subr.mxu0 0.0
    %1364 = vmatpush1.msra.mxu0 0.0
    %1365 = vmatprep.subr.mxu0 0.0
    %1366 = vmatpush1.msra.mxu0 0.0
    %1367 = vmatprep.subr.mxu0 0.0
    %1368 = vmatpush1.msra.mxu0 0.0
    %1369 = vmatprep.subr.mxu0 0.0
    %1370 = vmatpush1.msra.mxu0 0.0
    %1371 = vmatprep.subr.mxu0 0.0
    %1372 = vmatpush1.msra.mxu0 0.0
    %1373 = vmatprep.subr.mxu0 0.0
    %1374 = vmatpush1.msra.mxu0 0.0
    %1375 = vmatprep.subr.mxu0 0.0
    %1376 = vmatpush1.msra.mxu0 0.0
    %1377 = vmatprep.subr.mxu0 0.0
    %1378 = vmatpush1.msra.mxu0 0.0
    %1379 = vmatprep.subr.mxu0 0.0
    %1380 = vmatpush1.msra.mxu0 0.0
    %1381 = vmatprep.subr.mxu0 0.0
    %1382 = vmatpush1.msra.mxu0 0.0
    %1383 = vmatprep.subr.mxu0 0.0
    %1384 = vmatpush1.msra.mxu0 0.0
    %1385 = vmatprep.subr.mxu0 0.0
    %1386 = vmatpush1.msra.mxu0 0.0
    %1387 = vmatprep.subr.mxu0 0.0
    %1388 = vmatpush1.msra.mxu0 0.0
    %1389 = vmatprep.subr.mxu0 0.0
    %1390 = vmatpush1.msra.mxu0 0.0
    %1391 = vmatprep.subr.mxu0 0.0
    %1392 = vmatpush1.msra.mxu0 0.0
    %1393 = vmatprep.subr.mxu0 0.0
    %1394 = vmatpush1.msra.mxu0 0.0
    %1395 = vmatprep.subr.mxu0 0.0
    %1396 = vmatpush1.msra.mxu0 0.0
    %1397 = vmatprep.subr.mxu0 0.0
    %1398 = vmatpush1.msra.mxu0 0.0
    %1399 = vmatprep.subr.mxu0 0.0
    %1400 = vmatpush1.msra.mxu0 0.0
    %1401 = vmatprep.mubr.f32.mxu0 0.0
    %1402 = vmatmul.mubr.f32.gmra.mrb[0].mxu0 %v361
    %v1403 = vpop.f32.mrb[0].mxu0
    %v1404 = vadd.f32 %v1335, %v1403
    %v1405 = vpop.f32.mrb[0].mxu0
    %1406 = vdwg.mxu0
    %s1407 = scalar_lea.vmem %s27, 64
    %v1408 = vld [vmem:[%s1407] sm:$0xff]
    %v1409 = vld [vmem:[%s1407 + $0x8] sm:$0xff]
    %v1410 = vld [vmem:[%s1407 + $0x10] sm:$0xff]
    %v1411 = vld [vmem:[%s1407 + $0x18] sm:$0xff]
    %s1412 = scalar_lea.vmem %s29, 2
    %v1413 = vld [vmem:[%s1412] sm:$0x1]
    %v1415 = vlaneseq
    %v1416 = vshrl.u32 %v1415, 7
    %v1417 = vsub.s32 0, %v1416
    %v1418 = vrot.slane %v1413, %v1417
    %1420 = vmatprep.subr.mxu0 0.0
    %1421 = vmatpush1.msra.mxu0 %v1408
    %1422 = vmatprep.subr.mxu0 0.0
    %1423 = vmatpush1.msra.mxu0 %v1409
    %1424 = vmatprep.subr.mxu0 0.0
    %1425 = vmatpush1.msra.mxu0 %v1410
    %1426 = vmatprep.subr.mxu0 0.0
    %1427 = vmatpush1.msra.mxu0 %v1411
    %1428 = vmatprep.subr.mxu0 0.0
    %1429 = vmatpush1.msra.mxu0 0.0
    %1430 = vmatprep.subr.mxu0 0.0
    %1431 = vmatpush1.msra.mxu0 0.0
    %1432 = vmatprep.subr.mxu0 0.0
    %1433 = vmatpush1.msra.mxu0 0.0
    %1434 = vmatprep.subr.mxu0 0.0
    %1435 = vmatpush1.msra.mxu0 0.0
    %1436 = vmatprep.subr.mxu0 0.0
    %1437 = vmatpush1.msra.mxu0 0.0
    %1438 = vmatprep.subr.mxu0 0.0
    %1439 = vmatpush1.msra.mxu0 0.0
    %1440 = vmatprep.subr.mxu0 0.0
    %1441 = vmatpush1.msra.mxu0 0.0
    %1442 = vmatprep.subr.mxu0 0.0
    %1443 = vmatpush1.msra.mxu0 0.0
    %1444 = vmatprep.subr.mxu0 0.0
    %1445 = vmatpush1.msra.mxu0 0.0
    %1446 = vmatprep.subr.mxu0 0.0
    %1447 = vmatpush1.msra.mxu0 0.0
    %1448 = vmatprep.subr.mxu0 0.0
    %1449 = vmatpush1.msra.mxu0 0.0
    %1450 = vmatprep.subr.mxu0 0.0
    %1451 = vmatpush1.msra.mxu0 0.0
    %1452 = vmatprep.subr.mxu0 0.0
    %1453 = vmatpush1.msra.mxu0 0.0
    %1454 = vmatprep.subr.mxu0 0.0
    %1455 = vmatpush1.msra.mxu0 0.0
    %1456 = vmatprep.subr.mxu0 0.0
    %1457 = vmatpush1.msra.mxu0 0.0
    %1458 = vmatprep.subr.mxu0 0.0
    %1459 = vmatpush1.msra.mxu0 0.0
    %1460 = vmatprep.subr.mxu0 0.0
    %1461 = vmatpush1.msra.mxu0 0.0
    %1462 = vmatprep.subr.mxu0 0.0
    %1463 = vmatpush1.msra.mxu0 0.0
    %1464 = vmatprep.subr.mxu0 0.0
    %1465 = vmatpush1.msra.mxu0 0.0
    %1466 = vmatprep.subr.mxu0 0.0
    %1467 = vmatpush1.msra.mxu0 0.0
    %1468 = vmatprep.subr.mxu0 0.0
    %1469 = vmatpush1.msra.mxu0 0.0
    %1470 = vmatprep.subr.mxu0 0.0
    %1471 = vmatpush1.msra.mxu0 0.0
    %1472 = vmatprep.subr.mxu0 0.0
    %1473 = vmatpush1.msra.mxu0 0.0
    %1474 = vmatprep.subr.mxu0 0.0
    %1475 = vmatpush1.msra.mxu0 0.0
    %1476 = vmatprep.subr.mxu0 0.0
    %1477 = vmatpush1.msra.mxu0 0.0
    %1478 = vmatprep.subr.mxu0 0.0
    %1479 = vmatpush1.msra.mxu0 0.0
    %1480 = vmatprep.subr.mxu0 0.0
    %1481 = vmatpush1.msra.mxu0 0.0
    %1482 = vmatprep.subr.mxu0 0.0
    %1483 = vmatpush1.msra.mxu0 0.0
    %1484 = vmatprep.mubr.f32.mxu0 0.0
    %1485 = vmatmul.mubr.f32.gmra.mrb[0].mxu0 %v445
    %v1486 = vpop.f32.mrb[0].mxu0
    %v1487 = vadd.f32 %v1418, %v1486
    %v1488 = vpop.f32.mrb[0].mxu0
    %1489 = vdwg.mxu0
    %v1491 = vsel %vm517, %v1321, 0
    %v1494 = vsel %vm517, %v1404, 0
    %1496 = vmatprep.subr.mxu0 0.0
    %1497 = vmatpush1.xpose.msra.mxu0 %v1494
    %1498 = vmatprep.subr.mxu0 0.0
    %1499 = vmatpush1.xpose.msra.mxu0 0.0
    %1500 = vmatprep.subr.mxu0 0.0
    %1501 = vmatpush1.xpose.msra.mxu0 0.0
    %1502 = vmatprep.subr.mxu0 0.0
    %1503 = vmatpush1.xpose.msra.mxu0 0.0
    %1504 = vmatprep.subr.mxu0 0.0
    %1505 = vmatpush1.xpose.msra.mxu0 0.0
    %1506 = vmatprep.subr.mxu0 0.0
    %1507 = vmatpush1.xpose.msra.mxu0 0.0
    %1508 = vmatprep.subr.mxu0 0.0
    %1509 = vmatpush1.xpose.msra.mxu0 0.0
    %1510 = vmatprep.subr.mxu0 0.0
    %1511 = vmatpush1.xpose.msra.mxu0 0.0
    %1512 = vmatprep.subr.mxu0 0.0
    %1513 = vmatpush1.xpose.msra.mxu0 0.0
    %1514 = vmatprep.subr.mxu0 0.0
    %1515 = vmatpush1.xpose.msra.mxu0 0.0
    %1516 = vmatprep.subr.mxu0 0.0
    %1517 = vmatpush1.xpose.msra.mxu0 0.0
    %1518 = vmatprep.subr.mxu0 0.0
    %1519 = vmatpush1.xpose.msra.mxu0 0.0
    %1520 = vmatprep.subr.mxu0 0.0
    %1521 = vmatpush1.xpose.msra.mxu0 0.0
    %1522 = vmatprep.subr.mxu0 0.0
    %1523 = vmatpush1.xpose.msra.mxu0 0.0
    %1524 = vmatprep.subr.mxu0 0.0
    %1525 = vmatpush1.xpose.msra.mxu0 0.0
    %1526 = vmatprep.subr.mxu0 0.0
    %1527 = vmatpush1.xpose.msra.mxu0 0.0
    %1528 = vmatprep.subr.mxu0 0.0
    %1529 = vmatpush1.xpose.msra.mxu0 0.0
    %1530 = vmatprep.subr.mxu0 0.0
    %1531 = vmatpush1.xpose.msra.mxu0 0.0
    %1532 = vmatprep.subr.mxu0 0.0
    %1533 = vmatpush1.xpose.msra.mxu0 0.0
    %1534 = vmatprep.subr.mxu0 0.0
    %1535 = vmatpush1.xpose.msra.mxu0 0.0
    %1536 = vmatprep.subr.mxu0 0.0
    %1537 = vmatpush1.xpose.msra.mxu0 0.0
    %1538 = vmatprep.subr.mxu0 0.0
    %1539 = vmatpush1.xpose.msra.mxu0 0.0
    %1540 = vmatprep.subr.mxu0 0.0
    %1541 = vmatpush1.xpose.msra.mxu0 0.0
    %1542 = vmatprep.subr.mxu0 0.0
    %1543 = vmatpush1.xpose.msra.mxu0 0.0
    %1544 = vmatprep.subr.mxu0 0.0
    %1545 = vmatpush1.xpose.msra.mxu0 0.0
    %1546 = vmatprep.subr.mxu0 0.0
    %1547 = vmatpush1.xpose.msra.mxu0 0.0
    %1548 = vmatprep.subr.mxu0 0.0
    %1549 = vmatpush1.xpose.msra.mxu0 0.0
    %1550 = vmatprep.subr.mxu0 0.0
    %1551 = vmatpush1.xpose.msra.mxu0 0.0
    %1552 = vmatprep.subr.mxu0 0.0
    %1553 = vmatpush1.xpose.msra.mxu0 0.0
    %1554 = vmatprep.subr.mxu0 0.0
    %1555 = vmatpush1.xpose.msra.mxu0 0.0
    %1556 = vmatprep.subr.mxu0 0.0
    %1557 = vmatpush1.xpose.msra.mxu0 0.0
    %1558 = vmatprep.subr.mxu0 0.0
    %1559 = vmatpush1.xpose.msra.mxu0 0.0
    %1560 = vmatprep.mubr.f32.mxu0 0.0
    %1561 = vmatmul.mubr.f32.gmra.mrb[0].mxu0 %v1491
    %v1562 = vpop.f32.mrb[0].mxu0
    %v1563 = vadd.f32 0.0, %v1562
    %v1564 = vpop.f32.mrb[0].mxu0
    %1565 = vdwg.mxu0
    %v1566 = vmul.f32 %v1563, 0.35355338
    %v1567 = vsel %vm595, -1e+09, %v1566
    %v1568 = vsel %vm517, %v1567, -inf
    %1569 = vmax.xlane.f32.xlu0 %v1568
    %v1570 = vpop.xlane.xlu0 %1569
    %v1571 = vsub.f32 %v1567, %v1570
    %v1572 = vmul.f32 %v1571, 1.442695
    %v1573 = vpow.pop %v1572
    %v1574 = vsel %vm517, %v1573, 0.0
    %1575 = vadd.xlane.f32.xlu0 %v1574
    %v1576 = vpop.xlane.xlu0 %1575
    %v1577 = vrcp.pop %v1576
    %v1578 = vmul.f32 %v1573, %v1577
    %v1580 = vsel %vm517, %v1578, 0
    %1582 = vmatprep.subr.mxu0 0.0
    %1583 = vmatpush1.msra.mxu0 %v1487
    %1584 = vmatprep.subr.mxu0 0.0
    %1585 = vmatpush1.msra.mxu0 0.0
    %1586 = vmatprep.subr.mxu0 0.0
    %1587 = vmatpush1.msra.mxu0 0.0
    %1588 = vmatprep.subr.mxu0 0.0
    %1589 = vmatpush1.msra.mxu0 0.0
    %1590 = vmatprep.subr.mxu0 0.0
    %1591 = vmatpush1.msra.mxu0 0.0
    %1592 = vmatprep.subr.mxu0 0.0
    %1593 = vmatpush1.msra.mxu0 0.0
    %1594 = vmatprep.subr.mxu0 0.0
    %1595 = vmatpush1.msra.mxu0 0.0
    %1596 = vmatprep.subr.mxu0 0.0
    %1597 = vmatpush1.msra.mxu0 0.0
    %1598 = vmatprep.subr.mxu0 0.0
    %1599 = vmatpush1.msra.mxu0 0.0
    %1600 = vmatprep.subr.mxu0 0.0
    %1601 = vmatpush1.msra.mxu0 0.0
    %1602 = vmatprep.subr.mxu0 0.0
    %1603 = vmatpush1.msra.mxu0 0.0
    %1604 = vmatprep.subr.mxu0 0.0
    %1605 = vmatpush1.msra.mxu0 0.0
    %1606 = vmatprep.subr.mxu0 0.0
    %1607 = vmatpush1.msra.mxu0 0.0
    %1608 = vmatprep.subr.mxu0 0.0
    %1609 = vmatpush1.msra.mxu0 0.0
    %1610 = vmatprep.subr.mxu0 0.0
    %1611 = vmatpush1.msra.mxu0 0.0
    %1612 = vmatprep.subr.mxu0 0.0
    %1613 = vmatpush1.msra.mxu0 0.0
    %1614 = vmatprep.subr.mxu0 0.0
    %1615 = vmatpush1.msra.mxu0 0.0
    %1616 = vmatprep.subr.mxu0 0.0
    %1617 = vmatpush1.msra.mxu0 0.0
    %1618 = vmatprep.subr.mxu0 0.0
    %1619 = vmatpush1.msra.mxu0 0.0
    %1620 = vmatprep.subr.mxu0 0.0
    %1621 = vmatpush1.msra.mxu0 0.0
    %1622 = vmatprep.subr.mxu0 0.0
    %1623 = vmatpush1.msra.mxu0 0.0
    %1624 = vmatprep.subr.mxu0 0.0
    %1625 = vmatpush1.msra.mxu0 0.0
    %1626 = vmatprep.subr.mxu0 0.0
    %1627 = vmatpush1.msra.mxu0 0.0
    %1628 = vmatprep.subr.mxu0 0.0
    %1629 = vmatpush1.msra.mxu0 0.0
    %1630 = vmatprep.subr.mxu0 0.0
    %1631 = vmatpush1.msra.mxu0 0.0
    %1632 = vmatprep.subr.mxu0 0.0
    %1633 = vmatpush1.msra.mxu0 0.0
    %1634 = vmatprep.subr.mxu0 0.0
    %1635 = vmatpush1.msra.mxu0 0.0
    %1636 = vmatprep.subr.mxu0 0.0
    %1637 = vmatpush1.msra.mxu0 0.0
    %1638 = vmatprep.subr.mxu0 0.0
    %1639 = vmatpush1.msra.mxu0 0.0
    %1640 = vmatprep.subr.mxu0 0.0
    %1641 = vmatpush1.msra.mxu0 0.0
    %1642 = vmatprep.subr.mxu0 0.0
    %1643 = vmatpush1.msra.mxu0 0.0
    %1644 = vmatprep.subr.mxu0 0.0
    %1645 = vmatpush1.msra.mxu0 0.0
    %1646 = vmatprep.mubr.f32.mxu0 0.0
    %1647 = vmatmul.mubr.f32.gmra.mrb[0].mxu0 %v1580
    %v1648 = vpop.f32.mrb[0].mxu0
    %v1649 = vadd.f32 0.0, %v1648
    %v1650 = vpop.f32.mrb[0].mxu0
    %1651 = vdwg.mxu0
    %s1652 = scalar_lea.vmem %s31, 16
    %v1653 = vld [vmem:[%s1652] sm:$0xff]
    %v1655 = vsel %vm517, %v1649, 0
    %1657 = vmatprep.subr.mxu0 0.0
    %1658 = vmatpush1.msra.mxu0 %v1653
    %1659 = vmatprep.subr.mxu0 0.0
    %1660 = vmatpush1.msra.mxu0 0.0
    %1661 = vmatprep.subr.mxu0 0.0
    %1662 = vmatpush1.msra.mxu0 0.0
    %1663 = vmatprep.subr.mxu0 0.0
    %1664 = vmatpush1.msra.mxu0 0.0
    %1665 = vmatprep.subr.mxu0 0.0
    %1666 = vmatpush1.msra.mxu0 0.0
    %1667 = vmatprep.subr.mxu0 0.0
    %1668 = vmatpush1.msra.mxu0 0.0
    %1669 = vmatprep.subr.mxu0 0.0
    %1670 = vmatpush1.msra.mxu0 0.0
    %1671 = vmatprep.subr.mxu0 0.0
    %1672 = vmatpush1.msra.mxu0 0.0
    %1673 = vmatprep.subr.mxu0 0.0
    %1674 = vmatpush1.msra.mxu0 0.0
    %1675 = vmatprep.subr.mxu0 0.0
    %1676 = vmatpush1.msra.mxu0 0.0
    %1677 = vmatprep.subr.mxu0 0.0
    %1678 = vmatpush1.msra.mxu0 0.0
    %1679 = vmatprep.subr.mxu0 0.0
    %1680 = vmatpush1.msra.mxu0 0.0
    %1681 = vmatprep.subr.mxu0 0.0
    %1682 = vmatpush1.msra.mxu0 0.0
    %1683 = vmatprep.subr.mxu0 0.0
    %1684 = vmatpush1.msra.mxu0 0.0
    %1685 = vmatprep.subr.mxu0 0.0
    %1686 = vmatpush1.msra.mxu0 0.0
    %1687 = vmatprep.subr.mxu0 0.0
    %1688 = vmatpush1.msra.mxu0 0.0
    %1689 = vmatprep.subr.mxu0 0.0
    %1690 = vmatpush1.msra.mxu0 0.0
    %1691 = vmatprep.subr.mxu0 0.0
    %1692 = vmatpush1.msra.mxu0 0.0
    %1693 = vmatprep.subr.mxu0 0.0
    %1694 = vmatpush1.msra.mxu0 0.0
    %1695 = vmatprep.subr.mxu0 0.0
    %1696 = vmatpush1.msra.mxu0 0.0
    %1697 = vmatprep.subr.mxu0 0.0
    %1698 = vmatpush1.msra.mxu0 0.0
    %1699 = vmatprep.subr.mxu0 0.0
    %1700 = vmatpush1.msra.mxu0 0.0
    %1701 = vmatprep.subr.mxu0 0.0
    %1702 = vmatpush1.msra.mxu0 0.0
    %1703 = vmatprep.subr.mxu0 0.0
    %1704 = vmatpush1.msra.mxu0 0.0
    %1705 = vmatprep.subr.mxu0 0.0
    %1706 = vmatpush1.msra.mxu0 0.0
    %1707 = vmatprep.subr.mxu0 0.0
    %1708 = vmatpush1.msra.mxu0 0.0
    %1709 = vmatprep.subr.mxu0 0.0
    %1710 = vmatpush1.msra.mxu0 0.0
    %1711 = vmatprep.subr.mxu0 0.0
    %1712 = vmatpush1.msra.mxu0 0.0
    %1713 = vmatprep.subr.mxu0 0.0
    %1714 = vmatpush1.msra.mxu0 0.0
    %1715 = vmatprep.subr.mxu0 0.0
    %1716 = vmatpush1.msra.mxu0 0.0
    %1717 = vmatprep.subr.mxu0 0.0
    %1718 = vmatpush1.msra.mxu0 0.0
    %1719 = vmatprep.subr.mxu0 0.0
    %1720 = vmatpush1.msra.mxu0 0.0
    %1721 = vmatprep.mubr.f32.mxu0 0.0
    %1722 = vmatmul.mubr.f32.gmra.mrb[0].mxu0 %v1655
    %v1723 = vpop.f32.mrb[0].mxu0
    %v1724 = vadd.f32 0.0, %v1723
    %v1725 = vpop.f32.mrb[0].mxu0
    %1726 = vdwg.mxu0
    %v1727 = vadd.f32 %v1238, %v1724
    %s1728 = scalar_lea.vmem %s19, 96
    %v1729 = vld [vmem:[%s1728] sm:$0xff]
    %v1730 = vld [vmem:[%s1728 + $0x8] sm:$0xff]
    %v1731 = vld [vmem:[%s1728 + $0x10] sm:$0xff]
    %v1732 = vld [vmem:[%s1728 + $0x18] sm:$0xff]
    %s1733 = scalar_lea.vmem %s21, 3
    %v1734 = vld [vmem:[%s1733] sm:$0x1]
    %v1736 = vlaneseq
    %v1737 = vshrl.u32 %v1736, 7
    %v1738 = vsub.s32 0, %v1737
    %v1739 = vrot.slane %v1734, %v1738
    %1741 = vmatprep.subr.mxu0 0.0
    %1742 = vmatpush1.msra.mxu0 %v1729
    %1743 = vmatprep.subr.mxu0 0.0
    %1744 = vmatpush1.msra.mxu0 %v1730
    %1745 = vmatprep.subr.mxu0 0.0
    %1746 = vmatpush1.msra.mxu0 %v1731
    %1747 = vmatprep.subr.mxu0 0.0
    %1748 = vmatpush1.msra.mxu0 %v1732
    %1749 = vmatprep.subr.mxu0 0.0
    %1750 = vmatpush1.msra.mxu0 0.0
    %1751 = vmatprep.subr.mxu0 0.0
    %1752 = vmatpush1.msra.mxu0 0.0
    %1753 = vmatprep.subr.mxu0 0.0
    %1754 = vmatpush1.msra.mxu0 0.0
    %1755 = vmatprep.subr.mxu0 0.0
    %1756 = vmatpush1.msra.mxu0 0.0
    %1757 = vmatprep.subr.mxu0 0.0
    %1758 = vmatpush1.msra.mxu0 0.0
    %1759 = vmatprep.subr.mxu0 0.0
    %1760 = vmatpush1.msra.mxu0 0.0
    %1761 = vmatprep.subr.mxu0 0.0
    %1762 = vmatpush1.msra.mxu0 0.0
    %1763 = vmatprep.subr.mxu0 0.0
    %1764 = vmatpush1.msra.mxu0 0.0
    %1765 = vmatprep.subr.mxu0 0.0
    %1766 = vmatpush1.msra.mxu0 0.0
    %1767 = vmatprep.subr.mxu0 0.0
    %1768 = vmatpush1.msra.mxu0 0.0
    %1769 = vmatprep.subr.mxu0 0.0
    %1770 = vmatpush1.msra.mxu0 0.0
    %1771 = vmatprep.subr.mxu0 0.0
    %1772 = vmatpush1.msra.mxu0 0.0
    %1773 = vmatprep.subr.mxu0 0.0
    %1774 = vmatpush1.msra.mxu0 0.0
    %1775 = vmatprep.subr.mxu0 0.0
    %1776 = vmatpush1.msra.mxu0 0.0
    %1777 = vmatprep.subr.mxu0 0.0
    %1778 = vmatpush1.msra.mxu0 0.0
    %1779 = vmatprep.subr.mxu0 0.0
    %1780 = vmatpush1.msra.mxu0 0.0
    %1781 = vmatprep.subr.mxu0 0.0
    %1782 = vmatpush1.msra.mxu0 0.0
    %1783 = vmatprep.subr.mxu0 0.0
    %1784 = vmatpush1.msra.mxu0 0.0
    %1785 = vmatprep.subr.mxu0 0.0
    %1786 = vmatpush1.msra.mxu0 0.0
    %1787 = vmatprep.subr.mxu0 0.0
    %1788 = vmatpush1.msra.mxu0 0.0
    %1789 = vmatprep.subr.mxu0 0.0
    %1790 = vmatpush1.msra.mxu0 0.0
    %1791 = vmatprep.subr.mxu0 0.0
    %1792 = vmatpush1.msra.mxu0 0.0
    %1793 = vmatprep.subr.mxu0 0.0
    %1794 = vmatpush1.msra.mxu0 0.0
    %1795 = vmatprep.subr.mxu0 0.0
    %1796 = vmatpush1.msra.mxu0 0.0
    %1797 = vmatprep.subr.mxu0 0.0
    %1798 = vmatpush1.msra.mxu0 0.0
    %1799 = vmatprep.subr.mxu0 0.0
    %1800 = vmatpush1.msra.mxu0 0.0
    %1801 = vmatprep.subr.mxu0 0.0
    %1802 = vmatpush1.msra.mxu0 0.0
    %1803 = vmatprep.subr.mxu0 0.0
    %1804 = vmatpush1.msra.mxu0 0.0
    %1805 = vmatprep.mubr.f32.mxu0 0.0
    %1806 = vmatmul.mubr.f32.gmra.mrb[0].mxu0 %v277
    %v1807 = vpop.f32.mrb[0].mxu0
    %v1808 = vadd.f32 %v1739, %v1807
    %v1809 = vpop.f32.mrb[0].mxu0
    %1810 = vdwg.mxu0
    %s1811 = scalar_lea.vmem %s23, 96
    %v1812 = vld [vmem:[%s1811] sm:$0xff]
    %v1813 = vld [vmem:[%s1811 + $0x8] sm:$0xff]
    %v1814 = vld [vmem:[%s1811 + $0x10] sm:$0xff]
    %v1815 = vld [vmem:[%s1811 + $0x18] sm:$0xff]
    %s1816 = scalar_lea.vmem %s25, 3
    %v1817 = vld [vmem:[%s1816] sm:$0x1]
    %v1819 = vlaneseq
    %v1820 = vshrl.u32 %v1819, 7
    %v1821 = vsub.s32 0, %v1820
    %v1822 = vrot.slane %v1817, %v1821
    %1824 = vmatprep.subr.mxu0 0.0
    %1825 = vmatpush1.msra.mxu0 %v1812
    %1826 = vmatprep.subr.mxu0 0.0
    %1827 = vmatpush1.msra.mxu0 %v1813
    %1828 = vmatprep.subr.mxu0 0.0
    %1829 = vmatpush1.msra.mxu0 %v1814
    %1830 = vmatprep.subr.mxu0 0.0
    %1831 = vmatpush1.msra.mxu0 %v1815
    %1832 = vmatprep.subr.mxu0 0.0
    %1833 = vmatpush1.msra.mxu0 0.0
    %1834 = vmatprep.subr.mxu0 0.0
    %1835 = vmatpush1.msra.mxu0 0.0
    %1836 = vmatprep.subr.mxu0 0.0
    %1837 = vmatpush1.msra.mxu0 0.0
    %1838 = vmatprep.subr.mxu0 0.0
    %1839 = vmatpush1.msra.mxu0 0.0
    %1840 = vmatprep.subr.mxu0 0.0
    %1841 = vmatpush1.msra.mxu0 0.0
    %1842 = vmatprep.subr.mxu0 0.0
    %1843 = vmatpush1.msra.mxu0 0.0
    %1844 = vmatprep.subr.mxu0 0.0
    %1845 = vmatpush1.msra.mxu0 0.0
    %1846 = vmatprep.subr.mxu0 0.0
    %1847 = vmatpush1.msra.mxu0 0.0
    %1848 = vmatprep.subr.mxu0 0.0
    %1849 = vmatpush1.msra.mxu0 0.0
    %1850 = vmatprep.subr.mxu0 0.0
    %1851 = vmatpush1.msra.mxu0 0.0
    %1852 = vmatprep.subr.mxu0 0.0
    %1853 = vmatpush1.msra.mxu0 0.0
    %1854 = vmatprep.subr.mxu0 0.0
    %1855 = vmatpush1.msra.mxu0 0.0
    %1856 = vmatprep.subr.mxu0 0.0
    %1857 = vmatpush1.msra.mxu0 0.0
    %1858 = vmatprep.subr.mxu0 0.0
    %1859 = vmatpush1.msra.mxu0 0.0
    %1860 = vmatprep.subr.mxu0 0.0
    %1861 = vmatpush1.msra.mxu0 0.0
    %1862 = vmatprep.subr.mxu0 0.0
    %1863 = vmatpush1.msra.mxu0 0.0
    %1864 = vmatprep.subr.mxu0 0.0
    %1865 = vmatpush1.msra.mxu0 0.0
    %1866 = vmatprep.subr.mxu0 0.0
    %1867 = vmatpush1.msra.mxu0 0.0
    %1868 = vmatprep.subr.mxu0 0.0
    %1869 = vmatpush1.msra.mxu0 0.0
    %1870 = vmatprep.subr.mxu0 0.0
    %1871 = vmatpush1.msra.mxu0 0.0
    %1872 = vmatprep.subr.mxu0 0.0
    %1873 = vmatpush1.msra.mxu0 0.0
    %1874 = vmatprep.subr.mxu0 0.0
    %1875 = vmatpush1.msra.mxu0 0.0
    %1876 = vmatprep.subr.mxu0 0.0
    %1877 = vmatpush1.msra.mxu0 0.0
    %1878 = vmatprep.subr.mxu0 0.0
    %1879 = vmatpush1.msra.mxu0 0.0
    %1880 = vmatprep.subr.mxu0 0.0
    %1881 = vmatpush1.msra.mxu0 0.0
    %1882 = vmatprep.subr.mxu0 0.0
    %1883 = vmatpush1.msra.mxu0 0.0
    %1884 = vmatprep.subr.mxu0 0.0
    %1885 = vmatpush1.msra.mxu0 0.0
    %1886 = vmatprep.subr.mxu0 0.0
    %1887 = vmatpush1.msra.mxu0 0.0
    %1888 = vmatprep.mubr.f32.mxu0 0.0
    %1889 = vmatmul.mubr.f32.gmra.mrb[0].mxu0 %v361
    %v1890 = vpop.f32.mrb[0].mxu0
    %v1891 = vadd.f32 %v1822, %v1890
    %v1892 = vpop.f32.mrb[0].mxu0
    %1893 = vdwg.mxu0
    %s1894 = scalar_lea.vmem %s27, 96
    %v1895 = vld [vmem:[%s1894] sm:$0xff]
    %v1896 = vld [vmem:[%s1894 + $0x8] sm:$0xff]
    %v1897 = vld [vmem:[%s1894 + $0x10] sm:$0xff]
    %v1898 = vld [vmem:[%s1894 + $0x18] sm:$0xff]
    %s1899 = scalar_lea.vmem %s29, 3
    %v1900 = vld [vmem:[%s1899] sm:$0x1]
    %v1902 = vlaneseq
    %v1903 = vshrl.u32 %v1902, 7
    %v1904 = vsub.s32 0, %v1903
    %v1905 = vrot.slane %v1900, %v1904
    %1907 = vmatprep.subr.mxu0 0.0
    %1908 = vmatpush1.msra.mxu0 %v1895
    %1909 = vmatprep.subr.mxu0 0.0
    %1910 = vmatpush1.msra.mxu0 %v1896
    %1911 = vmatprep.subr.mxu0 0.0
    %1912 = vmatpush1.msra.mxu0 %v1897
    %1913 = vmatprep.subr.mxu0 0.0
    %1914 = vmatpush1.msra.mxu0 %v1898
    %1915 = vmatprep.subr.mxu0 0.0
    %1916 = vmatpush1.msra.mxu0 0.0
    %1917 = vmatprep.subr.mxu0 0.0
    %1918 = vmatpush1.msra.mxu0 0.0
    %1919 = vmatprep.subr.mxu0 0.0
    %1920 = vmatpush1.msra.mxu0 0.0
    %1921 = vmatprep.subr.mxu0 0.0
    %1922 = vmatpush1.msra.mxu0 0.0
    %1923 = vmatprep.subr.mxu0 0.0
    %1924 = vmatpush1.msra.mxu0 0.0
    %1925 = vmatprep.subr.mxu0 0.0
    %1926 = vmatpush1.msra.mxu0 0.0
    %1927 = vmatprep.subr.mxu0 0.0
    %1928 = vmatpush1.msra.mxu0 0.0
    %1929 = vmatprep.subr.mxu0 0.0
    %1930 = vmatpush1.msra.mxu0 0.0
    %1931 = vmatprep.subr.mxu0 0.0
    %1932 = vmatpush1.msra.mxu0 0.0
    %1933 = vmatprep.subr.mxu0 0.0
    %1934 = vmatpush1.msra.mxu0 0.0
    %1935 = vmatprep.subr.mxu0 0.0
    %1936 = vmatpush1.msra.mxu0 0.0
    %1937 = vmatprep.subr.mxu0 0.0
    %1938 = vmatpush1.msra.mxu0 0.0
    %1939 = vmatprep.subr.mxu0 0.0
    %1940 = vmatpush1.msra.mxu0 0.0
    %1941 = vmatprep.subr.mxu0 0.0
    %1942 = vmatpush1.msra.mxu0 0.0
    %1943 = vmatprep.subr.mxu0 0.0
    %1944 = vmatpush1.msra.mxu0 0.0
    %1945 = vmatprep.subr.mxu0 0.0
    %1946 = vmatpush1.msra.mxu0 0.0
    %1947 = vmatprep.subr.mxu0 0.0
    %1948 = vmatpush1.msra.mxu0 0.0
    %1949 = vmatprep.subr.mxu0 0.0
    %1950 = vmatpush1.msra.mxu0 0.0
    %1951 = vmatprep.subr.mxu0 0.0
    %1952 = vmatpush1.msra.mxu0 0.0
    %1953 = vmatprep.subr.mxu0 0.0
    %1954 = vmatpush1.msra.mxu0 0.0
    %1955 = vmatprep.subr.mxu0 0.0
    %1956 = vmatpush1.msra.mxu0 0.0
    %1957 = vmatprep.subr.mxu0 0.0
    %1958 = vmatpush1.msra.mxu0 0.0
    %1959 = vmatprep.subr.mxu0 0.0
    %1960 = vmatpush1.msra.mxu0 0.0
    %1961 = vmatprep.subr.mxu0 0.0
    %1962 = vmatpush1.msra.mxu0 0.0
    %1963 = vmatprep.subr.mxu0 0.0
    %1964 = vmatpush1.msra.mxu0 0.0
    %1965 = vmatprep.subr.mxu0 0.0
    %1966 = vmatpush1.msra.mxu0 0.0
    %1967 = vmatprep.subr.mxu0 0.0
    %1968 = vmatpush1.msra.mxu0 0.0
    %1969 = vmatprep.subr.mxu0 0.0
    %1970 = vmatpush1.msra.mxu0 0.0
    %1971 = vmatprep.mubr.f32.mxu0 0.0
    %1972 = vmatmul.mubr.f32.gmra.mrb[0].mxu0 %v445
    %v1973 = vpop.f32.mrb[0].mxu0
    %v1974 = vadd.f32 %v1905, %v1973
    %v1975 = vpop.f32.mrb[0].mxu0
    %1976 = vdwg.mxu0
    %v1978 = vsel %vm517, %v1808, 0
    %v1981 = vsel %vm517, %v1891, 0
    %1983 = vmatprep.subr.mxu0 0.0
    %1984 = vmatpush1.xpose.msra.mxu0 %v1981
    %1985 = vmatprep.subr.mxu0 0.0
    %1986 = vmatpush1.xpose.msra.mxu0 0.0
    %1987 = vmatprep.subr.mxu0 0.0
    %1988 = vmatpush1.xpose.msra.mxu0 0.0
    %1989 = vmatprep.subr.mxu0 0.0
    %1990 = vmatpush1.xpose.msra.mxu0 0.0
    %1991 = vmatprep.subr.mxu0 0.0
    %1992 = vmatpush1.xpose.msra.mxu0 0.0
    %1993 = vmatprep.subr.mxu0 0.0
    %1994 = vmatpush1.xpose.msra.mxu0 0.0
    %1995 = vmatprep.subr.mxu0 0.0
    %1996 = vmatpush1.xpose.msra.mxu0 0.0
    %1997 = vmatprep.subr.mxu0 0.0
    %1998 = vmatpush1.xpose.msra.mxu0 0.0
    %1999 = vmatprep.subr.mxu0 0.0
    %2000 = vmatpush1.xpose.msra.mxu0 0.0
    %2001 = vmatprep.subr.mxu0 0.0
    %2002 = vmatpush1.xpose.msra.mxu0 0.0
    %2003 = vmatprep.subr.mxu0 0.0
    %2004 = vmatpush1.xpose.msra.mxu0 0.0
    %2005 = vmatprep.subr.mxu0 0.0
    %2006 = vmatpush1.xpose.msra.mxu0 0.0
    %2007 = vmatprep.subr.mxu0 0.0
    %2008 = vmatpush1.xpose.msra.mxu0 0.0
    %2009 = vmatprep.subr.mxu0 0.0
    %2010 = vmatpush1.xpose.msra.mxu0 0.0
    %2011 = vmatprep.subr.mxu0 0.0
    %2012 = vmatpush1.xpose.msra.mxu0 0.0
    %2013 = vmatprep.subr.mxu0 0.0
    %2014 = vmatpush1.xpose.msra.mxu0 0.0
    %2015 = vmatprep.subr.mxu0 0.0
    %2016 = vmatpush1.xpose.msra.mxu0 0.0
    %2017 = vmatprep.subr.mxu0 0.0
    %2018 = vmatpush1.xpose.msra.mxu0 0.0
    %2019 = vmatprep.subr.mxu0 0.0
    %2020 = vmatpush1.xpose.msra.mxu0 0.0
    %2021 = vmatprep.subr.mxu0 0.0
    %2022 = vmatpush1.xpose.msra.mxu0 0.0
    %2023 = vmatprep.subr.mxu0 0.0
    %2024 = vmatpush1.xpose.msra.mxu0 0.0
    %2025 = vmatprep.subr.mxu0 0.0
    %2026 = vmatpush1.xpose.msra.mxu0 0.0
    %2027 = vmatprep.subr.mxu0 0.0
    %2028 = vmatpush1.xpose.msra.mxu0 0.0
    %2029 = vmatprep.subr.mxu0 0.0
    %2030 = vmatpush1.xpose.msra.mxu0 0.0
    %2031 = vmatprep.subr.mxu0 0.0
    %2032 = vmatpush1.xpose.msra.mxu0 0.0
    %2033 = vmatprep.subr.mxu0 0.0
    %2034 = vmatpush1.xpose.msra.mxu0 0.0
    %2035 = vmatprep.subr.mxu0 0.0
    %2036 = vmatpush1.xpose.msra.mxu0 0.0
    %2037 = vmatprep.subr.mxu0 0.0
    %2038 = vmatpush1.xpose.msra.mxu0 0.0
    %2039 = vmatprep.subr.mxu0 0.0
    %2040 = vmatpush1.xpose.msra.mxu0 0.0
    %2041 = vmatprep.subr.mxu0 0.0
    %2042 = vmatpush1.xpose.msra.mxu0 0.0
    %2043 = vmatprep.subr.mxu0 0.0
    %2044 = vmatpush1.xpose.msra.mxu0 0.0
    %2045 = vmatprep.subr.mxu0 0.0
    %2046 = vmatpush1.xpose.msra.mxu0 0.0
    %2047 = vmatprep.mubr.f32.mxu0 0.0
    %2048 = vmatmul.mubr.f32.gmra.mrb[0].mxu0 %v1978
    %v2049 = vpop.f32.mrb[0].mxu0
    %v2050 = vadd.f32 0.0, %v2049
    %v2051 = vpop.f32.mrb[0].mxu0
    %2052 = vdwg.mxu0
    %v2053 = vmul.f32 %v2050, 0.35355338
    %v2054 = vsel %vm595, -1e+09, %v2053
    %v2055 = vsel %vm517, %v2054, -inf
    %2056 = vmax.xlane.f32.xlu0 %v2055
    %v2057 = vpop.xlane.xlu0 %2056
    %v2058 = vsub.f32 %v2054, %v2057
    %v2059 = vmul.f32 %v2058, 1.442695
    %v2060 = vpow.pop %v2059
    %v2061 = vsel %vm517, %v2060, 0.0
    %2062 = vadd.xlane.f32.xlu0 %v2061
    %v2063 = vpop.xlane.xlu0 %2062
    %v2064 = vrcp.pop %v2063
    %v2065 = vmul.f32 %v2060, %v2064
    %v2067 = vsel %vm517, %v2065, 0
    %2069 = vmatprep.subr.mxu0 0.0
    %2070 = vmatpush1.msra.mxu0 %v1974
    %2071 = vmatprep.subr.mxu0 0.0
    %2072 = vmatpush1.msra.mxu0 0.0
    %2073 = vmatprep.subr.mxu0 0.0
    %2074 = vmatpush1.msra.mxu0 0.0
    %2075 = vmatprep.subr.mxu0 0.0
    %2076 = vmatpush1.msra.mxu0 0.0
    %2077 = vmatprep.subr.mxu0 0.0
    %2078 = vmatpush1.msra.mxu0 0.0
    %2079 = vmatprep.subr.mxu0 0.0
    %2080 = vmatpush1.msra.mxu0 0.0
    %2081 = vmatprep.subr.mxu0 0.0
    %2082 = vmatpush1.msra.mxu0 0.0
    %2083 = vmatprep.subr.mxu0 0.0
    %2084 = vmatpush1.msra.mxu0 0.0
    %2085 = vmatprep.subr.mxu0 0.0
    %2086 = vmatpush1.msra.mxu0 0.0
    %2087 = vmatprep.subr.mxu0 0.0
    %2088 = vmatpush1.msra.mxu0 0.0
    %2089 = vmatprep.subr.mxu0 0.0
    %2090 = vmatpush1.msra.mxu0 0.0
    %2091 = vmatprep.subr.mxu0 0.0
    %2092 = vmatpush1.msra.mxu0 0.0
    %2093 = vmatprep.subr.mxu0 0.0
    %2094 = vmatpush1.msra.mxu0 0.0
    %2095 = vmatprep.subr.mxu0 0.0
    %2096 = vmatpush1.msra.mxu0 0.0
    %2097 = vmatprep.subr.mxu0 0.0
    %2098 = vmatpush1.msra.mxu0 0.0
    %2099 = vmatprep.subr.mxu0 0.0
    %2100 = vmatpush1.msra.mxu0 0.0
    %2101 = vmatprep.subr.mxu0 0.0
    %2102 = vmatpush1.msra.mxu0 0.0
    %2103 = vmatprep.subr.mxu0 0.0
    %2104 = vmatpush1.msra.mxu0 0.0
    %2105 = vmatprep.subr.mxu0 0.0
    %2106 = vmatpush1.msra.mxu0 0.0
    %2107 = vmatprep.subr.mxu0 0.0
    %2108 = vmatpush1.msra.mxu0 0.0
    %2109 = vmatprep.subr.mxu0 0.0
    %2110 = vmatpush1.msra.mxu0 0.0
    %2111 = vmatprep.subr.mxu0 0.0
    %2112 = vmatpush1.msra.mxu0 0.0
    %2113 = vmatprep.subr.mxu0 0.0
    %2114 = vmatpush1.msra.mxu0 0.0
    %2115 = vmatprep.subr.mxu0 0.0
    %2116 = vmatpush1.msra.mxu0 0.0
    %2117 = vmatprep.subr.mxu0 0.0
    %2118 = vmatpush1.msra.mxu0 0.0
    %2119 = vmatprep.subr.mxu0 0.0
    %2120 = vmatpush1.msra.mxu0 0.0
    %2121 = vmatprep.subr.mxu0 0.0
    %2122 = vmatpush1.msra.mxu0 0.0
    %2123 = vmatprep.subr.mxu0 0.0
    %2124 = vmatpush1.msra.mxu0 0.0
    %2125 = vmatprep.subr.mxu0 0.0
    %2126 = vmatpush1.msra.mxu0 0.0
    %2127 = vmatprep.subr.mxu0 0.0
    %2128 = vmatpush1.msra.mxu0 0.0
    %2129 = vmatprep.subr.mxu0 0.0
    %2130 = vmatpush1.msra.mxu0 0.0
    %2131 = vmatprep.subr.mxu0 0.0
    %2132 = vmatpush1.msra.mxu0 0.0
    %2133 = vmatprep.mubr.f32.mxu0 0.0
    %2134 = vmatmul.mubr.f32.gmra.mrb[0].mxu0 %v2067
    %v2135 = vpop.f32.mrb[0].mxu0
    %v2136 = vadd.f32 0.0, %v2135
    %v2137 = vpop.f32.mrb[0].mxu0
    %2138 = vdwg.mxu0
    %s2139 = scalar_lea.vmem %s31, 24
    %v2140 = vld [vmem:[%s2139] sm:$0xff]
    %v2142 = vsel %vm517, %v2136, 0
    %2144 = vmatprep.subr.mxu0 0.0
    %2145 = vmatpush1.msra.mxu0 %v2140
    %2146 = vmatprep.subr.mxu0 0.0
    %2147 = vmatpush1.msra.mxu0 0.0
    %2148 = vmatprep.subr.mxu0 0.0
    %2149 = vmatpush1.msra.mxu0 0.0
    %2150 = vmatprep.subr.mxu0 0.0
    %2151 = vmatpush1.msra.mxu0 0.0
    %2152 = vmatprep.subr.mxu0 0.0
    %2153 = vmatpush1.msra.mxu0 0.0
    %2154 = vmatprep.subr.mxu0 0.0
    %2155 = vmatpush1.msra.mxu0 0.0
    %2156 = vmatprep.subr.mxu0 0.0
    %2157 = vmatpush1.msra.mxu0 0.0
    %2158 = vmatprep.subr.mxu0 0.0
    %2159 = vmatpush1.msra.mxu0 0.0
    %2160 = vmatprep.subr.mxu0 0.0
    %2161 = vmatpush1.msra.mxu0 0.0
    %2162 = vmatprep.subr.mxu0 0.0
    %2163 = vmatpush1.msra.mxu0 0.0
    %2164 = vmatprep.subr.mxu0 0.0
    %2165 = vmatpush1.msra.mxu0 0.0
    %2166 = vmatprep.subr.mxu0 0.0
    %2167 = vmatpush1.msra.mxu0 0.0
    %2168 = vmatprep.subr.mxu0 0.0
    %2169 = vmatpush1.msra.mxu0 0.0
    %2170 = vmatprep.subr.mxu0 0.0
    %2171 = vmatpush1.msra.mxu0 0.0
    %2172 = vmatprep.subr.mxu0 0.0
    %2173 = vmatpush1.msra.mxu0 0.0
    %2174 = vmatprep.subr.mxu0 0.0
    %2175 = vmatpush1.msra.mxu0 0.0
    %2176 = vmatprep.subr.mxu0 0.0
    %2177 = vmatpush1.msra.mxu0 0.0
    %2178 = vmatprep.subr.mxu0 0.0
    %2179 = vmatpush1.msra.mxu0 0.0
    %2180 = vmatprep.subr.mxu0 0.0
    %2181 = vmatpush1.msra.mxu0 0.0
    %2182 = vmatprep.subr.mxu0 0.0
    %2183 = vmatpush1.msra.mxu0 0.0
    %2184 = vmatprep.subr.mxu0 0.0
    %2185 = vmatpush1.msra.mxu0 0.0
    %2186 = vmatprep.subr.mxu0 0.0
    %2187 = vmatpush1.msra.mxu0 0.0
    %2188 = vmatprep.subr.mxu0 0.0
    %2189 = vmatpush1.msra.mxu0 0.0
    %2190 = vmatprep.subr.mxu0 0.0
    %2191 = vmatpush1.msra.mxu0 0.0
    %2192 = vmatprep.subr.mxu0 0.0
    %2193 = vmatpush1.msra.mxu0 0.0
    %2194 = vmatprep.subr.mxu0 0.0
    %2195 = vmatpush1.msra.mxu0 0.0
    %2196 = vmatprep.subr.mxu0 0.0
    %2197 = vmatpush1.msra.mxu0 0.0
    %2198 = vmatprep.subr.mxu0 0.0
    %2199 = vmatpush1.msra.mxu0 0.0
    %2200 = vmatprep.subr.mxu0 0.0
    %2201 = vmatpush1.msra.mxu0 0.0
    %2202 = vmatprep.subr.mxu0 0.0
    %2203 = vmatpush1.msra.mxu0 0.0
    %2204 = vmatprep.subr.mxu0 0.0
    %2205 = vmatpush1.msra.mxu0 0.0
    %2206 = vmatprep.subr.mxu0 0.0
    %2207 = vmatpush1.msra.mxu0 0.0
    %2208 = vmatprep.mubr.f32.mxu0 0.0
    %2209 = vmatmul.mubr.f32.gmra.mrb[0].mxu0 %v2142
    %v2210 = vpop.f32.mrb[0].mxu0
    %v2211 = vadd.f32 0.0, %v2210
    %v2212 = vpop.f32.mrb[0].mxu0
    %2213 = vdwg.mxu0
    %v2214 = vadd.f32 %v1727, %v2211
    %v2216 = vlaneseq
    %v2217 = vshrl.u32 %v2216, 7
    %v2218 = vsub.s32 0, %v2217
    %v2219 = vrot.slane %v262, %v2218
    %v2221 = vadd.f32 %v2214, %v2219
    %v2222 = vadd.f32 %v2221, %v261
    %v2223 = vsel %vm187, %v2222, 0.0
    %2224 = vadd.xlane.f32.xlu0 %v2223
    %v2225 = vpop.xlane.xlu0 %2224
    %v2226 = vrcp.pop 32.0
    %v2227 = vmul.f32 %v2225, %v2226
    %v2228 = vsub.f32 %v2222, %v2227
    %v2229 = vmul.f32 %v2228, %v2228
    %v2230 = vsel %vm187, %v2229, 0.0
    %2231 = vadd.xlane.f32.xlu0 %v2230
    %v2232 = vpop.xlane.xlu0 %2231
    %v2233 = vmul.f32 %v2232, %v2226
    %v2234 = vadd.f32 %v2233, 1e-05
    %v2235 = vrsqrt.pop %v2234
    %v2236 = vmul.f32 %v2228, %v2235
    %v2238 = vlaneseq
    %v2239 = vshrl.u32 %v2238, 7
    %v2240 = vsub.s32 0, %v2239
    %v2241 = vrot.slane %v263, %v2240
    %v2243 = vmul.f32 %v2236, %v2241
    %v2245 = vlaneseq
    %v2246 = vshrl.u32 %v2245, 7
    %v2247 = vsub.s32 0, %v2246
    %v2248 = vrot.slane %v264, %v2247
    %v2250 = vadd.f32 %v2243, %v2248
    %v2251 = vld [vmem:[%s39] sm:$0xff]
    %v2252 = vld [vmem:[%s39 + $0x8] sm:$0xff]
    %v2253 = vld [vmem:[%s39 + $0x10] sm:$0xff]
    %v2254 = vld [vmem:[%s39 + $0x18] sm:$0xff]
    %v2255 = vld [vmem:[%s41] sm:$0x1]
    %v2256 = vld [vmem:[%s43] sm:$0xff]
    %v2257 = vld [vmem:[%s43 + $0x8] sm:$0xff]
    %v2258 = vld [vmem:[%s43 + $0x10] sm:$0xff]
    %v2259 = vld [vmem:[%s43 + $0x18] sm:$0xff]
    %v2260 = vld [vmem:[%s43 + $0x20] sm:$0xff]
    %v2261 = vld [vmem:[%s43 + $0x28] sm:$0xff]
    %v2262 = vld [vmem:[%s43 + $0x30] sm:$0xff]
    %v2263 = vld [vmem:[%s43 + $0x38] sm:$0xff]
    %v2264 = vld [vmem:[%s45] sm:$0x1]
    %v2265 = vld [vmem:[%s47] sm:$0x1]
    %v2266 = vld [vmem:[%s49] sm:$0x1]
    %v2268 = vlaneseq
    %v2269 = vshrl.u32 %v2268, 7
    %v2270 = vsub.s32 0, %v2269
    %v2271 = vrot.slane %v2255, %v2270
    %v2274 = vsel %vm187, %v2250, 0
    %2276 = vmatprep.subr.mxu0 0.0
    %2277 = vmatpush1.msra.mxu0 %v2251
    %2278 = vmatprep.subr.mxu0 0.0
    %2279 = vmatpush1.msra.mxu0 %v2252
    %2280 = vmatprep.subr.mxu0 0.0
    %2281 = vmatpush1.msra.mxu0 %v2253
    %2282 = vmatprep.subr.mxu0 0.0
    %2283 = vmatpush1.msra.mxu0 %v2254
    %2284 = vmatprep.subr.mxu0 0.0
    %2285 = vmatpush1.msra.mxu0 0.0
    %2286 = vmatprep.subr.mxu0 0.0
    %2287 = vmatpush1.msra.mxu0 0.0
    %2288 = vmatprep.subr.mxu0 0.0
    %2289 = vmatpush1.msra.mxu0 0.0
    %2290 = vmatprep.subr.mxu0 0.0
    %2291 = vmatpush1.msra.mxu0 0.0
    %2292 = vmatprep.subr.mxu0 0.0
    %2293 = vmatpush1.msra.mxu0 0.0
    %2294 = vmatprep.subr.mxu0 0.0
    %2295 = vmatpush1.msra.mxu0 0.0
    %2296 = vmatprep.subr.mxu0 0.0
    %2297 = vmatpush1.msra.mxu0 0.0
    %2298 = vmatprep.subr.mxu0 0.0
    %2299 = vmatpush1.msra.mxu0 0.0
    %2300 = vmatprep.subr.mxu0 0.0
    %2301 = vmatpush1.msra.mxu0 0.0
    %2302 = vmatprep.subr.mxu0 0.0
    %2303 = vmatpush1.msra.mxu0 0.0
    %2304 = vmatprep.subr.mxu0 0.0
    %2305 = vmatpush1.msra.mxu0 0.0
    %2306 = vmatprep.subr.mxu0 0.0
    %2307 = vmatpush1.msra.mxu0 0.0
    %2308 = vmatprep.subr.mxu0 0.0
    %2309 = vmatpush1.msra.mxu0 0.0
    %2310 = vmatprep.subr.mxu0 0.0
    %2311 = vmatpush1.msra.mxu0 0.0
    %2312 = vmatprep.subr.mxu0 0.0
    %2313 = vmatpush1.msra.mxu0 0.0
    %2314 = vmatprep.subr.mxu0 0.0
    %2315 = vmatpush1.msra.mxu0 0.0
    %2316 = vmatprep.subr.mxu0 0.0
    %2317 = vmatpush1.msra.mxu0 0.0
    %2318 = vmatprep.subr.mxu0 0.0
    %2319 = vmatpush1.msra.mxu0 0.0
    %2320 = vmatprep.subr.mxu0 0.0
    %2321 = vmatpush1.msra.mxu0 0.0
    %2322 = vmatprep.subr.mxu0 0.0
    %2323 = vmatpush1.msra.mxu0 0.0
    %2324 = vmatprep.subr.mxu0 0.0
    %2325 = vmatpush1.msra.mxu0 0.0
    %2326 = vmatprep.subr.mxu0 0.0
    %2327 = vmatpush1.msra.mxu0 0.0
    %2328 = vmatprep.subr.mxu0 0.0
    %2329 = vmatpush1.msra.mxu0 0.0
    %2330 = vmatprep.subr.mxu0 0.0
    %2331 = vmatpush1.msra.mxu0 0.0
    %2332 = vmatprep.subr.mxu0 0.0
    %2333 = vmatpush1.msra.mxu0 0.0
    %2334 = vmatprep.subr.mxu0 0.0
    %2335 = vmatpush1.msra.mxu0 0.0
    %2336 = vmatprep.subr.mxu0 0.0
    %2337 = vmatpush1.msra.mxu0 0.0
    %2338 = vmatprep.subr.mxu0 0.0
    %2339 = vmatpush1.msra.mxu0 0.0
    %2340 = vmatprep.mubr.f32.mxu0 0.0
    %2341 = vmatmul.mubr.f32.gmra.mrb[0].mxu0 %v2274
    %v2342 = vpop.f32.mrb[0].mxu0
    %v2343 = vadd.f32 %v2271, %v2342
    %v2344 = vpop.f32.mrb[0].mxu0
    %2345 = vdwg.mxu0
    %v2346 = vmax.f32 %v2343, 0.0
    %v2348 = vlaneseq
    %v2349 = vshrl.u32 %v2348, 7
    %v2350 = vsub.s32 0, %v2349
    %v2351 = vrot.slane %v2264, %v2350
    %vm2353 = vcmask 523264
    %v2355 = vsel %vm2353, %v2346, 0
    %2357 = vmatprep.subr.mxu0 0.0
    %2358 = vmatpush1.msra.mxu0 %v2256
    %2359 = vmatprep.subr.mxu0 0.0
    %2360 = vmatpush1.msra.mxu0 %v2257
    %2361 = vmatprep.subr.mxu0 0.0
    %2362 = vmatpush1.msra.mxu0 %v2258
    %2363 = vmatprep.subr.mxu0 0.0
    %2364 = vmatpush1.msra.mxu0 %v2259
    %2365 = vmatprep.subr.mxu0 0.0
    %2366 = vmatpush1.msra.mxu0 %v2260
    %2367 = vmatprep.subr.mxu0 0.0
    %2368 = vmatpush1.msra.mxu0 %v2261
    %2369 = vmatprep.subr.mxu0 0.0
    %2370 = vmatpush1.msra.mxu0 %v2262
    %2371 = vmatprep.subr.mxu0 0.0
    %2372 = vmatpush1.msra.mxu0 %v2263
    %2373 = vmatprep.subr.mxu0 0.0
    %2374 = vmatpush1.msra.mxu0 0.0
    %2375 = vmatprep.subr.mxu0 0.0
    %2376 = vmatpush1.msra.mxu0 0.0
    %2377 = vmatprep.subr.mxu0 0.0
    %2378 = vmatpush1.msra.mxu0 0.0
    %2379 = vmatprep.subr.mxu0 0.0
    %2380 = vmatpush1.msra.mxu0 0.0
    %2381 = vmatprep.subr.mxu0 0.0
    %2382 = vmatpush1.msra.mxu0 0.0
    %2383 = vmatprep.subr.mxu0 0.0
    %2384 = vmatpush1.msra.mxu0 0.0
    %2385 = vmatprep.subr.mxu0 0.0
    %2386 = vmatpush1.msra.mxu0 0.0
    %2387 = vmatprep.subr.mxu0 0.0
    %2388 = vmatpush1.msra.mxu0 0.0
    %2389 = vmatprep.subr.mxu0 0.0
    %2390 = vmatpush1.msra.mxu0 0.0
    %2391 = vmatprep.subr.mxu0 0.0
    %2392 = vmatpush1.msra.mxu0 0.0
    %2393 = vmatprep.subr.mxu0 0.0
    %2394 = vmatpush1.msra.mxu0 0.0
    %2395 = vmatprep.subr.mxu0 0.0
    %2396 = vmatpush1.msra.mxu0 0.0
    %2397 = vmatprep.subr.mxu0 0.0
    %2398 = vmatpush1.msra.mxu0 0.0
    %2399 = vmatprep.subr.mxu0 0.0
    %2400 = vmatpush1.msra.mxu0 0.0
    %2401 = vmatprep.subr.mxu0 0.0
    %2402 = vmatpush1.msra.mxu0 0.0
    %2403 = vmatprep.subr.mxu0 0.0
    %2404 = vmatpush1.msra.mxu0 0.0
    %2405 = vmatprep.subr.mxu0 0.0
    %2406 = vmatpush1.msra.mxu0 0.0
    %2407 = vmatprep.subr.mxu0 0.0
    %2408 = vmatpush1.msra.mxu0 0.0
    %2409 = vmatprep.subr.mxu0 0.0
    %2410 = vmatpush1.msra.mxu0 0.0
    %2411 = vmatprep.subr.mxu0 0.0
    %2412 = vmatpush1.msra.mxu0 0.0
    %2413 = vmatprep.subr.mxu0 0.0
    %2414 = vmatpush1.msra.mxu0 0.0
    %2415 = vmatprep.subr.mxu0 0.0
    %2416 = vmatpush1.msra.mxu0 0.0
    %2417 = vmatprep.subr.mxu0 0.0
    %2418 = vmatpush1.msra.mxu0 0.0
    %2419 = vmatprep.subr.mxu0 0.0
    %2420 = vmatpush1.msra.mxu0 0.0
    %2421 = vmatprep.mubr.f32.mxu0 0.0
    %2422 = vmatmul.mubr.f32.gmra.mrb[0].mxu0 %v2355
    %v2423 = vpop.f32.mrb[0].mxu0
    %v2424 = vadd.f32 %v2351, %v2423
    %v2425 = vpop.f32.mrb[0].mxu0
    %2426 = vdwg.mxu0
    %v2427 = vadd.f32 %v2424, %v2250
    %v2428 = vsel %vm187, %v2427, 0.0
    %2429 = vadd.xlane.f32.xlu0 %v2428
    %v2430 = vpop.xlane.xlu0 %2429
    %v2431 = vmul.f32 %v2430, %v2226
    %v2432 = vsub.f32 %v2427, %v2431
    %v2433 = vmul.f32 %v2432, %v2432
    %v2434 = vsel %vm187, %v2433, 0.0
    %2435 = vadd.xlane.f32.xlu0 %v2434
    %v2436 = vpop.xlane.xlu0 %2435
    %v2437 = vmul.f32 %v2436, %v2226
    %v2438 = vadd.f32 %v2437, 1e-05
    %v2439 = vrsqrt.pop %v2438
    %v2440 = vmul.f32 %v2432, %v2439
    %v2442 = vlaneseq
    %v2443 = vshrl.u32 %v2442, 7
    %v2444 = vsub.s32 0, %v2443
    %v2445 = vrot.slane %v2265, %v2444
    %v2447 = vmul.f32 %v2440, %v2445
    %v2449 = vlaneseq
    %v2450 = vshrl.u32 %v2449, 7
    %v2451 = vsub.s32 0, %v2450
    %v2452 = vrot.slane %v2266, %v2451
    %v2454 = vadd.f32 %v2447, %v2452
    %v2455 = vld [vmem:[%s15] sm:$0xff]
    %v2456 = vld [vmem:[%s15 + $0x8] sm:$0xff]
    %v2457 = vld [vmem:[%s15 + $0x10] sm:$0xff]
    %v2458 = vld [vmem:[%s15 + $0x18] sm:$0xff]
    %v2459 = vld [vmem:[%s17] sm:$0x1]
    %v2461 = vlaneseq
    %v2462 = vshrl.u32 %v2461, 7
    %v2463 = vsub.s32 0, %v2462
    %v2464 = vrot.slane %v2459, %v2463
    %v2467 = vsel %vm187, %v2454, 0
    %2469 = vmatprep.subr.mxu0 0.0
    %2470 = vmatpush1.msra.mxu0 %v2455
    %2471 = vmatprep.subr.mxu0 0.0
    %2472 = vmatpush1.msra.mxu0 %v2456
    %2473 = vmatprep.subr.mxu0 0.0
    %2474 = vmatpush1.msra.mxu0 %v2457
    %2475 = vmatprep.subr.mxu0 0.0
    %2476 = vmatpush1.msra.mxu0 %v2458
    %2477 = vmatprep.subr.mxu0 0.0
    %2478 = vmatpush1.msra.mxu0 0.0
    %2479 = vmatprep.subr.mxu0 0.0
    %2480 = vmatpush1.msra.mxu0 0.0
    %2481 = vmatprep.subr.mxu0 0.0
    %2482 = vmatpush1.msra.mxu0 0.0
    %2483 = vmatprep.subr.mxu0 0.0
    %2484 = vmatpush1.msra.mxu0 0.0
    %2485 = vmatprep.subr.mxu0 0.0
    %2486 = vmatpush1.msra.mxu0 0.0
    %2487 = vmatprep.subr.mxu0 0.0
    %2488 = vmatpush1.msra.mxu0 0.0
    %2489 = vmatprep.subr.mxu0 0.0
    %2490 = vmatpush1.msra.mxu0 0.0
    %2491 = vmatprep.subr.mxu0 0.0
    %2492 = vmatpush1.msra.mxu0 0.0
    %2493 = vmatprep.subr.mxu0 0.0
    %2494 = vmatpush1.msra.mxu0 0.0
    %2495 = vmatprep.subr.mxu0 0.0
    %2496 = vmatpush1.msra.mxu0 0.0
    %2497 = vmatprep.subr.mxu0 0.0
    %2498 = vmatpush1.msra.mxu0 0.0
    %2499 = vmatprep.subr.mxu0 0.0
    %2500 = vmatpush1.msra.mxu0 0.0
    %2501 = vmatprep.subr.mxu0 0.0
    %2502 = vmatpush1.msra.mxu0 0.0
    %2503 = vmatprep.subr.mxu0 0.0
    %2504 = vmatpush1.msra.mxu0 0.0
    %2505 = vmatprep.subr.mxu0 0.0
    %2506 = vmatpush1.msra.mxu0 0.0
    %2507 = vmatprep.subr.mxu0 0.0
    %2508 = vmatpush1.msra.mxu0 0.0
    %2509 = vmatprep.subr.mxu0 0.0
    %2510 = vmatpush1.msra.mxu0 0.0
    %2511 = vmatprep.subr.mxu0 0.0
    %2512 = vmatpush1.msra.mxu0 0.0
    %2513 = vmatprep.subr.mxu0 0.0
    %2514 = vmatpush1.msra.mxu0 0.0
    %2515 = vmatprep.subr.mxu0 0.0
    %2516 = vmatpush1.msra.mxu0 0.0
    %2517 = vmatprep.subr.mxu0 0.0
    %2518 = vmatpush1.msra.mxu0 0.0
    %2519 = vmatprep.subr.mxu0 0.0
    %2520 = vmatpush1.msra.mxu0 0.0
    %2521 = vmatprep.subr.mxu0 0.0
    %2522 = vmatpush1.msra.mxu0 0.0
    %2523 = vmatprep.subr.mxu0 0.0
    %2524 = vmatpush1.msra.mxu0 0.0
    %2525 = vmatprep.subr.mxu0 0.0
    %2526 = vmatpush1.msra.mxu0 0.0
    %2527 = vmatprep.subr.mxu0 0.0
    %2528 = vmatpush1.msra.mxu0 0.0
    %2529 = vmatprep.subr.mxu0 0.0
    %2530 = vmatpush1.msra.mxu0 0.0
    %2531 = vmatprep.subr.mxu0 0.0
    %2532 = vmatpush1.msra.mxu0 0.0
    %2533 = vmatprep.mubr.f32.mxu0 0.0
    %2534 = vmatmul.mubr.f32.gmra.mrb[0].mxu0 %v2467
    %v2535 = vpop.f32.mrb[0].mxu0
    %v2536 = vadd.f32 %v2464, %v2535
    %v2537 = vpop.f32.mrb[0].mxu0
    %2538 = vdwg.mxu0
    %v2539 = vadd.f32 %v2536, %v175
    %v2540 = vld [vmem:[%s65] sm:$0x1]
    %v2541 = vld [vmem:[%s67] sm:$0x1]
    %v2542 = vld [vmem:[%s69] sm:$0x1]
    %v2543 = vld [vmem:[%s51] sm:$0xff]
    %v2544 = vld [vmem:[%s51 + $0x8] sm:$0xff]
    %v2545 = vld [vmem:[%s51 + $0x10] sm:$0xff]
    %v2546 = vld [vmem:[%s51 + $0x18] sm:$0xff]
    %v2547 = vld [vmem:[%s53] sm:$0x1]
    %v2549 = vlaneseq
    %v2550 = vshrl.u32 %v2549, 7
    %v2551 = vsub.s32 0, %v2550
    %v2552 = vrot.slane %v2547, %v2551
    %v2555 = vsel %vm187, %v2539, 0
    %2557 = vmatprep.subr.mxu0 0.0
    %2558 = vmatpush1.msra.mxu0 %v2543
    %2559 = vmatprep.subr.mxu0 0.0
    %2560 = vmatpush1.msra.mxu0 %v2544
    %2561 = vmatprep.subr.mxu0 0.0
    %2562 = vmatpush1.msra.mxu0 %v2545
    %2563 = vmatprep.subr.mxu0 0.0
    %2564 = vmatpush1.msra.mxu0 %v2546
    %2565 = vmatprep.subr.mxu0 0.0
    %2566 = vmatpush1.msra.mxu0 0.0
    %2567 = vmatprep.subr.mxu0 0.0
    %2568 = vmatpush1.msra.mxu0 0.0
    %2569 = vmatprep.subr.mxu0 0.0
    %2570 = vmatpush1.msra.mxu0 0.0
    %2571 = vmatprep.subr.mxu0 0.0
    %2572 = vmatpush1.msra.mxu0 0.0
    %2573 = vmatprep.subr.mxu0 0.0
    %2574 = vmatpush1.msra.mxu0 0.0
    %2575 = vmatprep.subr.mxu0 0.0
    %2576 = vmatpush1.msra.mxu0 0.0
    %2577 = vmatprep.subr.mxu0 0.0
    %2578 = vmatpush1.msra.mxu0 0.0
    %2579 = vmatprep.subr.mxu0 0.0
    %2580 = vmatpush1.msra.mxu0 0.0
    %2581 = vmatprep.subr.mxu0 0.0
    %2582 = vmatpush1.msra.mxu0 0.0
    %2583 = vmatprep.subr.mxu0 0.0
    %2584 = vmatpush1.msra.mxu0 0.0
    %2585 = vmatprep.subr.mxu0 0.0
    %2586 = vmatpush1.msra.mxu0 0.0
    %2587 = vmatprep.subr.mxu0 0.0
    %2588 = vmatpush1.msra.mxu0 0.0
    %2589 = vmatprep.subr.mxu0 0.0
    %2590 = vmatpush1.msra.mxu0 0.0
    %2591 = vmatprep.subr.mxu0 0.0
    %2592 = vmatpush1.msra.mxu0 0.0
    %2593 = vmatprep.subr.mxu0 0.0
    %2594 = vmatpush1.msra.mxu0 0.0
    %2595 = vmatprep.subr.mxu0 0.0
    %2596 = vmatpush1.msra.mxu0 0.0
    %2597 = vmatprep.subr.mxu0 0.0
    %2598 = vmatpush1.msra.mxu0 0.0
    %2599 = vmatprep.subr.mxu0 0.0
    %2600 = vmatpush1.msra.mxu0 0.0
    %2601 = vmatprep.subr.mxu0 0.0
    %2602 = vmatpush1.msra.mxu0 0.0
    %2603 = vmatprep.subr.mxu0 0.0
    %2604 = vmatpush1.msra.mxu0 0.0
    %2605 = vmatprep.subr.mxu0 0.0
    %2606 = vmatpush1.msra.mxu0 0.0
    %2607 = vmatprep.subr.mxu0 0.0
    %2608 = vmatpush1.msra.mxu0 0.0
    %2609 = vmatprep.subr.mxu0 0.0
    %2610 = vmatpush1.msra.mxu0 0.0
    %2611 = vmatprep.subr.mxu0 0.0
    %2612 = vmatpush1.msra.mxu0 0.0
    %2613 = vmatprep.subr.mxu0 0.0
    %2614 = vmatpush1.msra.mxu0 0.0
    %2615 = vmatprep.subr.mxu0 0.0
    %2616 = vmatpush1.msra.mxu0 0.0
    %2617 = vmatprep.subr.mxu0 0.0
    %2618 = vmatpush1.msra.mxu0 0.0
    %2619 = vmatprep.subr.mxu0 0.0
    %2620 = vmatpush1.msra.mxu0 0.0
    %2621 = vmatprep.mubr.f32.mxu0 0.0
    %2622 = vmatmul.mubr.f32.gmra.mrb[0].mxu0 %v2555
    %v2623 = vpop.f32.mrb[0].mxu0
    %v2624 = vadd.f32 %v2552, %v2623
    %v2625 = vpop.f32.mrb[0].mxu0
    %2626 = vdwg.mxu0
    %v2627 = vld [vmem:[%s55] sm:$0xff]
    %v2628 = vld [vmem:[%s55 + $0x8] sm:$0xff]
    %v2629 = vld [vmem:[%s55 + $0x10] sm:$0xff]
    %v2630 = vld [vmem:[%s55 + $0x18] sm:$0xff]
    %v2631 = vld [vmem:[%s57] sm:$0x1]
    %v2633 = vlaneseq
    %v2634 = vshrl.u32 %v2633, 7
    %v2635 = vsub.s32 0, %v2634
    %v2636 = vrot.slane %v2631, %v2635
    %2638 = vmatprep.subr.mxu0 0.0
    %2639 = vmatpush1.msra.mxu0 %v2627
    %2640 = vmatprep.subr.mxu0 0.0
    %2641 = vmatpush1.msra.mxu0 %v2628
    %2642 = vmatprep.subr.mxu0 0.0
    %2643 = vmatpush1.msra.mxu0 %v2629
    %2644 = vmatprep.subr.mxu0 0.0
    %2645 = vmatpush1.msra.mxu0 %v2630
    %2646 = vmatprep.subr.mxu0 0.0
    %2647 = vmatpush1.msra.mxu0 0.0
    %2648 = vmatprep.subr.mxu0 0.0
    %2649 = vmatpush1.msra.mxu0 0.0
    %2650 = vmatprep.subr.mxu0 0.0
    %2651 = vmatpush1.msra.mxu0 0.0
    %2652 = vmatprep.subr.mxu0 0.0
    %2653 = vmatpush1.msra.mxu0 0.0
    %2654 = vmatprep.subr.mxu0 0.0
    %2655 = vmatpush1.msra.mxu0 0.0
    %2656 = vmatprep.subr.mxu0 0.0
    %2657 = vmatpush1.msra.mxu0 0.0
    %2658 = vmatprep.subr.mxu0 0.0
    %2659 = vmatpush1.msra.mxu0 0.0
    %2660 = vmatprep.subr.mxu0 0.0
    %2661 = vmatpush1.msra.mxu0 0.0
    %2662 = vmatprep.subr.mxu0 0.0
    %2663 = vmatpush1.msra.mxu0 0.0
    %2664 = vmatprep.subr.mxu0 0.0
    %2665 = vmatpush1.msra.mxu0 0.0
    %2666 = vmatprep.subr.mxu0 0.0
    %2667 = vmatpush1.msra.mxu0 0.0
    %2668 = vmatprep.subr.mxu0 0.0
    %2669 = vmatpush1.msra.mxu0 0.0
    %2670 = vmatprep.subr.mxu0 0.0
    %2671 = vmatpush1.msra.mxu0 0.0
    %2672 = vmatprep.subr.mxu0 0.0
    %2673 = vmatpush1.msra.mxu0 0.0
    %2674 = vmatprep.subr.mxu0 0.0
    %2675 = vmatpush1.msra.mxu0 0.0
    %2676 = vmatprep.subr.mxu0 0.0
    %2677 = vmatpush1.msra.mxu0 0.0
    %2678 = vmatprep.subr.mxu0 0.0
    %2679 = vmatpush1.msra.mxu0 0.0
    %2680 = vmatprep.subr.mxu0 0.0
    %2681 = vmatpush1.msra.mxu0 0.0
    %2682 = vmatprep.subr.mxu0 0.0
    %2683 = vmatpush1.msra.mxu0 0.0
    %2684 = vmatprep.subr.mxu0 0.0
    %2685 = vmatpush1.msra.mxu0 0.0
    %2686 = vmatprep.subr.mxu0 0.0
    %2687 = vmatpush1.msra.mxu0 0.0
    %2688 = vmatprep.subr.mxu0 0.0
    %2689 = vmatpush1.msra.mxu0 0.0
    %2690 = vmatprep.subr.mxu0 0.0
    %2691 = vmatpush1.msra.mxu0 0.0
    %2692 = vmatprep.subr.mxu0 0.0
    %2693 = vmatpush1.msra.mxu0 0.0
    %2694 = vmatprep.subr.mxu0 0.0
    %2695 = vmatpush1.msra.mxu0 0.0
    %2696 = vmatprep.subr.mxu0 0.0
    %2697 = vmatpush1.msra.mxu0 0.0
    %2698 = vmatprep.subr.mxu0 0.0
    %2699 = vmatpush1.msra.mxu0 0.0
    %2700 = vmatprep.subr.mxu0 0.0
    %2701 = vmatpush1.msra.mxu0 0.0
    %2702 = vmatprep.mubr.f32.mxu0 0.0
    %2703 = vmatmul.mubr.f32.gmra.mrb[0].mxu0 %v361
    %v2704 = vpop.f32.mrb[0].mxu0
    %v2705 = vadd.f32 %v2636, %v2704
    %v2706 = vpop.f32.mrb[0].mxu0
    %2707 = vdwg.mxu0
    %v2708 = vld [vmem:[%s59] sm:$0xff]
    %v2709 = vld [vmem:[%s59 + $0x8] sm:$0xff]
    %v2710 = vld [vmem:[%s59 + $0x10] sm:$0xff]
    %v2711 = vld [vmem:[%s59 + $0x18] sm:$0xff]
    %v2712 = vld [vmem:[%s61] sm:$0x1]
    %v2714 = vlaneseq
    %v2715 = vshrl.u32 %v2714, 7
    %v2716 = vsub.s32 0, %v2715
    %v2717 = vrot.slane %v2712, %v2716
    %2719 = vmatprep.subr.mxu0 0.0
    %2720 = vmatpush1.msra.mxu0 %v2708
    %2721 = vmatprep.subr.mxu0 0.0
    %2722 = vmatpush1.msra.mxu0 %v2709
    %2723 = vmatprep.subr.mxu0 0.0
    %2724 = vmatpush1.msra.mxu0 %v2710
    %2725 = vmatprep.subr.mxu0 0.0
    %2726 = vmatpush1.msra.mxu0 %v2711
    %2727 = vmatprep.subr.mxu0 0.0
    %2728 = vmatpush1.msra.mxu0 0.0
    %2729 = vmatprep.subr.mxu0 0.0
    %2730 = vmatpush1.msra.mxu0 0.0
    %2731 = vmatprep.subr.mxu0 0.0
    %2732 = vmatpush1.msra.mxu0 0.0
    %2733 = vmatprep.subr.mxu0 0.0
    %2734 = vmatpush1.msra.mxu0 0.0
    %2735 = vmatprep.subr.mxu0 0.0
    %2736 = vmatpush1.msra.mxu0 0.0
    %2737 = vmatprep.subr.mxu0 0.0
    %2738 = vmatpush1.msra.mxu0 0.0
    %2739 = vmatprep.subr.mxu0 0.0
    %2740 = vmatpush1.msra.mxu0 0.0
    %2741 = vmatprep.subr.mxu0 0.0
    %2742 = vmatpush1.msra.mxu0 0.0
    %2743 = vmatprep.subr.mxu0 0.0
    %2744 = vmatpush1.msra.mxu0 0.0
    %2745 = vmatprep.subr.mxu0 0.0
    %2746 = vmatpush1.msra.mxu0 0.0
    %2747 = vmatprep.subr.mxu0 0.0
    %2748 = vmatpush1.msra.mxu0 0.0
    %2749 = vmatprep.subr.mxu0 0.0
    %2750 = vmatpush1.msra.mxu0 0.0
    %2751 = vmatprep.subr.mxu0 0.0
    %2752 = vmatpush1.msra.mxu0 0.0
    %2753 = vmatprep.subr.mxu0 0.0
    %2754 = vmatpush1.msra.mxu0 0.0
    %2755 = vmatprep.subr.mxu0 0.0
    %2756 = vmatpush1.msra.mxu0 0.0
    %2757 = vmatprep.subr.mxu0 0.0
    %2758 = vmatpush1.msra.mxu0 0.0
    %2759 = vmatprep.subr.mxu0 0.0
    %2760 = vmatpush1.msra.mxu0 0.0
    %2761 = vmatprep.subr.mxu0 0.0
    %2762 = vmatpush1.msra.mxu0 0.0
    %2763 = vmatprep.subr.mxu0 0.0
    %2764 = vmatpush1.msra.mxu0 0.0
    %2765 = vmatprep.subr.mxu0 0.0
    %2766 = vmatpush1.msra.mxu0 0.0
    %2767 = vmatprep.subr.mxu0 0.0
    %2768 = vmatpush1.msra.mxu0 0.0
    %2769 = vmatprep.subr.mxu0 0.0
    %2770 = vmatpush1.msra.mxu0 0.0
    %2771 = vmatprep.subr.mxu0 0.0
    %2772 = vmatpush1.msra.mxu0 0.0
    %2773 = vmatprep.subr.mxu0 0.0
    %2774 = vmatpush1.msra.mxu0 0.0
    %2775 = vmatprep.subr.mxu0 0.0
    %2776 = vmatpush1.msra.mxu0 0.0
    %2777 = vmatprep.subr.mxu0 0.0
    %2778 = vmatpush1.msra.mxu0 0.0
    %2779 = vmatprep.subr.mxu0 0.0
    %2780 = vmatpush1.msra.mxu0 0.0
    %2781 = vmatprep.subr.mxu0 0.0
    %2782 = vmatpush1.msra.mxu0 0.0
    %2783 = vmatprep.mubr.f32.mxu0 0.0
    %2784 = vmatmul.mubr.f32.gmra.mrb[0].mxu0 %v445
    %v2785 = vpop.f32.mrb[0].mxu0
    %v2786 = vadd.f32 %v2717, %v2785
    %v2787 = vpop.f32.mrb[0].mxu0
    %2788 = vdwg.mxu0
    %v2790 = vsel %vm517, %v2624, 0
    %v2793 = vsel %vm517, %v2705, 0
    %2795 = vmatprep.subr.mxu0 0.0
    %2796 = vmatpush1.xpose.msra.mxu0 %v2793
    %2797 = vmatprep.subr.mxu0 0.0
    %2798 = vmatpush1.xpose.msra.mxu0 0.0
    %2799 = vmatprep.subr.mxu0 0.0
    %2800 = vmatpush1.xpose.msra.mxu0 0.0
    %2801 = vmatprep.subr.mxu0 0.0
    %2802 = vmatpush1.xpose.msra.mxu0 0.0
    %2803 = vmatprep.subr.mxu0 0.0
    %2804 = vmatpush1.xpose.msra.mxu0 0.0
    %2805 = vmatprep.subr.mxu0 0.0
    %2806 = vmatpush1.xpose.msra.mxu0 0.0
    %2807 = vmatprep.subr.mxu0 0.0
    %2808 = vmatpush1.xpose.msra.mxu0 0.0
    %2809 = vmatprep.subr.mxu0 0.0
    %2810 = vmatpush1.xpose.msra.mxu0 0.0
    %2811 = vmatprep.subr.mxu0 0.0
    %2812 = vmatpush1.xpose.msra.mxu0 0.0
    %2813 = vmatprep.subr.mxu0 0.0
    %2814 = vmatpush1.xpose.msra.mxu0 0.0
    %2815 = vmatprep.subr.mxu0 0.0
    %2816 = vmatpush1.xpose.msra.mxu0 0.0
    %2817 = vmatprep.subr.mxu0 0.0
    %2818 = vmatpush1.xpose.msra.mxu0 0.0
    %2819 = vmatprep.subr.mxu0 0.0
    %2820 = vmatpush1.xpose.msra.mxu0 0.0
    %2821 = vmatprep.subr.mxu0 0.0
    %2822 = vmatpush1.xpose.msra.mxu0 0.0
    %2823 = vmatprep.subr.mxu0 0.0
    %2824 = vmatpush1.xpose.msra.mxu0 0.0
    %2825 = vmatprep.subr.mxu0 0.0
    %2826 = vmatpush1.xpose.msra.mxu0 0.0
    %2827 = vmatprep.subr.mxu0 0.0
    %2828 = vmatpush1.xpose.msra.mxu0 0.0
    %2829 = vmatprep.subr.mxu0 0.0
    %2830 = vmatpush1.xpose.msra.mxu0 0.0
    %2831 = vmatprep.subr.mxu0 0.0
    %2832 = vmatpush1.xpose.msra.mxu0 0.0
    %2833 = vmatprep.subr.mxu0 0.0
    %2834 = vmatpush1.xpose.msra.mxu0 0.0
    %2835 = vmatprep.subr.mxu0 0.0
    %2836 = vmatpush1.xpose.msra.mxu0 0.0
    %2837 = vmatprep.subr.mxu0 0.0
    %2838 = vmatpush1.xpose.msra.mxu0 0.0
    %2839 = vmatprep.subr.mxu0 0.0
    %2840 = vmatpush1.xpose.msra.mxu0 0.0
    %2841 = vmatprep.subr.mxu0 0.0
    %2842 = vmatpush1.xpose.msra.mxu0 0.0
    %2843 = vmatprep.subr.mxu0 0.0
    %2844 = vmatpush1.xpose.msra.mxu0 0.0
    %2845 = vmatprep.subr.mxu0 0.0
    %2846 = vmatpush1.xpose.msra.mxu0 0.0
    %2847 = vmatprep.subr.mxu0 0.0
    %2848 = vmatpush1.xpose.msra.mxu0 0.0
    %2849 = vmatprep.subr.mxu0 0.0
    %2850 = vmatpush1.xpose.msra.mxu0 0.0
    %2851 = vmatprep.subr.mxu0 0.0
    %2852 = vmatpush1.xpose.msra.mxu0 0.0
    %2853 = vmatprep.subr.mxu0 0.0
    %2854 = vmatpush1.xpose.msra.mxu0 0.0
    %2855 = vmatprep.subr.mxu0 0.0
    %2856 = vmatpush1.xpose.msra.mxu0 0.0
    %2857 = vmatprep.subr.mxu0 0.0
    %2858 = vmatpush1.xpose.msra.mxu0 0.0
    %2859 = vmatprep.mubr.f32.mxu0 0.0
    %2860 = vmatmul.mubr.f32.gmra.mrb[0].mxu0 %v2790
    %v2861 = vpop.f32.mrb[0].mxu0
    %v2862 = vadd.f32 0.0, %v2861
    %v2863 = vpop.f32.mrb[0].mxu0
    %2864 = vdwg.mxu0
    %v2865 = vmul.f32 %v2862, 0.35355338
    %v2866 = vsel %vm595, -1e+09, %v2865
    %v2867 = vsel %vm517, %v2866, -inf
    %2868 = vmax.xlane.f32.xlu0 %v2867
    %v2869 = vpop.xlane.xlu0 %2868
    %v2870 = vsub.f32 %v2866, %v2869
    %v2871 = vmul.f32 %v2870, 1.442695
    %v2872 = vpow.pop %v2871
    %v2873 = vsel %vm517, %v2872, 0.0
    %2874 = vadd.xlane.f32.xlu0 %v2873
    %v2875 = vpop.xlane.xlu0 %2874
    %v2876 = vrcp.pop %v2875
    %v2877 = vmul.f32 %v2872, %v2876
    %v2879 = vsel %vm517, %v2877, 0
    %2881 = vmatprep.subr.mxu0 0.0
    %2882 = vmatpush1.msra.mxu0 %v2786
    %2883 = vmatprep.subr.mxu0 0.0
    %2884 = vmatpush1.msra.mxu0 0.0
    %2885 = vmatprep.subr.mxu0 0.0
    %2886 = vmatpush1.msra.mxu0 0.0
    %2887 = vmatprep.subr.mxu0 0.0
    %2888 = vmatpush1.msra.mxu0 0.0
    %2889 = vmatprep.subr.mxu0 0.0
    %2890 = vmatpush1.msra.mxu0 0.0
    %2891 = vmatprep.subr.mxu0 0.0
    %2892 = vmatpush1.msra.mxu0 0.0
    %2893 = vmatprep.subr.mxu0 0.0
    %2894 = vmatpush1.msra.mxu0 0.0
    %2895 = vmatprep.subr.mxu0 0.0
    %2896 = vmatpush1.msra.mxu0 0.0
    %2897 = vmatprep.subr.mxu0 0.0
    %2898 = vmatpush1.msra.mxu0 0.0
    %2899 = vmatprep.subr.mxu0 0.0
    %2900 = vmatpush1.msra.mxu0 0.0
    %2901 = vmatprep.subr.mxu0 0.0
    %2902 = vmatpush1.msra.mxu0 0.0
    %2903 = vmatprep.subr.mxu0 0.0
    %2904 = vmatpush1.msra.mxu0 0.0
    %2905 = vmatprep.subr.mxu0 0.0
    %2906 = vmatpush1.msra.mxu0 0.0
    %2907 = vmatprep.subr.mxu0 0.0
    %2908 = vmatpush1.msra.mxu0 0.0
    %2909 = vmatprep.subr.mxu0 0.0
    %2910 = vmatpush1.msra.mxu0 0.0
    %2911 = vmatprep.subr.mxu0 0.0
    %2912 = vmatpush1.msra.mxu0 0.0
    %2913 = vmatprep.subr.mxu0 0.0
    %2914 = vmatpush1.msra.mxu0 0.0
    %2915 = vmatprep.subr.mxu0 0.0
    %2916 = vmatpush1.msra.mxu0 0.0
    %2917 = vmatprep.subr.mxu0 0.0
    %2918 = vmatpush1.msra.mxu0 0.0
    %2919 = vmatprep.subr.mxu0 0.0
    %2920 = vmatpush1.msra.mxu0 0.0
    %2921 = vmatprep.subr.mxu0 0.0
    %2922 = vmatpush1.msra.mxu0 0.0
    %2923 = vmatprep.subr.mxu0 0.0
    %2924 = vmatpush1.msra.mxu0 0.0
    %2925 = vmatprep.subr.mxu0 0.0
    %2926 = vmatpush1.msra.mxu0 0.0
    %2927 = vmatprep.subr.mxu0 0.0
    %2928 = vmatpush1.msra.mxu0 0.0
    %2929 = vmatprep.subr.mxu0 0.0
    %2930 = vmatpush1.msra.mxu0 0.0
    %2931 = vmatprep.subr.mxu0 0.0
    %2932 = vmatpush1.msra.mxu0 0.0
    %2933 = vmatprep.subr.mxu0 0.0
    %2934 = vmatpush1.msra.mxu0 0.0
    %2935 = vmatprep.subr.mxu0 0.0
    %2936 = vmatpush1.msra.mxu0 0.0
    %2937 = vmatprep.subr.mxu0 0.0
    %2938 = vmatpush1.msra.mxu0 0.0
    %2939 = vmatprep.subr.mxu0 0.0
    %2940 = vmatpush1.msra.mxu0 0.0
    %2941 = vmatprep.subr.mxu0 0.0
    %2942 = vmatpush1.msra.mxu0 0.0
    %2943 = vmatprep.subr.mxu0 0.0
    %2944 = vmatpush1.msra.mxu0 0.0
    %2945 = vmatprep.mubr.f32.mxu0 0.0
    %2946 = vmatmul.mubr.f32.gmra.mrb[0].mxu0 %v2879
    %v2947 = vpop.f32.mrb[0].mxu0
    %v2948 = vadd.f32 0.0, %v2947
    %v2949 = vpop.f32.mrb[0].mxu0
    %2950 = vdwg.mxu0
    %v2951 = vld [vmem:[%s63] sm:$0xff]
    %s2952 = scalar_lea.vmem %s51, 32
    %v2953 = vld [vmem:[%s2952] sm:$0xff]
    %v2954 = vld [vmem:[%s2952 + $0x8] sm:$0xff]
    %v2955 = vld [vmem:[%s2952 + $0x10] sm:$0xff]
    %v2956 = vld [vmem:[%s2952 + $0x18] sm:$0xff]
    %s2957 = scalar_lea.vmem %s53, 1
    %v2958 = vld [vmem:[%s2957] sm:$0x1]
    %v2960 = vlaneseq
    %v2961 = vshrl.u32 %v2960, 7
    %v2962 = vsub.s32 0, %v2961
    %v2963 = vrot.slane %v2958, %v2962
    %2965 = vmatprep.subr.mxu0 0.0
    %2966 = vmatpush1.msra.mxu0 %v2953
    %2967 = vmatprep.subr.mxu0 0.0
    %2968 = vmatpush1.msra.mxu0 %v2954
    %2969 = vmatprep.subr.mxu0 0.0
    %2970 = vmatpush1.msra.mxu0 %v2955
    %2971 = vmatprep.subr.mxu0 0.0
    %2972 = vmatpush1.msra.mxu0 %v2956
    %2973 = vmatprep.subr.mxu0 0.0
    %2974 = vmatpush1.msra.mxu0 0.0
    %2975 = vmatprep.subr.mxu0 0.0
    %2976 = vmatpush1.msra.mxu0 0.0
    %2977 = vmatprep.subr.mxu0 0.0
    %2978 = vmatpush1.msra.mxu0 0.0
    %2979 = vmatprep.subr.mxu0 0.0
    %2980 = vmatpush1.msra.mxu0 0.0
    %2981 = vmatprep.subr.mxu0 0.0
    %2982 = vmatpush1.msra.mxu0 0.0
    %2983 = vmatprep.subr.mxu0 0.0
    %2984 = vmatpush1.msra.mxu0 0.0
    %2985 = vmatprep.subr.mxu0 0.0
    %2986 = vmatpush1.msra.mxu0 0.0
    %2987 = vmatprep.subr.mxu0 0.0
    %2988 = vmatpush1.msra.mxu0 0.0
    %2989 = vmatprep.subr.mxu0 0.0
    %2990 = vmatpush1.msra.mxu0 0.0
    %2991 = vmatprep.subr.mxu0 0.0
    %2992 = vmatpush1.msra.mxu0 0.0
    %2993 = vmatprep.subr.mxu0 0.0
    %2994 = vmatpush1.msra.mxu0 0.0
    %2995 = vmatprep.subr.mxu0 0.0
    %2996 = vmatpush1.msra.mxu0 0.0
    %2997 = vmatprep.subr.mxu0 0.0
    %2998 = vmatpush1.msra.mxu0 0.0
    %2999 = vmatprep.subr.mxu0 0.0
    %3000 = vmatpush1.msra.mxu0 0.0
    %3001 = vmatprep.subr.mxu0 0.0
    %3002 = vmatpush1.msra.mxu0 0.0
    %3003 = vmatprep.subr.mxu0 0.0
    %3004 = vmatpush1.msra.mxu0 0.0
    %3005 = vmatprep.subr.mxu0 0.0
    %3006 = vmatpush1.msra.mxu0 0.0
    %3007 = vmatprep.subr.mxu0 0.0
    %3008 = vmatpush1.msra.mxu0 0.0
    %3009 = vmatprep.subr.mxu0 0.0
    %3010 = vmatpush1.msra.mxu0 0.0
    %3011 = vmatprep.subr.mxu0 0.0
    %3012 = vmatpush1.msra.mxu0 0.0
    %3013 = vmatprep.subr.mxu0 0.0
    %3014 = vmatpush1.msra.mxu0 0.0
    %3015 = vmatprep.subr.mxu0 0.0
    %3016 = vmatpush1.msra.mxu0 0.0
    %3017 = vmatprep.subr.mxu0 0.0
    %3018 = vmatpush1.msra.mxu0 0.0
    %3019 = vmatprep.subr.mxu0 0.0
    %3020 = vmatpush1.msra.mxu0 0.0
    %3021 = vmatprep.subr.mxu0 0.0
    %3022 = vmatpush1.msra.mxu0 0.0
    %3023 = vmatprep.subr.mxu0 0.0
    %3024 = vmatpush1.msra.mxu0 0.0
    %3025 = vmatprep.subr.mxu0 0.0
    %3026 = vmatpush1.msra.mxu0 0.0
    %3027 = vmatprep.subr.mxu0 0.0
    %3028 = vmatpush1.msra.mxu0 0.0
    %3029 = vmatprep.mubr.f32.mxu0 0.0
    %3030 = vmatmul.mubr.f32.gmra.mrb[0].mxu0 %v2555
    %v3031 = vpop.f32.mrb[0].mxu0
    %v3032 = vadd.f32 %v2963, %v3031
    %v3033 = vpop.f32.mrb[0].mxu0
    %3034 = vdwg.mxu0
    %s3035 = scalar_lea.vmem %s55, 32
    %v3036 = vld [vmem:[%s3035] sm:$0xff]
    %v3037 = vld [vmem:[%s3035 + $0x8] sm:$0xff]
    %v3038 = vld [vmem:[%s3035 + $0x10] sm:$0xff]
    %v3039 = vld [vmem:[%s3035 + $0x18] sm:$0xff]
    %s3040 = scalar_lea.vmem %s57, 1
    %v3041 = vld [vmem:[%s3040] sm:$0x1]
    %v3043 = vlaneseq
    %v3044 = vshrl.u32 %v3043, 7
    %v3045 = vsub.s32 0, %v3044
    %v3046 = vrot.slane %v3041, %v3045
    %3048 = vmatprep.subr.mxu0 0.0
    %3049 = vmatpush1.msra.mxu0 %v3036
    %3050 = vmatprep.subr.mxu0 0.0
    %3051 = vmatpush1.msra.mxu0 %v3037
    %3052 = vmatprep.subr.mxu0 0.0
    %3053 = vmatpush1.msra.mxu0 %v3038
    %3054 = vmatprep.subr.mxu0 0.0
    %3055 = vmatpush1.msra.mxu0 %v3039
    %3056 = vmatprep.subr.mxu0 0.0
    %3057 = vmatpush1.msra.mxu0 0.0
    %3058 = vmatprep.subr.mxu0 0.0
    %3059 = vmatpush1.msra.mxu0 0.0
    %3060 = vmatprep.subr.mxu0 0.0
    %3061 = vmatpush1.msra.mxu0 0.0
    %3062 = vmatprep.subr.mxu0 0.0
    %3063 = vmatpush1.msra.mxu0 0.0
    %3064 = vmatprep.subr.mxu0 0.0
    %3065 = vmatpush1.msra.mxu0 0.0
    %3066 = vmatprep.subr.mxu0 0.0
    %3067 = vmatpush1.msra.mxu0 0.0
    %3068 = vmatprep.subr.mxu0 0.0
    %3069 = vmatpush1.msra.mxu0 0.0
    %3070 = vmatprep.subr.mxu0 0.0
    %3071 = vmatpush1.msra.mxu0 0.0
    %3072 = vmatprep.subr.mxu0 0.0
    %3073 = vmatpush1.msra.mxu0 0.0
    %3074 = vmatprep.subr.mxu0 0.0
    %3075 = vmatpush1.msra.mxu0 0.0
    %3076 = vmatprep.subr.mxu0 0.0
    %3077 = vmatpush1.msra.mxu0 0.0
    %3078 = vmatprep.subr.mxu0 0.0
    %3079 = vmatpush1.msra.mxu0 0.0
    %3080 = vmatprep.subr.mxu0 0.0
    %3081 = vmatpush1.msra.mxu0 0.0
    %3082 = vmatprep.subr.mxu0 0.0
    %3083 = vmatpush1.msra.mxu0 0.0
    %3084 = vmatprep.subr.mxu0 0.0
    %3085 = vmatpush1.msra.mxu0 0.0
    %3086 = vmatprep.subr.mxu0 0.0
    %3087 = vmatpush1.msra.mxu0 0.0
    %3088 = vmatprep.subr.mxu0 0.0
    %3089 = vmatpush1.msra.mxu0 0.0
    %3090 = vmatprep.subr.mxu0 0.0
    %3091 = vmatpush1.msra.mxu0 0.0
    %3092 = vmatprep.subr.mxu0 0.0
    %3093 = vmatpush1.msra.mxu0 0.0
    %3094 = vmatprep.subr.mxu0 0.0
    %3095 = vmatpush1.msra.mxu0 0.0
    %3096 = vmatprep.subr.mxu0 0.0
    %3097 = vmatpush1.msra.mxu0 0.0
    %3098 = vmatprep.subr.mxu0 0.0
    %3099 = vmatpush1.msra.mxu0 0.0
    %3100 = vmatprep.subr.mxu0 0.0
    %3101 = vmatpush1.msra.mxu0 0.0
    %3102 = vmatprep.subr.mxu0 0.0
    %3103 = vmatpush1.msra.mxu0 0.0
    %3104 = vmatprep.subr.mxu0 0.0
    %3105 = vmatpush1.msra.mxu0 0.0
    %3106 = vmatprep.subr.mxu0 0.0
    %3107 = vmatpush1.msra.mxu0 0.0
    %3108 = vmatprep.subr.mxu0 0.0
    %3109 = vmatpush1.msra.mxu0 0.0
    %3110 = vmatprep.subr.mxu0 0.0
    %3111 = vmatpush1.msra.mxu0 0.0
    %3112 = vmatprep.mubr.f32.mxu0 0.0
    %3113 = vmatmul.mubr.f32.gmra.mrb[0].mxu0 %v361
    %v3114 = vpop.f32.mrb[0].mxu0
    %v3115 = vadd.f32 %v3046, %v3114
    %v3116 = vpop.f32.mrb[0].mxu0
    %3117 = vdwg.mxu0
    %s3118 = scalar_lea.vmem %s59, 32
    %v3119 = vld [vmem:[%s3118] sm:$0xff]
    %v3120 = vld [vmem:[%s3118 + $0x8] sm:$0xff]
    %v3121 = vld [vmem:[%s3118 + $0x10] sm:$0xff]
    %v3122 = vld [vmem:[%s3118 + $0x18] sm:$0xff]
    %s3123 = scalar_lea.vmem %s61, 1
    %v3124 = vld [vmem:[%s3123] sm:$0x1]
    %v3126 = vlaneseq
    %v3127 = vshrl.u32 %v3126, 7
    %v3128 = vsub.s32 0, %v3127
    %v3129 = vrot.slane %v3124, %v3128
    %3131 = vmatprep.subr.mxu0 0.0
    %3132 = vmatpush1.msra.mxu0 %v3119
    %3133 = vmatprep.subr.mxu0 0.0
    %3134 = vmatpush1.msra.mxu0 %v3120
    %3135 = vmatprep.subr.mxu0 0.0
    %3136 = vmatpush1.msra.mxu0 %v3121
    %3137 = vmatprep.subr.mxu0 0.0
    %3138 = vmatpush1.msra.mxu0 %v3122
    %3139 = vmatprep.subr.mxu0 0.0
    %3140 = vmatpush1.msra.mxu0 0.0
    %3141 = vmatprep.subr.mxu0 0.0
    %3142 = vmatpush1.msra.mxu0 0.0
    %3143 = vmatprep.subr.mxu0 0.0
    %3144 = vmatpush1.msra.mxu0 0.0
    %3145 = vmatprep.subr.mxu0 0.0
    %3146 = vmatpush1.msra.mxu0 0.0
    %3147 = vmatprep.subr.mxu0 0.0
    %3148 = vmatpush1.msra.mxu0 0.0
    %3149 = vmatprep.subr.mxu0 0.0
    %3150 = vmatpush1.msra.mxu0 0.0
    %3151 = vmatprep.subr.mxu0 0.0
    %3152 = vmatpush1.msra.mxu0 0.0
    %3153 = vmatprep.subr.mxu0 0.0
    %3154 = vmatpush1.msra.mxu0 0.0
    %3155 = vmatprep.subr.mxu0 0.0
    %3156 = vmatpush1.msra.mxu0 0.0
    %3157 = vmatprep.subr.mxu0 0.0
    %3158 = vmatpush1.msra.mxu0 0.0
    %3159 = vmatprep.subr.mxu0 0.0
    %3160 = vmatpush1.msra.mxu0 0.0
    %3161 = vmatprep.subr.mxu0 0.0
    %3162 = vmatpush1.msra.mxu0 0.0
    %3163 = vmatprep.subr.mxu0 0.0
    %3164 = vmatpush1.msra.mxu0 0.0
    %3165 = vmatprep.subr.mxu0 0.0
    %3166 = vmatpush1.msra.mxu0 0.0
    %3167 = vmatprep.subr.mxu0 0.0
    %3168 = vmatpush1.msra.mxu0 0.0
    %3169 = vmatprep.subr.mxu0 0.0
    %3170 = vmatpush1.msra.mxu0 0.0
    %3171 = vmatprep.subr.mxu0 0.0
    %3172 = vmatpush1.msra.mxu0 0.0
    %3173 = vmatprep.subr.mxu0 0.0
    %3174 = vmatpush1.msra.mxu0 0.0
    %3175 = vmatprep.subr.mxu0 0.0
    %3176 = vmatpush1.msra.mxu0 0.0
    %3177 = vmatprep.subr.mxu0 0.0
    %3178 = vmatpush1.msra.mxu0 0.0
    %3179 = vmatprep.subr.mxu0 0.0
    %3180 = vmatpush1.msra.mxu0 0.0
    %3181 = vmatprep.subr.mxu0 0.0
    %3182 = vmatpush1.msra.mxu0 0.0
    %3183 = vmatprep.subr.mxu0 0.0
    %3184 = vmatpush1.msra.mxu0 0.0
    %3185 = vmatprep.subr.mxu0 0.0
    %3186 = vmatpush1.msra.mxu0 0.0
    %3187 = vmatprep.subr.mxu0 0.0
    %3188 = vmatpush1.msra.mxu0 0.0
    %3189 = vmatprep.subr.mxu0 0.0
    %3190 = vmatpush1.msra.mxu0 0.0
    %3191 = vmatprep.subr.mxu0 0.0
    %3192 = vmatpush1.msra.mxu0 0.0
    %3193 = vmatprep.subr.mxu0 0.0
    %3194 = vmatpush1.msra.mxu0 0.0
    %3195 = vmatprep.mubr.f32.mxu0 0.0
    %3196 = vmatmul.mubr.f32.gmra.mrb[0].mxu0 %v445
    %v3197 = vpop.f32.mrb[0].mxu0
    %v3198 = vadd.f32 %v3129, %v3197
    %v3199 = vpop.f32.mrb[0].mxu0
    %3200 = vdwg.mxu0
    %v3202 = vsel %vm517, %v3032, 0
    %v3205 = vsel %vm517, %v3115, 0
    %3207 = vmatprep.subr.mxu0 0.0
    %3208 = vmatpush1.xpose.msra.mxu0 %v3205
    %3209 = vmatprep.subr.mxu0 0.0
    %3210 = vmatpush1.xpose.msra.mxu0 0.0
    %3211 = vmatprep.subr.mxu0 0.0
    %3212 = vmatpush1.xpose.msra.mxu0 0.0
    %3213 = vmatprep.subr.mxu0 0.0
    %3214 = vmatpush1.xpose.msra.mxu0 0.0
    %3215 = vmatprep.subr.mxu0 0.0
    %3216 = vmatpush1.xpose.msra.mxu0 0.0
    %3217 = vmatprep.subr.mxu0 0.0
    %3218 = vmatpush1.xpose.msra.mxu0 0.0
    %3219 = vmatprep.subr.mxu0 0.0
    %3220 = vmatpush1.xpose.msra.mxu0 0.0
    %3221 = vmatprep.subr.mxu0 0.0
    %3222 = vmatpush1.xpose.msra.mxu0 0.0
    %3223 = vmatprep.subr.mxu0 0.0
    %3224 = vmatpush1.xpose.msra.mxu0 0.0
    %3225 = vmatprep.subr.mxu0 0.0
    %3226 = vmatpush1.xpose.msra.mxu0 0.0
    %3227 = vmatprep.subr.mxu0 0.0
    %3228 = vmatpush1.xpose.msra.mxu0 0.0
    %3229 = vmatprep.subr.mxu0 0.0
    %3230 = vmatpush1.xpose.msra.mxu0 0.0
    %3231 = vmatprep.subr.mxu0 0.0
    %3232 = vmatpush1.xpose.msra.mxu0 0.0
    %3233 = vmatprep.subr.mxu0 0.0
    %3234 = vmatpush1.xpose.msra.mxu0 0.0
    %3235 = vmatprep.subr.mxu0 0.0
    %3236 = vmatpush1.xpose.msra.mxu0 0.0
    %3237 = vmatprep.subr.mxu0 0.0
    %3238 = vmatpush1.xpose.msra.mxu0 0.0
    %3239 = vmatprep.subr.mxu0 0.0
    %3240 = vmatpush1.xpose.msra.mxu0 0.0
    %3241 = vmatprep.subr.mxu0 0.0
    %3242 = vmatpush1.xpose.msra.mxu0 0.0
    %3243 = vmatprep.subr.mxu0 0.0
    %3244 = vmatpush1.xpose.msra.mxu0 0.0
    %3245 = vmatprep.subr.mxu0 0.0
    %3246 = vmatpush1.xpose.msra.mxu0 0.0
    %3247 = vmatprep.subr.mxu0 0.0
    %3248 = vmatpush1.xpose.msra.mxu0 0.0
    %3249 = vmatprep.subr.mxu0 0.0
    %3250 = vmatpush1.xpose.msra.mxu0 0.0
    %3251 = vmatprep.subr.mxu0 0.0
    %3252 = vmatpush1.xpose.msra.mxu0 0.0
    %3253 = vmatprep.subr.mxu0 0.0
    %3254 = vmatpush1.xpose.msra.mxu0 0.0
    %3255 = vmatprep.subr.mxu0 0.0
    %3256 = vmatpush1.xpose.msra.mxu0 0.0
    %3257 = vmatprep.subr.mxu0 0.0
    %3258 = vmatpush1.xpose.msra.mxu0 0.0
    %3259 = vmatprep.subr.mxu0 0.0
    %3260 = vmatpush1.xpose.msra.mxu0 0.0
    %3261 = vmatprep.subr.mxu0 0.0
    %3262 = vmatpush1.xpose.msra.mxu0 0.0
    %3263 = vmatprep.subr.mxu0 0.0
    %3264 = vmatpush1.xpose.msra.mxu0 0.0
    %3265 = vmatprep.subr.mxu0 0.0
    %3266 = vmatpush1.xpose.msra.mxu0 0.0
    %3267 = vmatprep.subr.mxu0 0.0
    %3268 = vmatpush1.xpose.msra.mxu0 0.0
    %3269 = vmatprep.subr.mxu0 0.0
    %3270 = vmatpush1.xpose.msra.mxu0 0.0
    %3271 = vmatprep.mubr.f32.mxu0 0.0
    %3272 = vmatmul.mubr.f32.gmra.mrb[0].mxu0 %v3202
    %v3273 = vpop.f32.mrb[0].mxu0
    %v3274 = vadd.f32 0.0, %v3273
    %v3275 = vpop.f32.mrb[0].mxu0
    %3276 = vdwg.mxu0
    %v3277 = vmul.f32 %v3274, 0.35355338
    %v3278 = vsel %vm595, -1e+09, %v3277
    %v3279 = vsel %vm517, %v3278, -inf
    %3280 = vmax.xlane.f32.xlu0 %v3279
    %v3281 = vpop.xlane.xlu0 %3280
    %v3282 = vsub.f32 %v3278, %v3281
    %v3283 = vmul.f32 %v3282, 1.442695
    %v3284 = vpow.pop %v3283
    %v3285 = vsel %vm517, %v3284, 0.0
    %3286 = vadd.xlane.f32.xlu0 %v3285
    %v3287 = vpop.xlane.xlu0 %3286
    %v3288 = vrcp.pop %v3287
    %v3289 = vmul.f32 %v3284, %v3288
    %v3291 = vsel %vm517, %v3289, 0
    %3293 = vmatprep.subr.mxu0 0.0
    %3294 = vmatpush1.msra.mxu0 %v3198
    %3295 = vmatprep.subr.mxu0 0.0
    %3296 = vmatpush1.msra.mxu0 0.0
    %3297 = vmatprep.subr.mxu0 0.0
    %3298 = vmatpush1.msra.mxu0 0.0
    %3299 = vmatprep.subr.mxu0 0.0
    %3300 = vmatpush1.msra.mxu0 0.0
    %3301 = vmatprep.subr.mxu0 0.0
    %3302 = vmatpush1.msra.mxu0 0.0
    %3303 = vmatprep.subr.mxu0 0.0
    %3304 = vmatpush1.msra.mxu0 0.0
    %3305 = vmatprep.subr.mxu0 0.0
    %3306 = vmatpush1.msra.mxu0 0.0
    %3307 = vmatprep.subr.mxu0 0.0
    %3308 = vmatpush1.msra.mxu0 0.0
    %3309 = vmatprep.subr.mxu0 0.0
    %3310 = vmatpush1.msra.mxu0 0.0
    %3311 = vmatprep.subr.mxu0 0.0
    %3312 = vmatpush1.msra.mxu0 0.0
    %3313 = vmatprep.subr.mxu0 0.0
    %3314 = vmatpush1.msra.mxu0 0.0
    %3315 = vmatprep.subr.mxu0 0.0
    %3316 = vmatpush1.msra.mxu0 0.0
    %3317 = vmatprep.subr.mxu0 0.0
    %3318 = vmatpush1.msra.mxu0 0.0
    %3319 = vmatprep.subr.mxu0 0.0
    %3320 = vmatpush1.msra.mxu0 0.0
    %3321 = vmatprep.subr.mxu0 0.0
    %3322 = vmatpush1.msra.mxu0 0.0
    %3323 = vmatprep.subr.mxu0 0.0
    %3324 = vmatpush1.msra.mxu0 0.0
    %3325 = vmatprep.subr.mxu0 0.0
    %3326 = vmatpush1.msra.mxu0 0.0
    %3327 = vmatprep.subr.mxu0 0.0
    %3328 = vmatpush1.msra.mxu0 0.0
    %3329 = vmatprep.subr.mxu0 0.0
    %3330 = vmatpush1.msra.mxu0 0.0
    %3331 = vmatprep.subr.mxu0 0.0
    %3332 = vmatpush1.msra.mxu0 0.0
    %3333 = vmatprep.subr.mxu0 0.0
    %3334 = vmatpush1.msra.mxu0 0.0
    %3335 = vmatprep.subr.mxu0 0.0
    %3336 = vmatpush1.msra.mxu0 0.0
    %3337 = vmatprep.subr.mxu0 0.0
    %3338 = vmatpush1.msra.mxu0 0.0
    %3339 = vmatprep.subr.mxu0 0.0
    %3340 = vmatpush1.msra.mxu0 0.0
    %3341 = vmatprep.subr.mxu0 0.0
    %3342 = vmatpush1.msra.mxu0 0.0
    %3343 = vmatprep.subr.mxu0 0.0
    %3344 = vmatpush1.msra.mxu0 0.0
    %3345 = vmatprep.subr.mxu0 0.0
    %3346 = vmatpush1.msra.mxu0 0.0
    %3347 = vmatprep.subr.mxu0 0.0
    %3348 = vmatpush1.msra.mxu0 0.0
    %3349 = vmatprep.subr.mxu0 0.0
    %3350 = vmatpush1.msra.mxu0 0.0
    %3351 = vmatprep.subr.mxu0 0.0
    %3352 = vmatpush1.msra.mxu0 0.0
    %3353 = vmatprep.subr.mxu0 0.0
    %3354 = vmatpush1.msra.mxu0 0.0
    %3355 = vmatprep.subr.mxu0 0.0
    %3356 = vmatpush1.msra.mxu0 0.0
    %3357 = vmatprep.mubr.f32.mxu0 0.0
    %3358 = vmatmul.mubr.f32.gmra.mrb[0].mxu0 %v3291
    %v3359 = vpop.f32.mrb[0].mxu0
    %v3360 = vadd.f32 0.0, %v3359
    %v3361 = vpop.f32.mrb[0].mxu0
    %3362 = vdwg.mxu0
    %s3363 = scalar_lea.vmem %s63, 8
    %v3364 = vld [vmem:[%s3363] sm:$0xff]
    %v3366 = vsel %vm517, %v3360, 0
    %3368 = vmatprep.subr.mxu0 0.0
    %3369 = vmatpush1.msra.mxu0 %v3364
    %3370 = vmatprep.subr.mxu0 0.0
    %3371 = vmatpush1.msra.mxu0 0.0
    %3372 = vmatprep.subr.mxu0 0.0
    %3373 = vmatpush1.msra.mxu0 0.0
    %3374 = vmatprep.subr.mxu0 0.0
    %3375 = vmatpush1.msra.mxu0 0.0
    %3376 = vmatprep.subr.mxu0 0.0
    %3377 = vmatpush1.msra.mxu0 0.0
    %3378 = vmatprep.subr.mxu0 0.0
    %3379 = vmatpush1.msra.mxu0 0.0
    %3380 = vmatprep.subr.mxu0 0.0
    %3381 = vmatpush1.msra.mxu0 0.0
    %3382 = vmatprep.subr.mxu0 0.0
    %3383 = vmatpush1.msra.mxu0 0.0
    %3384 = vmatprep.subr.mxu0 0.0
    %3385 = vmatpush1.msra.mxu0 0.0
    %3386 = vmatprep.subr.mxu0 0.0
    %3387 = vmatpush1.msra.mxu0 0.0
    %3388 = vmatprep.subr.mxu0 0.0
    %3389 = vmatpush1.msra.mxu0 0.0
    %3390 = vmatprep.subr.mxu0 0.0
    %3391 = vmatpush1.msra.mxu0 0.0
    %3392 = vmatprep.subr.mxu0 0.0
    %3393 = vmatpush1.msra.mxu0 0.0
    %3394 = vmatprep.subr.mxu0 0.0
    %3395 = vmatpush1.msra.mxu0 0.0
    %3396 = vmatprep.subr.mxu0 0.0
    %3397 = vmatpush1.msra.mxu0 0.0
    %3398 = vmatprep.subr.mxu0 0.0
    %3399 = vmatpush1.msra.mxu0 0.0
    %3400 = vmatprep.subr.mxu0 0.0
    %3401 = vmatpush1.msra.mxu0 0.0
    %3402 = vmatprep.subr.mxu0 0.0
    %3403 = vmatpush1.msra.mxu0 0.0
    %3404 = vmatprep.subr.mxu0 0.0
    %3405 = vmatpush1.msra.mxu0 0.0
    %3406 = vmatprep.subr.mxu0 0.0
    %3407 = vmatpush1.msra.mxu0 0.0
    %3408 = vmatprep.subr.mxu0 0.0
    %3409 = vmatpush1.msra.mxu0 0.0
    %3410 = vmatprep.subr.mxu0 0.0
    %3411 = vmatpush1.msra.mxu0 0.0
    %3412 = vmatprep.subr.mxu0 0.0
    %3413 = vmatpush1.msra.mxu0 0.0
    %3414 = vmatprep.subr.mxu0 0.0
    %3415 = vmatpush1.msra.mxu0 0.0
    %3416 = vmatprep.subr.mxu0 0.0
    %3417 = vmatpush1.msra.mxu0 0.0
    %3418 = vmatprep.subr.mxu0 0.0
    %3419 = vmatpush1.msra.mxu0 0.0
    %3420 = vmatprep.subr.mxu0 0.0
    %3421 = vmatpush1.msra.mxu0 0.0
    %3422 = vmatprep.subr.mxu0 0.0
    %3423 = vmatpush1.msra.mxu0 0.0
    %3424 = vmatprep.subr.mxu0 0.0
    %3425 = vmatpush1.msra.mxu0 0.0
    %3426 = vmatprep.subr.mxu0 0.0
    %3427 = vmatpush1.msra.mxu0 0.0
    %3428 = vmatprep.subr.mxu0 0.0
    %3429 = vmatpush1.msra.mxu0 0.0
    %3430 = vmatprep.subr.mxu0 0.0
    %3431 = vmatpush1.msra.mxu0 0.0
    %3432 = vmatprep.mubr.f32.mxu0 0.0
    %3433 = vmatmul.mubr.f32.gmra.mrb[0].mxu0 %v3366
    %v3434 = vpop.f32.mrb[0].mxu0
    %v3435 = vadd.f32 0.0, %v3434
    %v3436 = vpop.f32.mrb[0].mxu0
    %3437 = vdwg.mxu0
    %v3439 = vsel %vm517, %v2948, 0
    %3441 = vmatprep.subr.mxu0 0.0
    %3442 = vmatpush1.msra.mxu0 %v2951
    %3443 = vmatprep.subr.mxu0 0.0
    %3444 = vmatpush1.msra.mxu0 0.0
    %3445 = vmatprep.subr.mxu0 0.0
    %3446 = vmatpush1.msra.mxu0 0.0
    %3447 = vmatprep.subr.mxu0 0.0
    %3448 = vmatpush1.msra.mxu0 0.0
    %3449 = vmatprep.subr.mxu0 0.0
    %3450 = vmatpush1.msra.mxu0 0.0
    %3451 = vmatprep.subr.mxu0 0.0
    %3452 = vmatpush1.msra.mxu0 0.0
    %3453 = vmatprep.subr.mxu0 0.0
    %3454 = vmatpush1.msra.mxu0 0.0
    %3455 = vmatprep.subr.mxu0 0.0
    %3456 = vmatpush1.msra.mxu0 0.0
    %3457 = vmatprep.subr.mxu0 0.0
    %3458 = vmatpush1.msra.mxu0 0.0
    %3459 = vmatprep.subr.mxu0 0.0
    %3460 = vmatpush1.msra.mxu0 0.0
    %3461 = vmatprep.subr.mxu0 0.0
    %3462 = vmatpush1.msra.mxu0 0.0
    %3463 = vmatprep.subr.mxu0 0.0
    %3464 = vmatpush1.msra.mxu0 0.0
    %3465 = vmatprep.subr.mxu0 0.0
    %3466 = vmatpush1.msra.mxu0 0.0
    %3467 = vmatprep.subr.mxu0 0.0
    %3468 = vmatpush1.msra.mxu0 0.0
    %3469 = vmatprep.subr.mxu0 0.0
    %3470 = vmatpush1.msra.mxu0 0.0
    %3471 = vmatprep.subr.mxu0 0.0
    %3472 = vmatpush1.msra.mxu0 0.0
    %3473 = vmatprep.subr.mxu0 0.0
    %3474 = vmatpush1.msra.mxu0 0.0
    %3475 = vmatprep.subr.mxu0 0.0
    %3476 = vmatpush1.msra.mxu0 0.0
    %3477 = vmatprep.subr.mxu0 0.0
    %3478 = vmatpush1.msra.mxu0 0.0
    %3479 = vmatprep.subr.mxu0 0.0
    %3480 = vmatpush1.msra.mxu0 0.0
    %3481 = vmatprep.subr.mxu0 0.0
    %3482 = vmatpush1.msra.mxu0 0.0
    %3483 = vmatprep.subr.mxu0 0.0
    %3484 = vmatpush1.msra.mxu0 0.0
    %3485 = vmatprep.subr.mxu0 0.0
    %3486 = vmatpush1.msra.mxu0 0.0
    %3487 = vmatprep.subr.mxu0 0.0
    %3488 = vmatpush1.msra.mxu0 0.0
    %3489 = vmatprep.subr.mxu0 0.0
    %3490 = vmatpush1.msra.mxu0 0.0
    %3491 = vmatprep.subr.mxu0 0.0
    %3492 = vmatpush1.msra.mxu0 0.0
    %3493 = vmatprep.subr.mxu0 0.0
    %3494 = vmatpush1.msra.mxu0 0.0
    %3495 = vmatprep.subr.mxu0 0.0
    %3496 = vmatpush1.msra.mxu0 0.0
    %3497 = vmatprep.subr.mxu0 0.0
    %3498 = vmatpush1.msra.mxu0 0.0
    %3499 = vmatprep.subr.mxu0 0.0
    %3500 = vmatpush1.msra.mxu0 0.0
    %3501 = vmatprep.subr.mxu0 0.0
    %3502 = vmatpush1.msra.mxu0 0.0
    %3503 = vmatprep.subr.mxu0 0.0
    %3504 = vmatpush1.msra.mxu0 0.0
    %3505 = vmatprep.mubr.f32.mxu0 0.0
    %3506 = vmatmul.mubr.f32.gmra.mrb[0].mxu0 %v3439
    %v3507 = vpop.f32.mrb[0].mxu0
    %v3508 = vadd.f32 %v3435, %v3507
    %v3509 = vpop.f32.mrb[0].mxu0
    %3510 = vdwg.mxu0
    %s3511 = scalar_lea.vmem %s51, 64
    %v3512 = vld [vmem:[%s3511] sm:$0xff]
    %v3513 = vld [vmem:[%s3511 + $0x8] sm:$0xff]
    %v3514 = vld [vmem:[%s3511 + $0x10] sm:$0xff]
    %v3515 = vld [vmem:[%s3511 + $0x18] sm:$0xff]
    %s3516 = scalar_lea.vmem %s53, 2
    %v3517 = vld [vmem:[%s3516] sm:$0x1]
    %v3519 = vlaneseq
    %v3520 = vshrl.u32 %v3519, 7
    %v3521 = vsub.s32 0, %v3520
    %v3522 = vrot.slane %v3517, %v3521
    %3524 = vmatprep.subr.mxu0 0.0
    %3525 = vmatpush1.msra.mxu0 %v3512
    %3526 = vmatprep.subr.mxu0 0.0
    %3527 = vmatpush1.msra.mxu0 %v3513
    %3528 = vmatprep.subr.mxu0 0.0
    %3529 = vmatpush1.msra.mxu0 %v3514
    %3530 = vmatprep.subr.mxu0 0.0
    %3531 = vmatpush1.msra.mxu0 %v3515
    %3532 = vmatprep.subr.mxu0 0.0
    %3533 = vmatpush1.msra.mxu0 0.0
    %3534 = vmatprep.subr.mxu0 0.0
    %3535 = vmatpush1.msra.mxu0 0.0
    %3536 = vmatprep.subr.mxu0 0.0
    %3537 = vmatpush1.msra.mxu0 0.0
    %3538 = vmatprep.subr.mxu0 0.0
    %3539 = vmatpush1.msra.mxu0 0.0
    %3540 = vmatprep.subr.mxu0 0.0
    %3541 = vmatpush1.msra.mxu0 0.0
    %3542 = vmatprep.subr.mxu0 0.0
    %3543 = vmatpush1.msra.mxu0 0.0
    %3544 = vmatprep.subr.mxu0 0.0
    %3545 = vmatpush1.msra.mxu0 0.0
    %3546 = vmatprep.subr.mxu0 0.0
    %3547 = vmatpush1.msra.mxu0 0.0
    %3548 = vmatprep.subr.mxu0 0.0
    %3549 = vmatpush1.msra.mxu0 0.0
    %3550 = vmatprep.subr.mxu0 0.0
    %3551 = vmatpush1.msra.mxu0 0.0
    %3552 = vmatprep.subr.mxu0 0.0
    %3553 = vmatpush1.msra.mxu0 0.0
    %3554 = vmatprep.subr.mxu0 0.0
    %3555 = vmatpush1.msra.mxu0 0.0
    %3556 = vmatprep.subr.mxu0 0.0
    %3557 = vmatpush1.msra.mxu0 0.0
    %3558 = vmatprep.subr.mxu0 0.0
    %3559 = vmatpush1.msra.mxu0 0.0
    %3560 = vmatprep.subr.mxu0 0.0
    %3561 = vmatpush1.msra.mxu0 0.0
    %3562 = vmatprep.subr.mxu0 0.0
    %3563 = vmatpush1.msra.mxu0 0.0
    %3564 = vmatprep.subr.mxu0 0.0
    %3565 = vmatpush1.msra.mxu0 0.0
    %3566 = vmatprep.subr.mxu0 0.0
    %3567 = vmatpush1.msra.mxu0 0.0
    %3568 = vmatprep.subr.mxu0 0.0
    %3569 = vmatpush1.msra.mxu0 0.0
    %3570 = vmatprep.subr.mxu0 0.0
    %3571 = vmatpush1.msra.mxu0 0.0
    %3572 = vmatprep.subr.mxu0 0.0
    %3573 = vmatpush1.msra.mxu0 0.0
    %3574 = vmatprep.subr.mxu0 0.0
    %3575 = vmatpush1.msra.mxu0 0.0
    %3576 = vmatprep.subr.mxu0 0.0
    %3577 = vmatpush1.msra.mxu0 0.0
    %3578 = vmatprep.subr.mxu0 0.0
    %3579 = vmatpush1.msra.mxu0 0.0
    %3580 = vmatprep.subr.mxu0 0.0
    %3581 = vmatpush1.msra.mxu0 0.0
    %3582 = vmatprep.subr.mxu0 0.0
    %3583 = vmatpush1.msra.mxu0 0.0
    %3584 = vmatprep.subr.mxu0 0.0
    %3585 = vmatpush1.msra.mxu0 0.0
    %3586 = vmatprep.subr.mxu0 0.0
    %3587 = vmatpush1.msra.mxu0 0.0
    %3588 = vmatprep.mubr.f32.mxu0 0.0
    %3589 = vmatmul.mubr.f32.gmra.mrb[0].mxu0 %v2555
    %v3590 = vpop.f32.mrb[0].mxu0
    %v3591 = vadd.f32 %v3522, %v3590
    %v3592 = vpop.f32.mrb[0].mxu0
    %3593 = vdwg.mxu0
    %s3594 = scalar_lea.vmem %s55, 64
    %v3595 = vld [vmem:[%s3594] sm:$0xff]
    %v3596 = vld [vmem:[%s3594 + $0x8] sm:$0xff]
    %v3597 = vld [vmem:[%s3594 + $0x10] sm:$0xff]
    %v3598 = vld [vmem:[%s3594 + $0x18] sm:$0xff]
    %s3599 = scalar_lea.vmem %s57, 2
    %v3600 = vld [vmem:[%s3599] sm:$0x1]
    %v3602 = vlaneseq
    %v3603 = vshrl.u32 %v3602, 7
    %v3604 = vsub.s32 0, %v3603
    %v3605 = vrot.slane %v3600, %v3604
    %3607 = vmatprep.subr.mxu0 0.0
    %3608 = vmatpush1.msra.mxu0 %v3595
    %3609 = vmatprep.subr.mxu0 0.0
    %3610 = vmatpush1.msra.mxu0 %v3596
    %3611 = vmatprep.subr.mxu0 0.0
    %3612 = vmatpush1.msra.mxu0 %v3597
    %3613 = vmatprep.subr.mxu0 0.0
    %3614 = vmatpush1.msra.mxu0 %v3598
    %3615 = vmatprep.subr.mxu0 0.0
    %3616 = vmatpush1.msra.mxu0 0.0
    %3617 = vmatprep.subr.mxu0 0.0
    %3618 = vmatpush1.msra.mxu0 0.0
    %3619 = vmatprep.subr.mxu0 0.0
    %3620 = vmatpush1.msra.mxu0 0.0
    %3621 = vmatprep.subr.mxu0 0.0
    %3622 = vmatpush1.msra.mxu0 0.0
    %3623 = vmatprep.subr.mxu0 0.0
    %3624 = vmatpush1.msra.mxu0 0.0
    %3625 = vmatprep.subr.mxu0 0.0
    %3626 = vmatpush1.msra.mxu0 0.0
    %3627 = vmatprep.subr.mxu0 0.0
    %3628 = vmatpush1.msra.mxu0 0.0
    %3629 = vmatprep.subr.mxu0 0.0
    %3630 = vmatpush1.msra.mxu0 0.0
    %3631 = vmatprep.subr.mxu0 0.0
    %3632 = vmatpush1.msra.mxu0 0.0
    %3633 = vmatprep.subr.mxu0 0.0
    %3634 = vmatpush1.msra.mxu0 0.0
    %3635 = vmatprep.subr.mxu0 0.0
    %3636 = vmatpush1.msra.mxu0 0.0
    %3637 = vmatprep.subr.mxu0 0.0
    %3638 = vmatpush1.msra.mxu0 0.0
    %3639 = vmatprep.subr.mxu0 0.0
    %3640 = vmatpush1.msra.mxu0 0.0
    %3641 = vmatprep.subr.mxu0 0.0
    %3642 = vmatpush1.msra.mxu0 0.0
    %3643 = vmatprep.subr.mxu0 0.0
    %3644 = vmatpush1.msra.mxu0 0.0
    %3645 = vmatprep.subr.mxu0 0.0
    %3646 = vmatpush1.msra.mxu0 0.0
    %3647 = vmatprep.subr.mxu0 0.0
    %3648 = vmatpush1.msra.mxu0 0.0
    %3649 = vmatprep.subr.mxu0 0.0
    %3650 = vmatpush1.msra.mxu0 0.0
    %3651 = vmatprep.subr.mxu0 0.0
    %3652 = vmatpush1.msra.mxu0 0.0
    %3653 = vmatprep.subr.mxu0 0.0
    %3654 = vmatpush1.msra.mxu0 0.0
    %3655 = vmatprep.subr.mxu0 0.0
    %3656 = vmatpush1.msra.mxu0 0.0
    %3657 = vmatprep.subr.mxu0 0.0
    %3658 = vmatpush1.msra.mxu0 0.0
    %3659 = vmatprep.subr.mxu0 0.0
    %3660 = vmatpush1.msra.mxu0 0.0
    %3661 = vmatprep.subr.mxu0 0.0
    %3662 = vmatpush1.msra.mxu0 0.0
    %3663 = vmatprep.subr.mxu0 0.0
    %3664 = vmatpush1.msra.mxu0 0.0
    %3665 = vmatprep.subr.mxu0 0.0
    %3666 = vmatpush1.msra.mxu0 0.0
    %3667 = vmatprep.subr.mxu0 0.0
    %3668 = vmatpush1.msra.mxu0 0.0
    %3669 = vmatprep.subr.mxu0 0.0
    %3670 = vmatpush1.msra.mxu0 0.0
    %3671 = vmatprep.mubr.f32.mxu0 0.0
    %3672 = vmatmul.mubr.f32.gmra.mrb[0].mxu0 %v361
    %v3673 = vpop.f32.mrb[0].mxu0
    %v3674 = vadd.f32 %v3605, %v3673
    %v3675 = vpop.f32.mrb[0].mxu0
    %3676 = vdwg.mxu0
    %s3677 = scalar_lea.vmem %s59, 64
    %v3678 = vld [vmem:[%s3677] sm:$0xff]
    %v3679 = vld [vmem:[%s3677 + $0x8] sm:$0xff]
    %v3680 = vld [vmem:[%s3677 + $0x10] sm:$0xff]
    %v3681 = vld [vmem:[%s3677 + $0x18] sm:$0xff]
    %s3682 = scalar_lea.vmem %s61, 2
    %v3683 = vld [vmem:[%s3682] sm:$0x1]
    %v3685 = vlaneseq
    %v3686 = vshrl.u32 %v3685, 7
    %v3687 = vsub.s32 0, %v3686
    %v3688 = vrot.slane %v3683, %v3687
    %3690 = vmatprep.subr.mxu0 0.0
    %3691 = vmatpush1.msra.mxu0 %v3678
    %3692 = vmatprep.subr.mxu0 0.0
    %3693 = vmatpush1.msra.mxu0 %v3679
    %3694 = vmatprep.subr.mxu0 0.0
    %3695 = vmatpush1.msra.mxu0 %v3680
    %3696 = vmatprep.subr.mxu0 0.0
    %3697 = vmatpush1.msra.mxu0 %v3681
    %3698 = vmatprep.subr.mxu0 0.0
    %3699 = vmatpush1.msra.mxu0 0.0
    %3700 = vmatprep.subr.mxu0 0.0
    %3701 = vmatpush1.msra.mxu0 0.0
    %3702 = vmatprep.subr.mxu0 0.0
    %3703 = vmatpush1.msra.mxu0 0.0
    %3704 = vmatprep.subr.mxu0 0.0
    %3705 = vmatpush1.msra.mxu0 0.0
    %3706 = vmatprep.subr.mxu0 0.0
    %3707 = vmatpush1.msra.mxu0 0.0
    %3708 = vmatprep.subr.mxu0 0.0
    %3709 = vmatpush1.msra.mxu0 0.0
    %3710 = vmatprep.subr.mxu0 0.0
    %3711 = vmatpush1.msra.mxu0 0.0
    %3712 = vmatprep.subr.mxu0 0.0
    %3713 = vmatpush1.msra.mxu0 0.0
    %3714 = vmatprep.subr.mxu0 0.0
    %3715 = vmatpush1.msra.mxu0 0.0
    %3716 = vmatprep.subr.mxu0 0.0
    %3717 = vmatpush1.msra.mxu0 0.0
    %3718 = vmatprep.subr.mxu0 0.0
    %3719 = vmatpush1.msra.mxu0 0.0
    %3720 = vmatprep.subr.mxu0 0.0
    %3721 = vmatpush1.msra.mxu0 0.0
    %3722 = vmatprep.subr.mxu0 0.0
    %3723 = vmatpush1.msra.mxu0 0.0
    %3724 = vmatprep.subr.mxu0 0.0
    %3725 = vmatpush1.msra.mxu0 0.0
    %3726 = vmatprep.subr.mxu0 0.0
    %3727 = vmatpush1.msra.mxu0 0.0
    %3728 = vmatprep.subr.mxu0 0.0
    %3729 = vmatpush1.msra.mxu0 0.0
    %3730 = vmatprep.subr.mxu0 0.0
    %3731 = vmatpush1.msra.mxu0 0.0
    %3732 = vmatprep.subr.mxu0 0.0
    %3733 = vmatpush1.msra.mxu0 0.0
    %3734 = vmatprep.subr.mxu0 0.0
    %3735 = vmatpush1.msra.mxu0 0.0
    %3736 = vmatprep.subr.mxu0 0.0
    %3737 = vmatpush1.msra.mxu0 0.0
    %3738 = vmatprep.subr.mxu0 0.0
    %3739 = vmatpush1.msra.mxu0 0.0
    %3740 = vmatprep.subr.mxu0 0.0
    %3741 = vmatpush1.msra.mxu0 0.0
    %3742 = vmatprep.subr.mxu0 0.0
    %3743 = vmatpush1.msra.mxu0 0.0
    %3744 = vmatprep.subr.mxu0 0.0
    %3745 = vmatpush1.msra.mxu0 0.0
    %3746 = vmatprep.subr.mxu0 0.0
    %3747 = vmatpush1.msra.mxu0 0.0
    %3748 = vmatprep.subr.mxu0 0.0
    %3749 = vmatpush1.msra.mxu0 0.0
    %3750 = vmatprep.subr.mxu0 0.0
    %3751 = vmatpush1.msra.mxu0 0.0
    %3752 = vmatprep.subr.mxu0 0.0
    %3753 = vmatpush1.msra.mxu0 0.0
    %3754 = vmatprep.mubr.f32.mxu0 0.0
    %3755 = vmatmul.mubr.f32.gmra.mrb[0].mxu0 %v445
    %v3756 = vpop.f32.mrb[0].mxu0
    %v3757 = vadd.f32 %v3688, %v3756
    %v3758 = vpop.f32.mrb[0].mxu0
    %3759 = vdwg.mxu0
    %v3761 = vsel %vm517, %v3591, 0
    %v3764 = vsel %vm517, %v3674, 0
    %3766 = vmatprep.subr.mxu0 0.0
    %3767 = vmatpush1.xpose.msra.mxu0 %v3764
    %3768 = vmatprep.subr.mxu0 0.0
    %3769 = vmatpush1.xpose.msra.mxu0 0.0
    %3770 = vmatprep.subr.mxu0 0.0
    %3771 = vmatpush1.xpose.msra.mxu0 0.0
    %3772 = vmatprep.subr.mxu0 0.0
    %3773 = vmatpush1.xpose.msra.mxu0 0.0
    %3774 = vmatprep.subr.mxu0 0.0
    %3775 = vmatpush1.xpose.msra.mxu0 0.0
    %3776 = vmatprep.subr.mxu0 0.0
    %3777 = vmatpush1.xpose.msra.mxu0 0.0
    %3778 = vmatprep.subr.mxu0 0.0
    %3779 = vmatpush1.xpose.msra.mxu0 0.0
    %3780 = vmatprep.subr.mxu0 0.0
    %3781 = vmatpush1.xpose.msra.mxu0 0.0
    %3782 = vmatprep.subr.mxu0 0.0
    %3783 = vmatpush1.xpose.msra.mxu0 0.0
    %3784 = vmatprep.subr.mxu0 0.0
    %3785 = vmatpush1.xpose.msra.mxu0 0.0
    %3786 = vmatprep.subr.mxu0 0.0
    %3787 = vmatpush1.xpose.msra.mxu0 0.0
    %3788 = vmatprep.subr.mxu0 0.0
    %3789 = vmatpush1.xpose.msra.mxu0 0.0
    %3790 = vmatprep.subr.mxu0 0.0
    %3791 = vmatpush1.xpose.msra.mxu0 0.0
    %3792 = vmatprep.subr.mxu0 0.0
    %3793 = vmatpush1.xpose.msra.mxu0 0.0
    %3794 = vmatprep.subr.mxu0 0.0
    %3795 = vmatpush1.xpose.msra.mxu0 0.0
    %3796 = vmatprep.subr.mxu0 0.0
    %3797 = vmatpush1.xpose.msra.mxu0 0.0
    %3798 = vmatprep.subr.mxu0 0.0
    %3799 = vmatpush1.xpose.msra.mxu0 0.0
    %3800 = vmatprep.subr.mxu0 0.0
    %3801 = vmatpush1.xpose.msra.mxu0 0.0
    %3802 = vmatprep.subr.mxu0 0.0
    %3803 = vmatpush1.xpose.msra.mxu0 0.0
    %3804 = vmatprep.subr.mxu0 0.0
    %3805 = vmatpush1.xpose.msra.mxu0 0.0
    %3806 = vmatprep.subr.mxu0 0.0
    %3807 = vmatpush1.xpose.msra.mxu0 0.0
    %3808 = vmatprep.subr.mxu0 0.0
    %3809 = vmatpush1.xpose.msra.mxu0 0.0
    %3810 = vmatprep.subr.mxu0 0.0
    %3811 = vmatpush1.xpose.msra.mxu0 0.0
    %3812 = vmatprep.subr.mxu0 0.0
    %3813 = vmatpush1.xpose.msra.mxu0 0.0
    %3814 = vmatprep.subr.mxu0 0.0
    %3815 = vmatpush1.xpose.msra.mxu0 0.0
    %3816 = vmatprep.subr.mxu0 0.0
    %3817 = vmatpush1.xpose.msra.mxu0 0.0
    %3818 = vmatprep.subr.mxu0 0.0
    %3819 = vmatpush1.xpose.msra.mxu0 0.0
    %3820 = vmatprep.subr.mxu0 0.0
    %3821 = vmatpush1.xpose.msra.mxu0 0.0
    %3822 = vmatprep.subr.mxu0 0.0
    %3823 = vmatpush1.xpose.msra.mxu0 0.0
    %3824 = vmatprep.subr.mxu0 0.0
    %3825 = vmatpush1.xpose.msra.mxu0 0.0
    %3826 = vmatprep.subr.mxu0 0.0
    %3827 = vmatpush1.xpose.msra.mxu0 0.0
    %3828 = vmatprep.subr.mxu0 0.0
    %3829 = vmatpush1.xpose.msra.mxu0 0.0
    %3830 = vmatprep.mubr.f32.mxu0 0.0
    %3831 = vmatmul.mubr.f32.gmra.mrb[0].mxu0 %v3761
    %v3832 = vpop.f32.mrb[0].mxu0
    %v3833 = vadd.f32 0.0, %v3832
    %v3834 = vpop.f32.mrb[0].mxu0
    %3835 = vdwg.mxu0
    %v3836 = vmul.f32 %v3833, 0.35355338
    %v3837 = vsel %vm595, -1e+09, %v3836
    %v3838 = vsel %vm517, %v3837, -inf
    %3839 = vmax.xlane.f32.xlu0 %v3838
    %v3840 = vpop.xlane.xlu0 %3839
    %v3841 = vsub.f32 %v3837, %v3840
    %v3842 = vmul.f32 %v3841, 1.442695
    %v3843 = vpow.pop %v3842
    %v3844 = vsel %vm517, %v3843, 0.0
    %3845 = vadd.xlane.f32.xlu0 %v3844
    %v3846 = vpop.xlane.xlu0 %3845
    %v3847 = vrcp.pop %v3846
    %v3848 = vmul.f32 %v3843, %v3847
    %v3850 = vsel %vm517, %v3848, 0
    %3852 = vmatprep.subr.mxu0 0.0
    %3853 = vmatpush1.msra.mxu0 %v3757
    %3854 = vmatprep.subr.mxu0 0.0
    %3855 = vmatpush1.msra.mxu0 0.0
    %3856 = vmatprep.subr.mxu0 0.0
    %3857 = vmatpush1.msra.mxu0 0.0
    %3858 = vmatprep.subr.mxu0 0.0
    %3859 = vmatpush1.msra.mxu0 0.0
    %3860 = vmatprep.subr.mxu0 0.0
    %3861 = vmatpush1.msra.mxu0 0.0
    %3862 = vmatprep.subr.mxu0 0.0
    %3863 = vmatpush1.msra.mxu0 0.0
    %3864 = vmatprep.subr.mxu0 0.0
    %3865 = vmatpush1.msra.mxu0 0.0
    %3866 = vmatprep.subr.mxu0 0.0
    %3867 = vmatpush1.msra.mxu0 0.0
    %3868 = vmatprep.subr.mxu0 0.0
    %3869 = vmatpush1.msra.mxu0 0.0
    %3870 = vmatprep.subr.mxu0 0.0
    %3871 = vmatpush1.msra.mxu0 0.0
    %3872 = vmatprep.subr.mxu0 0.0
    %3873 = vmatpush1.msra.mxu0 0.0
    %3874 = vmatprep.subr.mxu0 0.0
    %3875 = vmatpush1.msra.mxu0 0.0
    %3876 = vmatprep.subr.mxu0 0.0
    %3877 = vmatpush1.msra.mxu0 0.0
    %3878 = vmatprep.subr.mxu0 0.0
    %3879 = vmatpush1.msra.mxu0 0.0
    %3880 = vmatprep.subr.mxu0 0.0
    %3881 = vmatpush1.msra.mxu0 0.0
    %3882 = vmatprep.subr.mxu0 0.0
    %3883 = vmatpush1.msra.mxu0 0.0
    %3884 = vmatprep.subr.mxu0 0.0
    %3885 = vmatpush1.msra.mxu0 0.0
    %3886 = vmatprep.subr.mxu0 0.0
    %3887 = vmatpush1.msra.mxu0 0.0
    %3888 = vmatprep.subr.mxu0 0.0
    %3889 = vmatpush1.msra.mxu0 0.0
    %3890 = vmatprep.subr.mxu0 0.0
    %3891 = vmatpush1.msra.mxu0 0.0
    %3892 = vmatprep.subr.mxu0 0.0
    %3893 = vmatpush1.msra.mxu0 0.0
    %3894 = vmatprep.subr.mxu0 0.0
    %3895 = vmatpush1.msra.mxu0 0.0
    %3896 = vmatprep.subr.mxu0 0.0
    %3897 = vmatpush1.msra.mxu0 0.0
    %3898 = vmatprep.subr.mxu0 0.0
    %3899 = vmatpush1.msra.mxu0 0.0
    %3900 = vmatprep.subr.mxu0 0.0
    %3901 = vmatpush1.msra.mxu0 0.0
    %3902 = vmatprep.subr.mxu0 0.0
    %3903 = vmatpush1.msra.mxu0 0.0
    %3904 = vmatprep.subr.mxu0 0.0
    %3905 = vmatpush1.msra.mxu0 0.0
    %3906 = vmatprep.subr.mxu0 0.0
    %3907 = vmatpush1.msra.mxu0 0.0
    %3908 = vmatprep.subr.mxu0 0.0
    %3909 = vmatpush1.msra.mxu0 0.0
    %3910 = vmatprep.subr.mxu0 0.0
    %3911 = vmatpush1.msra.mxu0 0.0
    %3912 = vmatprep.subr.mxu0 0.0
    %3913 = vmatpush1.msra.mxu0 0.0
    %3914 = vmatprep.subr.mxu0 0.0
    %3915 = vmatpush1.msra.mxu0 0.0
    %3916 = vmatprep.mubr.f32.mxu0 0.0
    %3917 = vmatmul.mubr.f32.gmra.mrb[0].mxu0 %v3850
    %v3918 = vpop.f32.mrb[0].mxu0
    %v3919 = vadd.f32 0.0, %v3918
    %v3920 = vpop.f32.mrb[0].mxu0
    %3921 = vdwg.mxu0
    %s3922 = scalar_lea.vmem %s63, 16
    %v3923 = vld [vmem:[%s3922] sm:$0xff]
    %v3925 = vsel %vm517, %v3919, 0
    %3927 = vmatprep.subr.mxu0 0.0
    %3928 = vmatpush1.msra.mxu0 %v3923
    %3929 = vmatprep.subr.mxu0 0.0
    %3930 = vmatpush1.msra.mxu0 0.0
    %3931 = vmatprep.subr.mxu0 0.0
    %3932 = vmatpush1.msra.mxu0 0.0
    %3933 = vmatprep.subr.mxu0 0.0
    %3934 = vmatpush1.msra.mxu0 0.0
    %3935 = vmatprep.subr.mxu0 0.0
    %3936 = vmatpush1.msra.mxu0 0.0
    %3937 = vmatprep.subr.mxu0 0.0
    %3938 = vmatpush1.msra.mxu0 0.0
    %3939 = vmatprep.subr.mxu0 0.0
    %3940 = vmatpush1.msra.mxu0 0.0
    %3941 = vmatprep.subr.mxu0 0.0
    %3942 = vmatpush1.msra.mxu0 0.0
    %3943 = vmatprep.subr.mxu0 0.0
    %3944 = vmatpush1.msra.mxu0 0.0
    %3945 = vmatprep.subr.mxu0 0.0
    %3946 = vmatpush1.msra.mxu0 0.0
    %3947 = vmatprep.subr.mxu0 0.0
    %3948 = vmatpush1.msra.mxu0 0.0
    %3949 = vmatprep.subr.mxu0 0.0
    %3950 = vmatpush1.msra.mxu0 0.0
    %3951 = vmatprep.subr.mxu0 0.0
    %3952 = vmatpush1.msra.mxu0 0.0
    %3953 = vmatprep.subr.mxu0 0.0
    %3954 = vmatpush1.msra.mxu0 0.0
    %3955 = vmatprep.subr.mxu0 0.0
    %3956 = vmatpush1.msra.mxu0 0.0
    %3957 = vmatprep.subr.mxu0 0.0
    %3958 = vmatpush1.msra.mxu0 0.0
    %3959 = vmatprep.subr.mxu0 0.0
    %3960 = vmatpush1.msra.mxu0 0.0
    %3961 = vmatprep.subr.mxu0 0.0
    %3962 = vmatpush1.msra.mxu0 0.0
    %3963 = vmatprep.subr.mxu0 0.0
    %3964 = vmatpush1.msra.mxu0 0.0
    %3965 = vmatprep.subr.mxu0 0.0
    %3966 = vmatpush1.msra.mxu0 0.0
    %3967 = vmatprep.subr.mxu0 0.0
    %3968 = vmatpush1.msra.mxu0 0.0
    %3969 = vmatprep.subr.mxu0 0.0
    %3970 = vmatpush1.msra.mxu0 0.0
    %3971 = vmatprep.subr.mxu0 0.0
    %3972 = vmatpush1.msra.mxu0 0.0
    %3973 = vmatprep.subr.mxu0 0.0
    %3974 = vmatpush1.msra.mxu0 0.0
    %3975 = vmatprep.subr.mxu0 0.0
    %3976 = vmatpush1.msra.mxu0 0.0
    %3977 = vmatprep.subr.mxu0 0.0
    %3978 = vmatpush1.msra.mxu0 0.0
    %3979 = vmatprep.subr.mxu0 0.0
    %3980 = vmatpush1.msra.mxu0 0.0
    %3981 = vmatprep.subr.mxu0 0.0
    %3982 = vmatpush1.msra.mxu0 0.0
    %3983 = vmatprep.subr.mxu0 0.0
    %3984 = vmatpush1.msra.mxu0 0.0
    %3985 = vmatprep.subr.mxu0 0.0
    %3986 = vmatpush1.msra.mxu0 0.0
    %3987 = vmatprep.subr.mxu0 0.0
    %3988 = vmatpush1.msra.mxu0 0.0
    %3989 = vmatprep.subr.mxu0 0.0
    %3990 = vmatpush1.msra.mxu0 0.0
    %3991 = vmatprep.mubr.f32.mxu0 0.0
    %3992 = vmatmul.mubr.f32.gmra.mrb[0].mxu0 %v3925
    %v3993 = vpop.f32.mrb[0].mxu0
    %v3994 = vadd.f32 0.0, %v3993
    %v3995 = vpop.f32.mrb[0].mxu0
    %3996 = vdwg.mxu0
    %v3997 = vadd.f32 %v3508, %v3994
    %s3998 = scalar_lea.vmem %s51, 96
    %v3999 = vld [vmem:[%s3998] sm:$0xff]
    %v4000 = vld [vmem:[%s3998 + $0x8] sm:$0xff]
    %v4001 = vld [vmem:[%s3998 + $0x10] sm:$0xff]
    %v4002 = vld [vmem:[%s3998 + $0x18] sm:$0xff]
    %s4003 = scalar_lea.vmem %s53, 3
    %v4004 = vld [vmem:[%s4003] sm:$0x1]
    %v4006 = vlaneseq
    %v4007 = vshrl.u32 %v4006, 7
    %v4008 = vsub.s32 0, %v4007
    %v4009 = vrot.slane %v4004, %v4008
    %4011 = vmatprep.subr.mxu0 0.0
    %4012 = vmatpush1.msra.mxu0 %v3999
    %4013 = vmatprep.subr.mxu0 0.0
    %4014 = vmatpush1.msra.mxu0 %v4000
    %4015 = vmatprep.subr.mxu0 0.0
    %4016 = vmatpush1.msra.mxu0 %v4001
    %4017 = vmatprep.subr.mxu0 0.0
    %4018 = vmatpush1.msra.mxu0 %v4002
    %4019 = vmatprep.subr.mxu0 0.0
    %4020 = vmatpush1.msra.mxu0 0.0
    %4021 = vmatprep.subr.mxu0 0.0
    %4022 = vmatpush1.msra.mxu0 0.0
    %4023 = vmatprep.subr.mxu0 0.0
    %4024 = vmatpush1.msra.mxu0 0.0
    %4025 = vmatprep.subr.mxu0 0.0
    %4026 = vmatpush1.msra.mxu0 0.0
    %4027 = vmatprep.subr.mxu0 0.0
    %4028 = vmatpush1.msra.mxu0 0.0
    %4029 = vmatprep.subr.mxu0 0.0
    %4030 = vmatpush1.msra.mxu0 0.0
    %4031 = vmatprep.subr.mxu0 0.0
    %4032 = vmatpush1.msra.mxu0 0.0
    %4033 = vmatprep.subr.mxu0 0.0
    %4034 = vmatpush1.msra.mxu0 0.0
    %4035 = vmatprep.subr.mxu0 0.0
    %4036 = vmatpush1.msra.mxu0 0.0
    %4037 = vmatprep.subr.mxu0 0.0
    %4038 = vmatpush1.msra.mxu0 0.0
    %4039 = vmatprep.subr.mxu0 0.0
    %4040 = vmatpush1.msra.mxu0 0.0
    %4041 = vmatprep.subr.mxu0 0.0
    %4042 = vmatpush1.msra.mxu0 0.0
    %4043 = vmatprep.subr.mxu0 0.0
    %4044 = vmatpush1.msra.mxu0 0.0
    %4045 = vmatprep.subr.mxu0 0.0
    %4046 = vmatpush1.msra.mxu0 0.0
    %4047 = vmatprep.subr.mxu0 0.0
    %4048 = vmatpush1.msra.mxu0 0.0
    %4049 = vmatprep.subr.mxu0 0.0
    %4050 = vmatpush1.msra.mxu0 0.0
    %4051 = vmatprep.subr.mxu0 0.0
    %4052 = vmatpush1.msra.mxu0 0.0
    %4053 = vmatprep.subr.mxu0 0.0
    %4054 = vmatpush1.msra.mxu0 0.0
    %4055 = vmatprep.subr.mxu0 0.0
    %4056 = vmatpush1.msra.mxu0 0.0
    %4057 = vmatprep.subr.mxu0 0.0
    %4058 = vmatpush1.msra.mxu0 0.0
    %4059 = vmatprep.subr.mxu0 0.0
    %4060 = vmatpush1.msra.mxu0 0.0
    %4061 = vmatprep.subr.mxu0 0.0
    %4062 = vmatpush1.msra.mxu0 0.0
    %4063 = vmatprep.subr.mxu0 0.0
    %4064 = vmatpush1.msra.mxu0 0.0
    %4065 = vmatprep.subr.mxu0 0.0
    %4066 = vmatpush1.msra.mxu0 0.0
    %4067 = vmatprep.subr.mxu0 0.0
    %4068 = vmatpush1.msra.mxu0 0.0
    %4069 = vmatprep.subr.mxu0 0.0
    %4070 = vmatpush1.msra.mxu0 0.0
    %4071 = vmatprep.subr.mxu0 0.0
    %4072 = vmatpush1.msra.mxu0 0.0
    %4073 = vmatprep.subr.mxu0 0.0
    %4074 = vmatpush1.msra.mxu0 0.0
    %4075 = vmatprep.mubr.f32.mxu0 0.0
    %4076 = vmatmul.mubr.f32.gmra.mrb[0].mxu0 %v2555
    %v4077 = vpop.f32.mrb[0].mxu0
    %v4078 = vadd.f32 %v4009, %v4077
    %v4079 = vpop.f32.mrb[0].mxu0
    %4080 = vdwg.mxu0
    %s4081 = scalar_lea.vmem %s55, 96
    %v4082 = vld [vmem:[%s4081] sm:$0xff]
    %v4083 = vld [vmem:[%s4081 + $0x8] sm:$0xff]
    %v4084 = vld [vmem:[%s4081 + $0x10] sm:$0xff]
    %v4085 = vld [vmem:[%s4081 + $0x18] sm:$0xff]
    %s4086 = scalar_lea.vmem %s57, 3
    %v4087 = vld [vmem:[%s4086] sm:$0x1]
    %v4089 = vlaneseq
    %v4090 = vshrl.u32 %v4089, 7
    %v4091 = vsub.s32 0, %v4090
    %v4092 = vrot.slane %v4087, %v4091
    %4094 = vmatprep.subr.mxu0 0.0
    %4095 = vmatpush1.msra.mxu0 %v4082
    %4096 = vmatprep.subr.mxu0 0.0
    %4097 = vmatpush1.msra.mxu0 %v4083
    %4098 = vmatprep.subr.mxu0 0.0
    %4099 = vmatpush1.msra.mxu0 %v4084
    %4100 = vmatprep.subr.mxu0 0.0
    %4101 = vmatpush1.msra.mxu0 %v4085
    %4102 = vmatprep.subr.mxu0 0.0
    %4103 = vmatpush1.msra.mxu0 0.0
    %4104 = vmatprep.subr.mxu0 0.0
    %4105 = vmatpush1.msra.mxu0 0.0
    %4106 = vmatprep.subr.mxu0 0.0
    %4107 = vmatpush1.msra.mxu0 0.0
    %4108 = vmatprep.subr.mxu0 0.0
    %4109 = vmatpush1.msra.mxu0 0.0
    %4110 = vmatprep.subr.mxu0 0.0
    %4111 = vmatpush1.msra.mxu0 0.0
    %4112 = vmatprep.subr.mxu0 0.0
    %4113 = vmatpush1.msra.mxu0 0.0
    %4114 = vmatprep.subr.mxu0 0.0
    %4115 = vmatpush1.msra.mxu0 0.0
    %4116 = vmatprep.subr.mxu0 0.0
    %4117 = vmatpush1.msra.mxu0 0.0
    %4118 = vmatprep.subr.mxu0 0.0
    %4119 = vmatpush1.msra.mxu0 0.0
    %4120 = vmatprep.subr.mxu0 0.0
    %4121 = vmatpush1.msra.mxu0 0.0
    %4122 = vmatprep.subr.mxu0 0.0
    %4123 = vmatpush1.msra.mxu0 0.0
    %4124 = vmatprep.subr.mxu0 0.0
    %4125 = vmatpush1.msra.mxu0 0.0
    %4126 = vmatprep.subr.mxu0 0.0
    %4127 = vmatpush1.msra.mxu0 0.0
    %4128 = vmatprep.subr.mxu0 0.0
    %4129 = vmatpush1.msra.mxu0 0.0
    %4130 = vmatprep.subr.mxu0 0.0
    %4131 = vmatpush1.msra.mxu0 0.0
    %4132 = vmatprep.subr.mxu0 0.0
    %4133 = vmatpush1.msra.mxu0 0.0
    %4134 = vmatprep.subr.mxu0 0.0
    %4135 = vmatpush1.msra.mxu0 0.0
    %4136 = vmatprep.subr.mxu0 0.0
    %4137 = vmatpush1.msra.mxu0 0.0
    %4138 = vmatprep.subr.mxu0 0.0
    %4139 = vmatpush1.msra.mxu0 0.0
    %4140 = vmatprep.subr.mxu0 0.0
    %4141 = vmatpush1.msra.mxu0 0.0
    %4142 = vmatprep.subr.mxu0 0.0
    %4143 = vmatpush1.msra.mxu0 0.0
    %4144 = vmatprep.subr.mxu0 0.0
    %4145 = vmatpush1.msra.mxu0 0.0
    %4146 = vmatprep.subr.mxu0 0.0
    %4147 = vmatpush1.msra.mxu0 0.0
    %4148 = vmatprep.subr.mxu0 0.0
    %4149 = vmatpush1.msra.mxu0 0.0
    %4150 = vmatprep.subr.mxu0 0.0
    %4151 = vmatpush1.msra.mxu0 0.0
    %4152 = vmatprep.subr.mxu0 0.0
    %4153 = vmatpush1.msra.mxu0 0.0
    %4154 = vmatprep.subr.mxu0 0.0
    %4155 = vmatpush1.msra.mxu0 0.0
    %4156 = vmatprep.subr.mxu0 0.0
    %4157 = vmatpush1.msra.mxu0 0.0
    %4158 = vmatprep.mubr.f32.mxu0 0.0
    %4159 = vmatmul.mubr.f32.gmra.mrb[0].mxu0 %v361
    %v4160 = vpop.f32.mrb[0].mxu0
    %v4161 = vadd.f32 %v4092, %v4160
    %v4162 = vpop.f32.mrb[0].mxu0
    %4163 = vdwg.mxu0
    %s4164 = scalar_lea.vmem %s59, 96
    %v4165 = vld [vmem:[%s4164] sm:$0xff]
    %v4166 = vld [vmem:[%s4164 + $0x8] sm:$0xff]
    %v4167 = vld [vmem:[%s4164 + $0x10] sm:$0xff]
    %v4168 = vld [vmem:[%s4164 + $0x18] sm:$0xff]
    %s4169 = scalar_lea.vmem %s61, 3
    %v4170 = vld [vmem:[%s4169] sm:$0x1]
    %v4172 = vlaneseq
    %v4173 = vshrl.u32 %v4172, 7
    %v4174 = vsub.s32 0, %v4173
    %v4175 = vrot.slane %v4170, %v4174
    %4177 = vmatprep.subr.mxu0 0.0
    %4178 = vmatpush1.msra.mxu0 %v4165
    %4179 = vmatprep.subr.mxu0 0.0
    %4180 = vmatpush1.msra.mxu0 %v4166
    %4181 = vmatprep.subr.mxu0 0.0
    %4182 = vmatpush1.msra.mxu0 %v4167
    %4183 = vmatprep.subr.mxu0 0.0
    %4184 = vmatpush1.msra.mxu0 %v4168
    %4185 = vmatprep.subr.mxu0 0.0
    %4186 = vmatpush1.msra.mxu0 0.0
    %4187 = vmatprep.subr.mxu0 0.0
    %4188 = vmatpush1.msra.mxu0 0.0
    %4189 = vmatprep.subr.mxu0 0.0
    %4190 = vmatpush1.msra.mxu0 0.0
    %4191 = vmatprep.subr.mxu0 0.0
    %4192 = vmatpush1.msra.mxu0 0.0
    %4193 = vmatprep.subr.mxu0 0.0
    %4194 = vmatpush1.msra.mxu0 0.0
    %4195 = vmatprep.subr.mxu0 0.0
    %4196 = vmatpush1.msra.mxu0 0.0
    %4197 = vmatprep.subr.mxu0 0.0
    %4198 = vmatpush1.msra.mxu0 0.0
    %4199 = vmatprep.subr.mxu0 0.0
    %4200 = vmatpush1.msra.mxu0 0.0
    %4201 = vmatprep.subr.mxu0 0.0
    %4202 = vmatpush1.msra.mxu0 0.0
    %4203 = vmatprep.subr.mxu0 0.0
    %4204 = vmatpush1.msra.mxu0 0.0
    %4205 = vmatprep.subr.mxu0 0.0
    %4206 = vmatpush1.msra.mxu0 0.0
    %4207 = vmatprep.subr.mxu0 0.0
    %4208 = vmatpush1.msra.mxu0 0.0
    %4209 = vmatprep.subr.mxu0 0.0
    %4210 = vmatpush1.msra.mxu0 0.0
    %4211 = vmatprep.subr.mxu0 0.0
    %4212 = vmatpush1.msra.mxu0 0.0
    %4213 = vmatprep.subr.mxu0 0.0
    %4214 = vmatpush1.msra.mxu0 0.0
    %4215 = vmatprep.subr.mxu0 0.0
    %4216 = vmatpush1.msra.mxu0 0.0
    %4217 = vmatprep.subr.mxu0 0.0
    %4218 = vmatpush1.msra.mxu0 0.0
    %4219 = vmatprep.subr.mxu0 0.0
    %4220 = vmatpush1.msra.mxu0 0.0
    %4221 = vmatprep.subr.mxu0 0.0
    %4222 = vmatpush1.msra.mxu0 0.0
    %4223 = vmatprep.subr.mxu0 0.0
    %4224 = vmatpush1.msra.mxu0 0.0
    %4225 = vmatprep.subr.mxu0 0.0
    %4226 = vmatpush1.msra.mxu0 0.0
    %4227 = vmatprep.subr.mxu0 0.0
    %4228 = vmatpush1.msra.mxu0 0.0
    %4229 = vmatprep.subr.mxu0 0.0
    %4230 = vmatpush1.msra.mxu0 0.0
    %4231 = vmatprep.subr.mxu0 0.0
    %4232 = vmatpush1.msra.mxu0 0.0
    %4233 = vmatprep.subr.mxu0 0.0
    %4234 = vmatpush1.msra.mxu0 0.0
    %4235 = vmatprep.subr.mxu0 0.0
    %4236 = vmatpush1.msra.mxu0 0.0
    %4237 = vmatprep.subr.mxu0 0.0
    %4238 = vmatpush1.msra.mxu0 0.0
    %4239 = vmatprep.subr.mxu0 0.0
    %4240 = vmatpush1.msra.mxu0 0.0
    %4241 = vmatprep.mubr.f32.mxu0 0.0
    %4242 = vmatmul.mubr.f32.gmra.mrb[0].mxu0 %v445
    %v4243 = vpop.f32.mrb[0].mxu0
    %v4244 = vadd.f32 %v4175, %v4243
    %v4245 = vpop.f32.mrb[0].mxu0
    %4246 = vdwg.mxu0
    %v4248 = vsel %vm517, %v4078, 0
    %v4251 = vsel %vm517, %v4161, 0
    %4253 = vmatprep.subr.mxu0 0.0
    %4254 = vmatpush1.xpose.msra.mxu0 %v4251
    %4255 = vmatprep.subr.mxu0 0.0
    %4256 = vmatpush1.xpose.msra.mxu0 0.0
    %4257 = vmatprep.subr.mxu0 0.0
    %4258 = vmatpush1.xpose.msra.mxu0 0.0
    %4259 = vmatprep.subr.mxu0 0.0
    %4260 = vmatpush1.xpose.msra.mxu0 0.0
    %4261 = vmatprep.subr.mxu0 0.0
    %4262 = vmatpush1.xpose.msra.mxu0 0.0
    %4263 = vmatprep.subr.mxu0 0.0
    %4264 = vmatpush1.xpose.msra.mxu0 0.0
    %4265 = vmatprep.subr.mxu0 0.0
    %4266 = vmatpush1.xpose.msra.mxu0 0.0
    %4267 = vmatprep.subr.mxu0 0.0
    %4268 = vmatpush1.xpose.msra.mxu0 0.0
    %4269 = vmatprep.subr.mxu0 0.0
    %4270 = vmatpush1.xpose.msra.mxu0 0.0
    %4271 = vmatprep.subr.mxu0 0.0
    %4272 = vmatpush1.xpose.msra.mxu0 0.0
    %4273 = vmatprep.subr.mxu0 0.0
    %4274 = vmatpush1.xpose.msra.mxu0 0.0
    %4275 = vmatprep.subr.mxu0 0.0
    %4276 = vmatpush1.xpose.msra.mxu0 0.0
    %4277 = vmatprep.subr.mxu0 0.0
    %4278 = vmatpush1.xpose.msra.mxu0 0.0
    %4279 = vmatprep.subr.mxu0 0.0
    %4280 = vmatpush1.xpose.msra.mxu0 0.0
    %4281 = vmatprep.subr.mxu0 0.0
    %4282 = vmatpush1.xpose.msra.mxu0 0.0
    %4283 = vmatprep.subr.mxu0 0.0
    %4284 = vmatpush1.xpose.msra.mxu0 0.0
    %4285 = vmatprep.subr.mxu0 0.0
    %4286 = vmatpush1.xpose.msra.mxu0 0.0
    %4287 = vmatprep.subr.mxu0 0.0
    %4288 = vmatpush1.xpose.msra.mxu0 0.0
    %4289 = vmatprep.subr.mxu0 0.0
    %4290 = vmatpush1.xpose.msra.mxu0 0.0
    %4291 = vmatprep.subr.mxu0 0.0
    %4292 = vmatpush1.xpose.msra.mxu0 0.0
    %4293 = vmatprep.subr.mxu0 0.0
    %4294 = vmatpush1.xpose.msra.mxu0 0.0
    %4295 = vmatprep.subr.mxu0 0.0
    %4296 = vmatpush1.xpose.msra.mxu0 0.0
    %4297 = vmatprep.subr.mxu0 0.0
    %4298 = vmatpush1.xpose.msra.mxu0 0.0
    %4299 = vmatprep.subr.mxu0 0.0
    %4300 = vmatpush1.xpose.msra.mxu0 0.0
    %4301 = vmatprep.subr.mxu0 0.0
    %4302 = vmatpush1.xpose.msra.mxu0 0.0
    %4303 = vmatprep.subr.mxu0 0.0
    %4304 = vmatpush1.xpose.msra.mxu0 0.0
    %4305 = vmatprep.subr.mxu0 0.0
    %4306 = vmatpush1.xpose.msra.mxu0 0.0
    %4307 = vmatprep.subr.mxu0 0.0
    %4308 = vmatpush1.xpose.msra.mxu0 0.0
    %4309 = vmatprep.subr.mxu0 0.0
    %4310 = vmatpush1.xpose.msra.mxu0 0.0
    %4311 = vmatprep.subr.mxu0 0.0
    %4312 = vmatpush1.xpose.msra.mxu0 0.0
    %4313 = vmatprep.subr.mxu0 0.0
    %4314 = vmatpush1.xpose.msra.mxu0 0.0
    %4315 = vmatprep.subr.mxu0 0.0
    %4316 = vmatpush1.xpose.msra.mxu0 0.0
    %4317 = vmatprep.mubr.f32.mxu0 0.0
    %4318 = vmatmul.mubr.f32.gmra.mrb[0].mxu0 %v4248
    %v4319 = vpop.f32.mrb[0].mxu0
    %v4320 = vadd.f32 0.0, %v4319
    %v4321 = vpop.f32.mrb[0].mxu0
    %4322 = vdwg.mxu0
    %v4323 = vmul.f32 %v4320, 0.35355338
    %v4324 = vsel %vm595, -1e+09, %v4323
    %v4325 = vsel %vm517, %v4324, -inf
    %4326 = vmax.xlane.f32.xlu0 %v4325
    %v4327 = vpop.xlane.xlu0 %4326
    %v4328 = vsub.f32 %v4324, %v4327
    %v4329 = vmul.f32 %v4328, 1.442695
    %v4330 = vpow.pop %v4329
    %v4331 = vsel %vm517, %v4330, 0.0
    %4332 = vadd.xlane.f32.xlu0 %v4331
    %v4333 = vpop.xlane.xlu0 %4332
    %v4334 = vrcp.pop %v4333
    %v4335 = vmul.f32 %v4330, %v4334
    %v4337 = vsel %vm517, %v4335, 0
    %4339 = vmatprep.subr.mxu0 0.0
    %4340 = vmatpush1.msra.mxu0 %v4244
    %4341 = vmatprep.subr.mxu0 0.0
    %4342 = vmatpush1.msra.mxu0 0.0
    %4343 = vmatprep.subr.mxu0 0.0
    %4344 = vmatpush1.msra.mxu0 0.0
    %4345 = vmatprep.subr.mxu0 0.0
    %4346 = vmatpush1.msra.mxu0 0.0
    %4347 = vmatprep.subr.mxu0 0.0
    %4348 = vmatpush1.msra.mxu0 0.0
    %4349 = vmatprep.subr.mxu0 0.0
    %4350 = vmatpush1.msra.mxu0 0.0
    %4351 = vmatprep.subr.mxu0 0.0
    %4352 = vmatpush1.msra.mxu0 0.0
    %4353 = vmatprep.subr.mxu0 0.0
    %4354 = vmatpush1.msra.mxu0 0.0
    %4355 = vmatprep.subr.mxu0 0.0
    %4356 = vmatpush1.msra.mxu0 0.0
    %4357 = vmatprep.subr.mxu0 0.0
    %4358 = vmatpush1.msra.mxu0 0.0
    %4359 = vmatprep.subr.mxu0 0.0
    %4360 = vmatpush1.msra.mxu0 0.0
    %4361 = vmatprep.subr.mxu0 0.0
    %4362 = vmatpush1.msra.mxu0 0.0
    %4363 = vmatprep.subr.mxu0 0.0
    %4364 = vmatpush1.msra.mxu0 0.0
    %4365 = vmatprep.subr.mxu0 0.0
    %4366 = vmatpush1.msra.mxu0 0.0
    %4367 = vmatprep.subr.mxu0 0.0
    %4368 = vmatpush1.msra.mxu0 0.0
    %4369 = vmatprep.subr.mxu0 0.0
    %4370 = vmatpush1.msra.mxu0 0.0
    %4371 = vmatprep.subr.mxu0 0.0
    %4372 = vmatpush1.msra.mxu0 0.0
    %4373 = vmatprep.subr.mxu0 0.0
    %4374 = vmatpush1.msra.mxu0 0.0
    %4375 = vmatprep.subr.mxu0 0.0
    %4376 = vmatpush1.msra.mxu0 0.0
    %4377 = vmatprep.subr.mxu0 0.0
    %4378 = vmatpush1.msra.mxu0 0.0
    %4379 = vmatprep.subr.mxu0 0.0
    %4380 = vmatpush1.msra.mxu0 0.0
    %4381 = vmatprep.subr.mxu0 0.0
    %4382 = vmatpush1.msra.mxu0 0.0
    %4383 = vmatprep.subr.mxu0 0.0
    %4384 = vmatpush1.msra.mxu0 0.0
    %4385 = vmatprep.subr.mxu0 0.0
    %4386 = vmatpush1.msra.mxu0 0.0
    %4387 = vmatprep.subr.mxu0 0.0
    %4388 = vmatpush1.msra.mxu0 0.0
    %4389 = vmatprep.subr.mxu0 0.0
    %4390 = vmatpush1.msra.mxu0 0.0
    %4391 = vmatprep.subr.mxu0 0.0
    %4392 = vmatpush1.msra.mxu0 0.0
    %4393 = vmatprep.subr.mxu0 0.0
    %4394 = vmatpush1.msra.mxu0 0.0
    %4395 = vmatprep.subr.mxu0 0.0
    %4396 = vmatpush1.msra.mxu0 0.0
    %4397 = vmatprep.subr.mxu0 0.0
    %4398 = vmatpush1.msra.mxu0 0.0
    %4399 = vmatprep.subr.mxu0 0.0
    %4400 = vmatpush1.msra.mxu0 0.0
    %4401 = vmatprep.subr.mxu0 0.0
    %4402 = vmatpush1.msra.mxu0 0.0
    %4403 = vmatprep.mubr.f32.mxu0 0.0
    %4404 = vmatmul.mubr.f32.gmra.mrb[0].mxu0 %v4337
    %v4405 = vpop.f32.mrb[0].mxu0
    %v4406 = vadd.f32 0.0, %v4405
    %v4407 = vpop.f32.mrb[0].mxu0
    %4408 = vdwg.mxu0
    %s4409 = scalar_lea.vmem %s63, 24
    %v4410 = vld [vmem:[%s4409] sm:$0xff]
    %v4412 = vsel %vm517, %v4406, 0
    %4414 = vmatprep.subr.mxu0 0.0
    %4415 = vmatpush1.msra.mxu0 %v4410
    %4416 = vmatprep.subr.mxu0 0.0
    %4417 = vmatpush1.msra.mxu0 0.0
    %4418 = vmatprep.subr.mxu0 0.0
    %4419 = vmatpush1.msra.mxu0 0.0
    %4420 = vmatprep.subr.mxu0 0.0
    %4421 = vmatpush1.msra.mxu0 0.0
    %4422 = vmatprep.subr.mxu0 0.0
    %4423 = vmatpush1.msra.mxu0 0.0
    %4424 = vmatprep.subr.mxu0 0.0
    %4425 = vmatpush1.msra.mxu0 0.0
    %4426 = vmatprep.subr.mxu0 0.0
    %4427 = vmatpush1.msra.mxu0 0.0
    %4428 = vmatprep.subr.mxu0 0.0
    %4429 = vmatpush1.msra.mxu0 0.0
    %4430 = vmatprep.subr.mxu0 0.0
    %4431 = vmatpush1.msra.mxu0 0.0
    %4432 = vmatprep.subr.mxu0 0.0
    %4433 = vmatpush1.msra.mxu0 0.0
    %4434 = vmatprep.subr.mxu0 0.0
    %4435 = vmatpush1.msra.mxu0 0.0
    %4436 = vmatprep.subr.mxu0 0.0
    %4437 = vmatpush1.msra.mxu0 0.0
    %4438 = vmatprep.subr.mxu0 0.0
    %4439 = vmatpush1.msra.mxu0 0.0
    %4440 = vmatprep.subr.mxu0 0.0
    %4441 = vmatpush1.msra.mxu0 0.0
    %4442 = vmatprep.subr.mxu0 0.0
    %4443 = vmatpush1.msra.mxu0 0.0
    %4444 = vmatprep.subr.mxu0 0.0
    %4445 = vmatpush1.msra.mxu0 0.0
    %4446 = vmatprep.subr.mxu0 0.0
    %4447 = vmatpush1.msra.mxu0 0.0
    %4448 = vmatprep.subr.mxu0 0.0
    %4449 = vmatpush1.msra.mxu0 0.0
    %4450 = vmatprep.subr.mxu0 0.0
    %4451 = vmatpush1.msra.mxu0 0.0
    %4452 = vmatprep.subr.mxu0 0.0
    %4453 = vmatpush1.msra.mxu0 0.0
    %4454 = vmatprep.subr.mxu0 0.0
    %4455 = vmatpush1.msra.mxu0 0.0
    %4456 = vmatprep.subr.mxu0 0.0
    %4457 = vmatpush1.msra.mxu0 0.0
    %4458 = vmatprep.subr.mxu0 0.0
    %4459 = vmatpush1.msra.mxu0 0.0
    %4460 = vmatprep.subr.mxu0 0.0
    %4461 = vmatpush1.msra.mxu0 0.0
    %4462 = vmatprep.subr.mxu0 0.0
    %4463 = vmatpush1.msra.mxu0 0.0
    %4464 = vmatprep.subr.mxu0 0.0
    %4465 = vmatpush1.msra.mxu0 0.0
    %4466 = vmatprep.subr.mxu0 0.0
    %4467 = vmatpush1.msra.mxu0 0.0
    %4468 = vmatprep.subr.mxu0 0.0
    %4469 = vmatpush1.msra.mxu0 0.0
    %4470 = vmatprep.subr.mxu0 0.0
    %4471 = vmatpush1.msra.mxu0 0.0
    %4472 = vmatprep.subr.mxu0 0.0
    %4473 = vmatpush1.msra.mxu0 0.0
    %4474 = vmatprep.subr.mxu0 0.0
    %4475 = vmatpush1.msra.mxu0 0.0
    %4476 = vmatprep.subr.mxu0 0.0
    %4477 = vmatpush1.msra.mxu0 0.0
    %4478 = vmatprep.mubr.f32.mxu0 0.0
    %4479 = vmatmul.mubr.f32.gmra.mrb[0].mxu0 %v4412
    %v4480 = vpop.f32.mrb[0].mxu0
    %v4481 = vadd.f32 0.0, %v4480
    %v4482 = vpop.f32.mrb[0].mxu0
    %4483 = vdwg.mxu0
    %v4484 = vadd.f32 %v3997, %v4481
    %v4486 = vlaneseq
    %v4487 = vshrl.u32 %v4486, 7
    %v4488 = vsub.s32 0, %v4487
    %v4489 = vrot.slane %v2540, %v4488
    %v4491 = vadd.f32 %v4484, %v4489
    %v4492 = vadd.f32 %v4491, %v2539
    %v4493 = vsel %vm187, %v4492, 0.0
    %4494 = vadd.xlane.f32.xlu0 %v4493
    %v4495 = vpop.xlane.xlu0 %4494
    %v4496 = vmul.f32 %v4495, %v2226
    %v4497 = vsub.f32 %v4492, %v4496
    %v4498 = vmul.f32 %v4497, %v4497
    %v4499 = vsel %vm187, %v4498, 0.0
    %4500 = vadd.xlane.f32.xlu0 %v4499
    %v4501 = vpop.xlane.xlu0 %4500
    %v4502 = vmul.f32 %v4501, %v2226
    %v4503 = vadd.f32 %v4502, 1e-05
    %v4504 = vrsqrt.pop %v4503
    %v4505 = vmul.f32 %v4497, %v4504
    %v4507 = vlaneseq
    %v4508 = vshrl.u32 %v4507, 7
    %v4509 = vsub.s32 0, %v4508
    %v4510 = vrot.slane %v2541, %v4509
    %v4512 = vmul.f32 %v4505, %v4510
    %v4514 = vlaneseq
    %v4515 = vshrl.u32 %v4514, 7
    %v4516 = vsub.s32 0, %v4515
    %v4517 = vrot.slane %v2542, %v4516
    %v4519 = vadd.f32 %v4512, %v4517
    %v4520 = vld [vmem:[%s71] sm:$0xff]
    %v4521 = vld [vmem:[%s71 + $0x8] sm:$0xff]
    %v4522 = vld [vmem:[%s71 + $0x10] sm:$0xff]
    %v4523 = vld [vmem:[%s71 + $0x18] sm:$0xff]
    %v4524 = vld [vmem:[%s73] sm:$0x1]
    %v4525 = vld [vmem:[%s75] sm:$0xff]
    %v4526 = vld [vmem:[%s75 + $0x8] sm:$0xff]
    %v4527 = vld [vmem:[%s75 + $0x10] sm:$0xff]
    %v4528 = vld [vmem:[%s75 + $0x18] sm:$0xff]
    %v4529 = vld [vmem:[%s75 + $0x20] sm:$0xff]
    %v4530 = vld [vmem:[%s75 + $0x28] sm:$0xff]
    %v4531 = vld [vmem:[%s75 + $0x30] sm:$0xff]
    %v4532 = vld [vmem:[%s75 + $0x38] sm:$0xff]
    %v4533 = vld [vmem:[%s77] sm:$0x1]
    %v4534 = vld [vmem:[%s79] sm:$0x1]
    %v4535 = vld [vmem:[%s81] sm:$0x1]
    %v4537 = vlaneseq
    %v4538 = vshrl.u32 %v4537, 7
    %v4539 = vsub.s32 0, %v4538
    %v4540 = vrot.slane %v4524, %v4539
    %v4543 = vsel %vm187, %v4519, 0
    %4545 = vmatprep.subr.mxu0 0.0
    %4546 = vmatpush1.msra.mxu0 %v4520
    %4547 = vmatprep.subr.mxu0 0.0
    %4548 = vmatpush1.msra.mxu0 %v4521
    %4549 = vmatprep.subr.mxu0 0.0
    %4550 = vmatpush1.msra.mxu0 %v4522
    %4551 = vmatprep.subr.mxu0 0.0
    %4552 = vmatpush1.msra.mxu0 %v4523
    %4553 = vmatprep.subr.mxu0 0.0
    %4554 = vmatpush1.msra.mxu0 0.0
    %4555 = vmatprep.subr.mxu0 0.0
    %4556 = vmatpush1.msra.mxu0 0.0
    %4557 = vmatprep.subr.mxu0 0.0
    %4558 = vmatpush1.msra.mxu0 0.0
    %4559 = vmatprep.subr.mxu0 0.0
    %4560 = vmatpush1.msra.mxu0 0.0
    %4561 = vmatprep.subr.mxu0 0.0
    %4562 = vmatpush1.msra.mxu0 0.0
    %4563 = vmatprep.subr.mxu0 0.0
    %4564 = vmatpush1.msra.mxu0 0.0
    %4565 = vmatprep.subr.mxu0 0.0
    %4566 = vmatpush1.msra.mxu0 0.0
    %4567 = vmatprep.subr.mxu0 0.0
    %4568 = vmatpush1.msra.mxu0 0.0
    %4569 = vmatprep.subr.mxu0 0.0
    %4570 = vmatpush1.msra.mxu0 0.0
    %4571 = vmatprep.subr.mxu0 0.0
    %4572 = vmatpush1.msra.mxu0 0.0
    %4573 = vmatprep.subr.mxu0 0.0
    %4574 = vmatpush1.msra.mxu0 0.0
    %4575 = vmatprep.subr.mxu0 0.0
    %4576 = vmatpush1.msra.mxu0 0.0
    %4577 = vmatprep.subr.mxu0 0.0
    %4578 = vmatpush1.msra.mxu0 0.0
    %4579 = vmatprep.subr.mxu0 0.0
    %4580 = vmatpush1.msra.mxu0 0.0
    %4581 = vmatprep.subr.mxu0 0.0
    %4582 = vmatpush1.msra.mxu0 0.0
    %4583 = vmatprep.subr.mxu0 0.0
    %4584 = vmatpush1.msra.mxu0 0.0
    %4585 = vmatprep.subr.mxu0 0.0
    %4586 = vmatpush1.msra.mxu0 0.0
    %4587 = vmatprep.subr.mxu0 0.0
    %4588 = vmatpush1.msra.mxu0 0.0
    %4589 = vmatprep.subr.mxu0 0.0
    %4590 = vmatpush1.msra.mxu0 0.0
    %4591 = vmatprep.subr.mxu0 0.0
    %4592 = vmatpush1.msra.mxu0 0.0
    %4593 = vmatprep.subr.mxu0 0.0
    %4594 = vmatpush1.msra.mxu0 0.0
    %4595 = vmatprep.subr.mxu0 0.0
    %4596 = vmatpush1.msra.mxu0 0.0
    %4597 = vmatprep.subr.mxu0 0.0
    %4598 = vmatpush1.msra.mxu0 0.0
    %4599 = vmatprep.subr.mxu0 0.0
    %4600 = vmatpush1.msra.mxu0 0.0
    %4601 = vmatprep.subr.mxu0 0.0
    %4602 = vmatpush1.msra.mxu0 0.0
    %4603 = vmatprep.subr.mxu0 0.0
    %4604 = vmatpush1.msra.mxu0 0.0
    %4605 = vmatprep.subr.mxu0 0.0
    %4606 = vmatpush1.msra.mxu0 0.0
    %4607 = vmatprep.subr.mxu0 0.0
    %4608 = vmatpush1.msra.mxu0 0.0
    %4609 = vmatprep.mubr.f32.mxu0 0.0
    %4610 = vmatmul.mubr.f32.gmra.mrb[0].mxu0 %v4543
    %v4611 = vpop.f32.mrb[0].mxu0
    %v4612 = vadd.f32 %v4540, %v4611
    %v4613 = vpop.f32.mrb[0].mxu0
    %4614 = vdwg.mxu0
    %v4615 = vmax.f32 %v4612, 0.0
    %v4617 = vlaneseq
    %v4618 = vshrl.u32 %v4617, 7
    %v4619 = vsub.s32 0, %v4618
    %v4620 = vrot.slane %v4533, %v4619
    %v4623 = vsel %vm2353, %v4615, 0
    %4625 = vmatprep.subr.mxu0 0.0
    %4626 = vmatpush1.msra.mxu0 %v4525
    %4627 = vmatprep.subr.mxu0 0.0
    %4628 = vmatpush1.msra.mxu0 %v4526
    %4629 = vmatprep.subr.mxu0 0.0
    %4630 = vmatpush1.msra.mxu0 %v4527
    %4631 = vmatprep.subr.mxu0 0.0
    %4632 = vmatpush1.msra.mxu0 %v4528
    %4633 = vmatprep.subr.mxu0 0.0
    %4634 = vmatpush1.msra.mxu0 %v4529
    %4635 = vmatprep.subr.mxu0 0.0
    %4636 = vmatpush1.msra.mxu0 %v4530
    %4637 = vmatprep.subr.mxu0 0.0
    %4638 = vmatpush1.msra.mxu0 %v4531
    %4639 = vmatprep.subr.mxu0 0.0
    %4640 = vmatpush1.msra.mxu0 %v4532
    %4641 = vmatprep.subr.mxu0 0.0
    %4642 = vmatpush1.msra.mxu0 0.0
    %4643 = vmatprep.subr.mxu0 0.0
    %4644 = vmatpush1.msra.mxu0 0.0
    %4645 = vmatprep.subr.mxu0 0.0
    %4646 = vmatpush1.msra.mxu0 0.0
    %4647 = vmatprep.subr.mxu0 0.0
    %4648 = vmatpush1.msra.mxu0 0.0
    %4649 = vmatprep.subr.mxu0 0.0
    %4650 = vmatpush1.msra.mxu0 0.0
    %4651 = vmatprep.subr.mxu0 0.0
    %4652 = vmatpush1.msra.mxu0 0.0
    %4653 = vmatprep.subr.mxu0 0.0
    %4654 = vmatpush1.msra.mxu0 0.0
    %4655 = vmatprep.subr.mxu0 0.0
    %4656 = vmatpush1.msra.mxu0 0.0
    %4657 = vmatprep.subr.mxu0 0.0
    %4658 = vmatpush1.msra.mxu0 0.0
    %4659 = vmatprep.subr.mxu0 0.0
    %4660 = vmatpush1.msra.mxu0 0.0
    %4661 = vmatprep.subr.mxu0 0.0
    %4662 = vmatpush1.msra.mxu0 0.0
    %4663 = vmatprep.subr.mxu0 0.0
    %4664 = vmatpush1.msra.mxu0 0.0
    %4665 = vmatprep.subr.mxu0 0.0
    %4666 = vmatpush1.msra.mxu0 0.0
    %4667 = vmatprep.subr.mxu0 0.0
    %4668 = vmatpush1.msra.mxu0 0.0
    %4669 = vmatprep.subr.mxu0 0.0
    %4670 = vmatpush1.msra.mxu0 0.0
    %4671 = vmatprep.subr.mxu0 0.0
    %4672 = vmatpush1.msra.mxu0 0.0
    %4673 = vmatprep.subr.mxu0 0.0
    %4674 = vmatpush1.msra.mxu0 0.0
    %4675 = vmatprep.subr.mxu0 0.0
    %4676 = vmatpush1.msra.mxu0 0.0
    %4677 = vmatprep.subr.mxu0 0.0
    %4678 = vmatpush1.msra.mxu0 0.0
    %4679 = vmatprep.subr.mxu0 0.0
    %4680 = vmatpush1.msra.mxu0 0.0
    %4681 = vmatprep.subr.mxu0 0.0
    %4682 = vmatpush1.msra.mxu0 0.0
    %4683 = vmatprep.subr.mxu0 0.0
    %4684 = vmatpush1.msra.mxu0 0.0
    %4685 = vmatprep.subr.mxu0 0.0
    %4686 = vmatpush1.msra.mxu0 0.0
    %4687 = vmatprep.subr.mxu0 0.0
    %4688 = vmatpush1.msra.mxu0 0.0
    %4689 = vmatprep.mubr.f32.mxu0 0.0
    %4690 = vmatmul.mubr.f32.gmra.mrb[0].mxu0 %v4623
    %v4691 = vpop.f32.mrb[0].mxu0
    %v4692 = vadd.f32 %v4620, %v4691
    %v4693 = vpop.f32.mrb[0].mxu0
    %4694 = vdwg.mxu0
    %v4695 = vadd.f32 %v4692, %v4519
    %v4696 = vsel %vm187, %v4695, 0.0
    %4697 = vadd.xlane.f32.xlu0 %v4696
    %v4698 = vpop.xlane.xlu0 %4697
    %v4699 = vmul.f32 %v4698, %v2226
    %v4700 = vsub.f32 %v4695, %v4699
    %v4701 = vmul.f32 %v4700, %v4700
    %v4702 = vsel %vm187, %v4701, 0.0
    %4703 = vadd.xlane.f32.xlu0 %v4702
    %v4704 = vpop.xlane.xlu0 %4703
    %v4705 = vmul.f32 %v4704, %v2226
    %v4706 = vadd.f32 %v4705, 1e-05
    %v4707 = vrsqrt.pop %v4706
    %v4708 = vmul.f32 %v4700, %v4707
    %v4710 = vlaneseq
    %v4711 = vshrl.u32 %v4710, 7
    %v4712 = vsub.s32 0, %v4711
    %v4713 = vrot.slane %v4534, %v4712
    %v4715 = vmul.f32 %v4708, %v4713
    %v4717 = vlaneseq
    %v4718 = vshrl.u32 %v4717, 7
    %v4719 = vsub.s32 0, %v4718
    %v4720 = vrot.slane %v4535, %v4719
    %v4722 = vadd.f32 %v4715, %v4720
    %4723 = vst.msk [vmem:[#allocation2] sm:$0xff] %vm187, %v4722
    // Predicated region
    $region166: #{model_forward.1} parent=1 // pred_check
      _
    $region167: #{model_forward.1} parent=1 // pred_check_branch
      %4725 = sbr.rel (0) target = $region169
    $region168: #{model_forward.1} parent=1 // pred_region
      %s4727 = ssub.s32 128, 128
      %4728 = vsyncadd [#allocation3], %s4727
      %s4730 = sshll.u32 [#allocation2], 4
      %s4731 = int_to_ptr.vmem [resolvable:$true] %s4730
      %4733 = dma.vmem_to_hbm [thread:$0]  %s4731, 128, %s83, [#allocation3]
    $region169: #{model_forward.1} parent=1 // pred_fallthru
      _
    // Predicated region
    $region170: #{model_forward.1} parent=1 // pred_check
      _
    $region171: #{model_forward.1} parent=1 // pred_check_branch
      %4735 = sbr.rel (0) target = $region173
    $region172: #{model_forward.1} parent=1 // pred_region
      %4736 = dma.done [#allocation3], 128
    $region173: #{model_forward.1} parent=1 // pred_fallthru
      _
    %4737 = vsyncpa [#allocation3], 1

</llo_original>
